<compile_context>
chip_gen: v6e
topology: v6e:2x2x1
jax: 0.10.0
libtpu: 0.0.40
codegen_flags: <defaults>
</compile_context>

<pallas_src>
import functools

import jax
import jax.numpy as jnp
from jax import lax
from jax.experimental import pallas as pl
from jax.experimental.pallas import tpu as pltpu


def _dense_filter_kernel(C_IN, CB, G, H, W, FILT,
                         x_ref, vec_ref, w1_ref, w2_ref, out_ref):
    HW = H * W
    PAD = FILT // 2
    L = x_ref.shape[1]                  # lane-batched width: (items per step) * HW

    x = x_ref[...]                      # (C_IN, L) f32

    # Packed per-channel vectors (single tiny DMA).
    s1 = vec_ref[0:C_IN, 0:1]           # BN1 scale
    t1 = vec_ref[0:C_IN, 1:2]           # BN1 shift
    b1 = vec_ref[0:CB, 2:3]             # conv1 bias (BN2 folded in)
    b2 = vec_ref[0:G, 3:4]              # conv2 bias

    # BN1 (eval, folded to scale/shift) + LeakyReLU(0.01)
    y = x * s1 + t1
    y = jnp.where(y >= 0, y, 0.01 * y)

    # Conv2d 1x1 with BN2 folded into its weight/bias, then LeakyReLU(0.01)
    z = jnp.dot(w1_ref[...], y,
                preferred_element_type=jnp.float32,
                precision=lax.Precision.HIGHEST) + b1
    z = jnp.where(z >= 0, z, 0.01 * z)  # (CB, L)

    # Conv2d kernel=(FILT,1), padding=(FILT//2,0): conv along H only, zero padded.
    # Each H tap is built with an XLU roll + a (lane % HW) boundary mask so nothing
    # bleeds across the item boundaries of the lane-batched block, then contracted
    # with its own (G, CB) weight slice and accumulated in f32 (no stacked-tap buf).
    lane = lax.broadcasted_iota(jnp.int32, (CB, L), 1)        # hoisted, single iota
    if HW & (HW - 1) == 0:
        lane_mod = jnp.bitwise_and(lane, HW - 1)              # power-of-two -> AND
    else:
        lane_mod = lane % HW

    acc = jnp.zeros((G, L), jnp.float32)
    for kh in range(FILT):
        s = (PAD - kh) * W              # whole-row lane shift for this tap
        if s == 0:
            tap = z
        else:
            tap = pltpu.roll(z, shift=s % L, axis=1)          # circular roll (>=0)
            if s > 0:
                tap = jnp.where(lane_mod >= s, tap, 0.0)      # zero wrapped lead rows
            else:
                tap = jnp.where(lane_mod < HW + s, tap, 0.0)  # zero wrapped tail rows
        acc = acc + jnp.dot(w2_ref[kh], tap,
                            preferred_element_type=jnp.float32,
                            precision=lax.Precision.HIGHEST)
    o = acc + b2                        # (G, L)

    # Dropout2d: identity in eval mode (deterministic forward).
    # torch.cat((x, net(x)), dim=1): write the two slabs of the (C_IN+G, L) block.
    out_ref[0:C_IN, :] = x.astype(out_ref.dtype)
    out_ref[C_IN:, :] = o.astype(out_ref.dtype)


def dense_filter_forward(x, params, *, growth_rate, bottleneck=2, filter_len=5,
                         eps=1e-5, vmem_budget_bytes=16 * 1024 * 1024):
    N, C_in, H, W = x.shape
    G = growth_rate
    CB = bottleneck * growth_rate
    HW = H * W
    FILT = filter_len

    # Fold BatchNorm (eval) into per-channel scale/shift (glue, plain JAX).
    s1 = params["g1"] / jnp.sqrt(params["v1"] + eps)
    t1 = params["be1"] - params["m1"] * s1
    s2 = params["g2"] / jnp.sqrt(params["v2"] + eps)
    t2 = params["be2"] - params["m2"] * s2

    # Fold BN2 into the 1x1 conv (LReLU sits before conv1, so this is exact).
    w1m = params["w1"].reshape(CB, C_in)              # (O, I) from (O, I, 1, 1)
    w1f = w1m * s2[:, None]
    b1f = s2 * params["b1"] + t2

    # (G, CB, FILT, 1) -> (FILT, G, CB): one (G, CB) weight slice per H tap.
    w2f = jnp.transpose(params["w2"][..., 0], (2, 0, 1))
    b2 = params["b2"]

    # Pack the four per-channel vectors into a single tiny array -> one DMA.
    R = max(C_in, CB, G)
    vecs = jnp.zeros((R, 4), jnp.float32)
    vecs = vecs.at[:C_in, 0].set(s1)
    vecs = vecs.at[:C_in, 1].set(t1)
    vecs = vecs.at[:CB, 2].set(b1f)
    vecs = vecs.at[:G, 3].set(b2)

    # Channel-major, lane-dense layout: (C_in, N*HW). Blocks start on item boundaries.
    xt = jnp.transpose(x.reshape(N, C_in, HW), (1, 0, 2)).reshape(C_in, N * HW)

    # --- Lane-block sizing --------------------------------------------------
    # Rough live-bytes-per-lane (double-buffered I/O + intermediates); cap the lane
    # block well under scoped VMEM (conservative for v7x's 64 MiB / 32 MiB default).
    bytes_per_lane = 4 * (3 * C_in + 3 * (C_in + G) + 6 * CB + 2 * G)
    max_items_vmem = max(1, int(vmem_budget_bytes // (bytes_per_lane * HW)))
    items = max(1, min(N, max_items_vmem))
    if N >= 2:
        # Keep >= 2 grid steps so both v7x TensorCores get work ("parallel" grid).
        items = min(items, max(1, N // 2))
    while N % items != 0:               # blocks must tile the batch exactly
        items -= 1
    L = items * HW
    if L % 128 != 0 and L != N * HW:
        items, L = N, N * HW            # fall back to one full-extent lane block
    grid = (N // items,)

    kernel = functools.partial(_dense_filter_kernel, C_in, CB, G, H, W, FILT)

    out = pl.pallas_call(
        kernel,
        out_shape=jax.ShapeDtypeStruct((C_in + G, N * HW), jnp.float32),
        grid=grid,
        in_specs=[
            pl.BlockSpec((C_in, L), lambda i: (0, i)),         # x (lane-batched)
            pl.BlockSpec((R, 4), lambda i: (0, 0)),            # packed vectors
            pl.BlockSpec((CB, C_in), lambda i: (0, 0)),        # conv1 weight (BN2-folded)
            pl.BlockSpec((FILT, G, CB), lambda i: (0, 0, 0)),  # conv2 per-tap weights
        ],
        out_specs=pl.BlockSpec((C_in + G, L), lambda i: (0, i)),
        compiler_params=pltpu.CompilerParams(dimension_semantics=("parallel",)),
    )(xt, vecs, w1f, w2f)

    # Back to NCHW.
    out = jnp.transpose(out.reshape(C_in + G, N, HW), (1, 0, 2))
    return out.reshape(N, C_in + G, H, W)


def reference_forward(x, p, *, filter_len=5, eps=1e-5):
    """Pure-JAX reference (eval-mode _DenseFilter) for correctness checking."""
    def bn(v, g, b, m, var):
        return ((v - m[None, :, None, None])
                / jnp.sqrt(var[None, :, None, None] + eps)
                * g[None, :, None, None] + b[None, :, None, None])

    def lrelu(v):
        return jnp.where(v >= 0, v, 0.01 * v)

    y = lrelu(bn(x, p["g1"], p["be1"], p["m1"], p["v1"]))
    z = lax.conv_general_dilated(y, p["w1"], (1, 1), "VALID",
                                 dimension_numbers=("NCHW", "OIHW", "NCHW"),
                                 precision=lax.Precision.HIGHEST)
    z = z + p["b1"][None, :, None, None]
    z = lrelu(bn(z, p["g2"], p["be2"], p["m2"], p["v2"]))
    pad = filter_len // 2
    o = lax.conv_general_dilated(z, p["w2"], (1, 1), ((pad, pad), (0, 0)),
                                 dimension_numbers=("NCHW", "OIHW", "NCHW"),
                                 precision=lax.Precision.HIGHEST)
    o = o + p["b2"][None, :, None, None]
    return jnp.concatenate([x, o], axis=1)


if __name__ == "__main__":
    # Module config: in_features=4, growth_rate=4, filter_len=5, bottleneck=2, dim=-2
    N, C_IN, H, W = 2, 4, 16, 16
    G, BOT, FILT = 4, 2, 5
    CB = BOT * G

    key = jax.random.PRNGKey(0)
    ks = jax.random.split(key, 13)

    x = jax.random.normal(ks[0], (N, C_IN, H, W), jnp.float32)

    params = dict(
        # BatchNorm2d(in_features): weight, bias, running_mean, running_var
        g1=jax.random.uniform(ks[1], (C_IN,), jnp.float32, 0.5, 1.5),
        be1=0.1 * jax.random.normal(ks[2], (C_IN,), jnp.float32),
        m1=0.1 * jax.random.normal(ks[3], (C_IN,), jnp.float32),
        v1=jax.random.uniform(ks[4], (C_IN,), jnp.float32, 0.5, 1.5),
        # Conv2d(in_features, bottleneck*growth, 1)
        w1=0.3 * jax.random.normal(ks[5], (CB, C_IN, 1, 1), jnp.float32),
        b1=0.1 * jax.random.normal(ks[6], (CB,), jnp.float32),
        # BatchNorm2d(bottleneck*growth)
        g2=jax.random.uniform(ks[7], (CB,), jnp.float32, 0.5, 1.5),
        be2=0.1 * jax.random.normal(ks[8], (CB,), jnp.float32),
        m2=0.1 * jax.random.normal(ks[9], (CB,), jnp.float32),
        v2=jax.random.uniform(ks[10], (CB,), jnp.float32, 0.5, 1.5),
        # Conv2d(bottleneck*growth, growth, (5,1), padding=(2,0))
        w2=0.2 * jax.random.normal(ks[11], (G, CB, FILT, 1), jnp.float32),
        b2=0.1 * jax.random.normal(ks[12], (G,), jnp.float32),
    )

    out = dense_filter_forward(x, params, growth_rate=G, bottleneck=BOT,
                               filter_len=FILT)
    out = jax.block_until_ready(out)

    ref = jax.block_until_ready(reference_forward(x, params, filter_len=FILT))

    assert out.shape == (N, C_IN + G, H, W), out.shape
    assert jnp.allclose(out, ref, rtol=1e-3, atol=1e-3), float(
        jnp.max(jnp.abs(out - ref)))

    print("KERNEL_OK")
</pallas_src>

<mosaic_0001>
module attributes {stable_mosaic.version = 11 : i64} {
  func.func @_dense_filter_kernel(%arg0: i32, %arg1: memref<4x256xf32, #tpu.memory_space<vmem>>, %arg2: memref<8x4xf32, #tpu.memory_space<vmem>>, %arg3: memref<8x4xf32, #tpu.memory_space<vmem>>, %arg4: memref<5x4x8xf32, #tpu.memory_space<vmem>>, %arg5: memref<8x256xf32, #tpu.memory_space<vmem>>) attributes {dimension_semantics = [#tpu.dimension_semantics<parallel>], iteration_bounds = array<i64: 2>, scalar_prefetch = 0 : i64, scratch_operands = 0 : i64, tpu.core_type = #tpu.core_type<tc>, window_params = [{transform_indices = @transform_0, window_bounds = array<i64: 4, 256>}, {pipeline_mode = #tpu.pipeline_mode<synchronous>, transform_indices = @transform_1, window_bounds = array<i64: 8, 4>}, {pipeline_mode = #tpu.pipeline_mode<synchronous>, transform_indices = @transform_2, window_bounds = array<i64: 8, 4>}, {pipeline_mode = #tpu.pipeline_mode<synchronous>, transform_indices = @transform_3, window_bounds = array<i64: 5, 4, 8>}, {transform_indices = @transform_4, window_bounds = array<i64: 8, 256>}]} {
    %c0 = arith.constant 0 : index
    %c0_0 = arith.constant 0 : index
    %0 = vector.load %arg1[%c0, %c0_0] : memref<4x256xf32, #tpu.memory_space<vmem>>, vector<4x256xf32>
    %c0_1 = arith.constant 0 : index
    %c0_2 = arith.constant 0 : index
    %1 = vector.load %arg2[%c0_1, %c0_2] : memref<8x4xf32, #tpu.memory_space<vmem>>, vector<4x1xf32>
    %c0_3 = arith.constant 0 : index
    %c1 = arith.constant 1 : index
    %2 = vector.load %arg2[%c0_3, %c1] : memref<8x4xf32, #tpu.memory_space<vmem>>, vector<4x1xf32>
    %c0_4 = arith.constant 0 : index
    %c2 = arith.constant 2 : index
    %3 = vector.load %arg2[%c0_4, %c2] : memref<8x4xf32, #tpu.memory_space<vmem>>, vector<8x1xf32>
    %c0_5 = arith.constant 0 : index
    %c3 = arith.constant 3 : index
    %4 = vector.load %arg2[%c0_5, %c3] : memref<8x4xf32, #tpu.memory_space<vmem>>, vector<4x1xf32>
    %5 = vector.broadcast %1 : vector<4x1xf32> to vector<4x256xf32>
    %6 = arith.mulf %0, %5 : vector<4x256xf32>
    %7 = vector.broadcast %2 : vector<4x1xf32> to vector<4x256xf32>
    %8 = arith.addf %6, %7 : vector<4x256xf32>
    %cst = arith.constant 0.000000e+00 : f32
    %9 = vector.broadcast %cst : f32 to vector<4x256xf32>
    %10 = arith.cmpf oge, %8, %9 : vector<4x256xf32>
    %cst_6 = arith.constant 0.00999999977 : f32
    %11 = vector.broadcast %cst_6 : f32 to vector<4x256xf32>
    %12 = arith.mulf %11, %8 : vector<4x256xf32>
    %13 = arith.select %10, %8, %12 : vector<4x256xi1>, vector<4x256xf32>
    %c0_7 = arith.constant 0 : index
    %c0_8 = arith.constant 0 : index
    %14 = vector.load %arg3[%c0_7, %c0_8] : memref<8x4xf32, #tpu.memory_space<vmem>>, vector<8x4xf32>
    %cst_9 = arith.constant dense<0.000000e+00> : vector<8x256xf32>
    %15 = tpu.matmul %14, %13, %cst_9 {dimension_numbers = #tpu.dot_dimension_numbers<[1], [0], [0], [1], [0, 0, 1, 1], [], []>, precision = #tpu.contract_precision<fp32>} : vector<8x4xf32>, vector<4x256xf32>, vector<8x256xf32> -> vector<8x256xf32>
    %16 = vector.broadcast %3 : vector<8x1xf32> to vector<8x256xf32>
    %17 = arith.addf %15, %16 : vector<8x256xf32>
    %cst_10 = arith.constant 0.000000e+00 : f32
    %18 = vector.broadcast %cst_10 : f32 to vector<8x256xf32>
    %19 = arith.cmpf oge, %17, %18 : vector<8x256xf32>
    %cst_11 = arith.constant 0.00999999977 : f32
    %20 = vector.broadcast %cst_11 : f32 to vector<8x256xf32>
    %21 = arith.mulf %20, %17 : vector<8x256xf32>
    %22 = arith.select %19, %17, %21 : vector<8x256xi1>, vector<8x256xf32>
    %23 = tpu.iota {dimensions = array<i32: 1>} : vector<8x256xi32>
    %c255_i32 = arith.constant 255 : i32
    %24 = vector.broadcast %c255_i32 : i32 to vector<8x256xi32>
    %25 = arith.andi %23, %24 : vector<8x256xi32>
    %cst_12 = arith.constant 0.000000e+00 : f32
    %26 = vector.broadcast %cst_12 : f32 to vector<4x256xf32>
    %c32_i32 = arith.constant 32 : i32
    %27 = tpu.dynamic_rotate %22 by %c32_i32 dim 1 : vector<8x256xf32>, i32 -> vector<8x256xf32>
    %c32_i32_13 = arith.constant 32 : i32
    %28 = vector.broadcast %c32_i32_13 : i32 to vector<8x256xi32>
    %29 = arith.cmpi sge, %25, %28 : vector<8x256xi32>
    %cst_14 = arith.constant 0.000000e+00 : f32
    %30 = vector.broadcast %cst_14 : f32 to vector<8x256xf32>
    %31 = arith.select %29, %27, %30 : vector<8x256xi1>, vector<8x256xf32>
    %c0_15 = arith.constant 0 : index
    %c0_16 = arith.constant 0 : index
    %c0_17 = arith.constant 0 : index
    %32 = vector.load %arg4[%c0_15, %c0_16, %c0_17] : memref<5x4x8xf32, #tpu.memory_space<vmem>>, vector<1x4x8xf32>
    %33 = vector.shape_cast %32 : vector<1x4x8xf32> to vector<4x8xf32>
    %cst_18 = arith.constant dense<0.000000e+00> : vector<4x256xf32>
    %34 = tpu.matmul %33, %31, %cst_18 {dimension_numbers = #tpu.dot_dimension_numbers<[1], [0], [0], [1], [0, 0, 1, 1], [], []>, precision = #tpu.contract_precision<fp32>} : vector<4x8xf32>, vector<8x256xf32>, vector<4x256xf32> -> vector<4x256xf32>
    %35 = arith.addf %26, %34 : vector<4x256xf32>
    %c16_i32 = arith.constant 16 : i32
    %36 = tpu.dynamic_rotate %22 by %c16_i32 dim 1 : vector<8x256xf32>, i32 -> vector<8x256xf32>
    %c16_i32_19 = arith.constant 16 : i32
    %37 = vector.broadcast %c16_i32_19 : i32 to vector<8x256xi32>
    %38 = arith.cmpi sge, %25, %37 : vector<8x256xi32>
    %cst_20 = arith.constant 0.000000e+00 : f32
    %39 = vector.broadcast %cst_20 : f32 to vector<8x256xf32>
    %40 = arith.select %38, %36, %39 : vector<8x256xi1>, vector<8x256xf32>
    %c1_21 = arith.constant 1 : index
    %c0_22 = arith.constant 0 : index
    %c0_23 = arith.constant 0 : index
    %41 = vector.load %arg4[%c1_21, %c0_22, %c0_23] : memref<5x4x8xf32, #tpu.memory_space<vmem>>, vector<1x4x8xf32>
    %42 = vector.shape_cast %41 : vector<1x4x8xf32> to vector<4x8xf32>
    %cst_24 = arith.constant dense<0.000000e+00> : vector<4x256xf32>
    %43 = tpu.matmul %42, %40, %cst_24 {dimension_numbers = #tpu.dot_dimension_numbers<[1], [0], [0], [1], [0, 0, 1, 1], [], []>, precision = #tpu.contract_precision<fp32>} : vector<4x8xf32>, vector<8x256xf32>, vector<4x256xf32> -> vector<4x256xf32>
    %44 = arith.addf %35, %43 : vector<4x256xf32>
    %c2_25 = arith.constant 2 : index
    %c0_26 = arith.constant 0 : index
    %c0_27 = arith.constant 0 : index
    %45 = vector.load %arg4[%c2_25, %c0_26, %c0_27] : memref<5x4x8xf32, #tpu.memory_space<vmem>>, vector<1x4x8xf32>
    %46 = vector.shape_cast %45 : vector<1x4x8xf32> to vector<4x8xf32>
    %cst_28 = arith.constant dense<0.000000e+00> : vector<4x256xf32>
    %47 = tpu.matmul %46, %22, %cst_28 {dimension_numbers = #tpu.dot_dimension_numbers<[1], [0], [0], [1], [0, 0, 1, 1], [], []>, precision = #tpu.contract_precision<fp32>} : vector<4x8xf32>, vector<8x256xf32>, vector<4x256xf32> -> vector<4x256xf32>
    %48 = arith.addf %44, %47 : vector<4x256xf32>
    %c240_i32 = arith.constant 240 : i32
    %49 = tpu.dynamic_rotate %22 by %c240_i32 dim 1 : vector<8x256xf32>, i32 -> vector<8x256xf32>
    %c240_i32_29 = arith.constant 240 : i32
    %50 = vector.broadcast %c240_i32_29 : i32 to vector<8x256xi32>
    %51 = arith.cmpi slt, %25, %50 : vector<8x256xi32>
    %cst_30 = arith.constant 0.000000e+00 : f32
    %52 = vector.broadcast %cst_30 : f32 to vector<8x256xf32>
    %53 = arith.select %51, %49, %52 : vector<8x256xi1>, vector<8x256xf32>
    %c3_31 = arith.constant 3 : index
    %c0_32 = arith.constant 0 : index
    %c0_33 = arith.constant 0 : index
    %54 = vector.load %arg4[%c3_31, %c0_32, %c0_33] : memref<5x4x8xf32, #tpu.memory_space<vmem>>, vector<1x4x8xf32>
    %55 = vector.shape_cast %54 : vector<1x4x8xf32> to vector<4x8xf32>
    %cst_34 = arith.constant dense<0.000000e+00> : vector<4x256xf32>
    %56 = tpu.matmul %55, %53, %cst_34 {dimension_numbers = #tpu.dot_dimension_numbers<[1], [0], [0], [1], [0, 0, 1, 1], [], []>, precision = #tpu.contract_precision<fp32>} : vector<4x8xf32>, vector<8x256xf32>, vector<4x256xf32> -> vector<4x256xf32>
    %57 = arith.addf %48, %56 : vector<4x256xf32>
    %c224_i32 = arith.constant 224 : i32
    %58 = tpu.dynamic_rotate %22 by %c224_i32 dim 1 : vector<8x256xf32>, i32 -> vector<8x256xf32>
    %c224_i32_35 = arith.constant 224 : i32
    %59 = vector.broadcast %c224_i32_35 : i32 to vector<8x256xi32>
    %60 = arith.cmpi slt, %25, %59 : vector<8x256xi32>
    %cst_36 = arith.constant 0.000000e+00 : f32
    %61 = vector.broadcast %cst_36 : f32 to vector<8x256xf32>
    %62 = arith.select %60, %58, %61 : vector<8x256xi1>, vector<8x256xf32>
    %c4 = arith.constant 4 : index
    %c0_37 = arith.constant 0 : index
    %c0_38 = arith.constant 0 : index
    %63 = vector.load %arg4[%c4, %c0_37, %c0_38] : memref<5x4x8xf32, #tpu.memory_space<vmem>>, vector<1x4x8xf32>
    %64 = vector.shape_cast %63 : vector<1x4x8xf32> to vector<4x8xf32>
    %cst_39 = arith.constant dense<0.000000e+00> : vector<4x256xf32>
    %65 = tpu.matmul %64, %62, %cst_39 {dimension_numbers = #tpu.dot_dimension_numbers<[1], [0], [0], [1], [0, 0, 1, 1], [], []>, precision = #tpu.contract_precision<fp32>} : vector<4x8xf32>, vector<8x256xf32>, vector<4x256xf32> -> vector<4x256xf32>
    %66 = arith.addf %57, %65 : vector<4x256xf32>
    %67 = vector.broadcast %4 : vector<4x1xf32> to vector<4x256xf32>
    %68 = arith.addf %66, %67 : vector<4x256xf32>
    %c0_40 = arith.constant 0 : index
    %c0_41 = arith.constant 0 : index
    %69 = vector.load %arg5[%c0_40, %c0_41] : memref<8x256xf32, #tpu.memory_space<vmem>>, vector<4x256xf32>
    tpu.vector_store %arg5[%c0_40, %c0_41], %0 {strides = array<i32>} : memref<8x256xf32, #tpu.memory_space<vmem>>, vector<4x256xf32>,
    %c4_42 = arith.constant 4 : index
    %c0_43 = arith.constant 0 : index
    %70 = vector.load %arg5[%c4_42, %c0_43] : memref<8x256xf32, #tpu.memory_space<vmem>>, vector<4x256xf32>
    tpu.vector_store %arg5[%c4_42, %c0_43], %68 {strides = array<i32>} : memref<8x256xf32, #tpu.memory_space<vmem>>, vector<4x256xf32>,
    return
  }
  func.func @transform_0(%arg0: i32) -> (i32, i32) {
    %c0_i32 = arith.constant 0 : i32
    %c0_i32_0 = arith.constant 0 : i32
    return %c0_i32, %arg0 : i32, i32
  }
  func.func @transform_1(%arg0: i32) -> (i32, i32) {
    %c0_i32 = arith.constant 0 : i32
    %c0_i32_0 = arith.constant 0 : i32
    %c0_i32_1 = arith.constant 0 : i32
    return %c0_i32, %c0_i32_0 : i32, i32
  }
  func.func @transform_2(%arg0: i32) -> (i32, i32) {
    %c0_i32 = arith.constant 0 : i32
    %c0_i32_0 = arith.constant 0 : i32
    %c0_i32_1 = arith.constant 0 : i32
    return %c0_i32, %c0_i32_0 : i32, i32
  }
  func.func @transform_3(%arg0: i32) -> (i32, i32, i32) {
    %c0_i32 = arith.constant 0 : i32
    %c0_i32_0 = arith.constant 0 : i32
    %c0_i32_1 = arith.constant 0 : i32
    %c0_i32_2 = arith.constant 0 : i32
    return %c0_i32, %c0_i32_0, %c0_i32_1 : i32, i32, i32
  }
  func.func @transform_4(%arg0: i32) -> (i32, i32) {
    %c0_i32 = arith.constant 0 : i32
    %c0_i32_0 = arith.constant 0 : i32
    return %c0_i32, %arg0 : i32, i32
  }
}

</mosaic_0001>

<llo_original>
// kernel: tpu_custom_call.1
$region0: #{tpu_custom_call.1}
  #allocation0 [shape = 'u32[]', space=smem, size = 0x4, offset = 0x4, fixed_abs, tag = 'smem constant byte address 0x4 - core index']
  #allocation1 [shape = 'u32[144,128]{1,0:T(1,128)}', space=vmem, size = 0x12000, scoped, tag = 'internal scratch']
  %s0 = inlined_call_operand.hbm [shape: f32[4,512], index: 0, kind: input, shape index: {}]
  %s1 = inlined_call_operand.vmem [shape: f32[8,4], index: 1, kind: input, shape index: {}]
  %s2 = inlined_call_operand.vmem [shape: f32[8,4], index: 2, kind: input, shape index: {}]
  %s3 = inlined_call_operand.vmem [shape: f32[5,4,8], index: 3, kind: input, shape index: {}]
  %s4 = inlined_call_operand.hbm [shape: f32[8,512], index: 4, kind: output, shape index: {}]
  %s5 = sld [smem:[#allocation0]]
  $region53: #{tpu_custom_call.1} parent=0
    _
  %s7 = ssub.s32 1, %s5
  %s8 = scalar_select 0, %s7, %s5
  $region1: #{tpu_custom_call.1} parent=0
    #allocation2 [shape = 'u8[8192]{0}', space=vmem, size = 0x2000, scoped, tag = 'input window, operand 0']
    #allocation3 [shape = 's32[2]{0}', space=sflag, size = 0x8, scoped, tag = 'scoped memory for tpu_custom_call.1']
    #allocation4 [shape = 's32[2]{0}', space=sflag, size = 0x8, scoped, tag = 'scoped memory for tpu_custom_call.1']
    #allocation5 [shape = 'u8[16384]{0}', space=vmem, size = 0x4000, scoped, tag = 'output window, operand 0']
    %9 = vsyncpa [#allocation3], 0
    %s10 = scalar_lea.sflag [#allocation3], 1
    %11 = vsyncpa %s10, 0
    %12 = vsyncpa [#allocation4], 0
    %s13 = scalar_lea.sflag [#allocation4], 1
    %14 = vsyncpa %s13, 0
    loop: start=0, step=1, limit=4
    $region2: #{tpu_custom_call.1} parent=1 // loop_pre_header
      _
    $region3: #{tpu_custom_call.1} parent=1 // loop_header
      %s16 = sphi 0, %s20
      %p17 = scmp.ge.s32.totalorder %s16, 4
      %s26 = sphi 0, %s28
      %s29 = sphi 0, %s26
      %s30 = sphi 0, %s29
      %s46 = sphi 0, %s30
      %s50 = sphi 0, %s50
      %s52 = sphi 0, %s50
      %s53 = sphi 0, %s52
      %s67 = sphi 0, %s53
      %s71 = sphi 0, %s71
      %s73 = sphi 0, %s71
      %s74 = sphi 0, %s73
      %s88 = sphi 0, %s74
      %s92 = sphi 0, %s92
      %s94 = sphi 0, %s92
      %s95 = sphi 0, %s94
      %s109 = sphi 0, %s95
      %s115 = sphi 0, %s117
      %s118 = sphi 0, %s115
      %s119 = sphi 0, %s118
      %s135 = sphi 0, %s119
    $region4: #{tpu_custom_call.1} parent=1 // loop_header_branch
      %19 = sbr.rel (%p17) target = $region8
    $region5: #{tpu_custom_call.1} parent=1 // loop_body
      %s21 = ssub.s32 %s16, 1
      %s22 = ssub.s32 %s16, 2
      %s23 = sadd.s32 %s16, 1
      %s24 = ssub.s32 %s16, %s23
      %p25 = scmp.eq.s32.totalorder %s24, 0
      %s27 = sadd.s32 %s26, 1
      %s28 = scalar_select %p25, %s26, %s27
      %p31 = pneg %p25
      %p32 = scmp.eq.s32.totalorder %s16, 1
      %p33 = por %p31, %p32
      %p34 = scmp.ne.s32.totalorder %s26, %s29
      %p35 = scmp.eq.s32.totalorder %s16, 0
      %p36 = por %p34, %p35
      %p37 = scmp.ne.s32.totalorder %s26, %s29
      %p38 = scmp.eq.s32.totalorder %s21, 1
      %p39 = por %p37, %p38
      %p40 = scmp.ne.s32.totalorder %s29, %s30
      %p41 = scmp.eq.s32.totalorder %s21, 0
      %p42 = por %p40, %p41
      %p43 = scmp.ne.s32.totalorder %s29, %s30
      %p44 = scmp.eq.s32.totalorder %s22, 1
      %p45 = por %p43, %p44
      %p47 = scmp.ne.s32.totalorder %s30, %s46
      %p48 = scmp.eq.s32.totalorder %s22, 0
      %p49 = por %p47, %p48
      %s51 = sadd.s32 %s50, 1
      %p54 = scmp.eq.s32.totalorder %s16, 1
      %p55 = scmp.ne.s32.totalorder %s50, %s52
      %p56 = scmp.eq.s32.totalorder %s16, 0
      %p57 = por %p55, %p56
      %p58 = scmp.ne.s32.totalorder %s50, %s52
      %p59 = scmp.eq.s32.totalorder %s21, 1
      %p60 = por %p58, %p59
      %p61 = scmp.ne.s32.totalorder %s52, %s53
      %p62 = scmp.eq.s32.totalorder %s21, 0
      %p63 = por %p61, %p62
      %p64 = scmp.ne.s32.totalorder %s52, %s53
      %p65 = scmp.eq.s32.totalorder %s22, 1
      %p66 = por %p64, %p65
      %p68 = scmp.ne.s32.totalorder %s53, %s67
      %p69 = scmp.eq.s32.totalorder %s22, 0
      %p70 = por %p68, %p69
      %s72 = sadd.s32 %s71, 1
      %p75 = scmp.eq.s32.totalorder %s16, 1
      %p76 = scmp.ne.s32.totalorder %s71, %s73
      %p77 = scmp.eq.s32.totalorder %s16, 0
      %p78 = por %p76, %p77
      %p79 = scmp.ne.s32.totalorder %s71, %s73
      %p80 = scmp.eq.s32.totalorder %s21, 1
      %p81 = por %p79, %p80
      %p82 = scmp.ne.s32.totalorder %s73, %s74
      %p83 = scmp.eq.s32.totalorder %s21, 0
      %p84 = por %p82, %p83
      %p85 = scmp.ne.s32.totalorder %s73, %s74
      %p86 = scmp.eq.s32.totalorder %s22, 1
      %p87 = por %p85, %p86
      %p89 = scmp.ne.s32.totalorder %s74, %s88
      %p90 = scmp.eq.s32.totalorder %s22, 0
      %p91 = por %p89, %p90
      %s93 = sadd.s32 %s92, 1
      %p96 = scmp.eq.s32.totalorder %s16, 1
      %p97 = scmp.ne.s32.totalorder %s92, %s94
      %p98 = scmp.eq.s32.totalorder %s16, 0
      %p99 = por %p97, %p98
      %p100 = scmp.ne.s32.totalorder %s92, %s94
      %p101 = scmp.eq.s32.totalorder %s21, 1
      %p102 = por %p100, %p101
      %p103 = scmp.ne.s32.totalorder %s94, %s95
      %p104 = scmp.eq.s32.totalorder %s21, 0
      %p105 = por %p103, %p104
      %p106 = scmp.ne.s32.totalorder %s94, %s95
      %p107 = scmp.eq.s32.totalorder %s22, 1
      %p108 = por %p106, %p107
      %p110 = scmp.ne.s32.totalorder %s95, %s109
      %p111 = scmp.eq.s32.totalorder %s22, 0
      %p112 = por %p110, %p111
      %s113 = ssub.s32 %s16, %s23
      %p114 = scmp.eq.s32.totalorder %s113, 0
      %s116 = sadd.s32 %s115, 1
      %s117 = scalar_select %p114, %s115, %s116
      %p120 = pneg %p114
      %p121 = scmp.eq.s32.totalorder %s16, 1
      %p122 = por %p120, %p121
      %p123 = scmp.ne.s32.totalorder %s115, %s118
      %p124 = scmp.eq.s32.totalorder %s16, 0
      %p125 = por %p123, %p124
      %p126 = scmp.ne.s32.totalorder %s115, %s118
      %p127 = scmp.eq.s32.totalorder %s21, 1
      %p128 = por %p126, %p127
      %p129 = scmp.ne.s32.totalorder %s118, %s119
      %p130 = scmp.eq.s32.totalorder %s21, 0
      %p131 = por %p129, %p130
      %p132 = scmp.ne.s32.totalorder %s118, %s119
      %p133 = scmp.eq.s32.totalorder %s22, 1
      %p134 = por %p132, %p133
      %p136 = scmp.ne.s32.totalorder %s119, %s135
      %p137 = scmp.eq.s32.totalorder %s22, 0
      %p138 = por %p136, %p137
      %p139 = scmp.le.s32.totalorder 1, %s16
      %p140 = scmp.lt.s32.totalorder %s16, 3
      %p141 = pnand %p139, %p140
      %p142 = pneg %p141
      // Predicated region
      $region9: #{tpu_custom_call.1} parent=5 // pred_check
        _
      $region10: #{tpu_custom_call.1} parent=5 // pred_check_branch
        %144 = sbr.rel (%p141) target = $region12
      $region11: #{tpu_custom_call.1} parent=5 // pred_region
        %s145 = ssub.s32 %s16, 1
        // Predicated region
        $region13: #{tpu_custom_call.1} parent=11 // pred_check
          %p146 = pneg %p63
        $region14: #{tpu_custom_call.1} parent=11 // pred_check_branch
          %148 = sbr.rel (%p146) target = $region16
        $region15: #{tpu_custom_call.1} parent=11 // pred_region
          _
        $region16: #{tpu_custom_call.1} parent=11 // pred_fallthru
          _
        // Predicated region
        $region17: #{tpu_custom_call.1} parent=11 // pred_check
          %p149 = pneg %p84
        $region18: #{tpu_custom_call.1} parent=11 // pred_check_branch
          %151 = sbr.rel (%p149) target = $region20
        $region19: #{tpu_custom_call.1} parent=11 // pred_region
          _
        $region20: #{tpu_custom_call.1} parent=11 // pred_fallthru
          _
        // Predicated region
        $region21: #{tpu_custom_call.1} parent=11 // pred_check
          %p152 = pneg %p105
        $region22: #{tpu_custom_call.1} parent=11 // pred_check_branch
          %154 = sbr.rel (%p152) target = $region24
        $region23: #{tpu_custom_call.1} parent=11 // pred_region
          _
        $region24: #{tpu_custom_call.1} parent=11 // pred_fallthru
          _
      $region12: #{tpu_custom_call.1} parent=5 // pred_fallthru
        _
      %p155 = scmp.lt.s32.totalorder %s16, 2
      // Predicated region
      $region25: #{tpu_custom_call.1} parent=5 // pred_check
        %p156 = pneg %p155
      $region26: #{tpu_custom_call.1} parent=5 // pred_check_branch
        %158 = sbr.rel (%p156) target = $region28
      $region27: #{tpu_custom_call.1} parent=5 // pred_region
        // Predicated region
        $region29: #{tpu_custom_call.1} parent=27 // pred_check
          %p159 = pneg %p36
        $region30: #{tpu_custom_call.1} parent=27 // pred_check_branch
          %161 = sbr.rel (%p159) target = $region32
        $region31: #{tpu_custom_call.1} parent=27 // pred_region
          %s162 = sand.u32 %s26, 1
          %s163 = scalar_lea.sflag [#allocation3], %s162
          %s164 = sand.u32 %s26, 1
          %s165 = smul.addr %s164, 8
          %s166 = scalar_lea.vmem [#allocation2], %s165
          %s167 = smul.u32 2, %s16
          %s169 = ssub.s32 128, 128
          %170 = vsyncadd %s163, %s169
          %s171 = smul.addr %s167, 64
          %s172 = scalar_lea.hbm %s0, %s171
          %s174 = sshll.u32 %s166, 4
          %s175 = int_to_ptr.vmem [resolvable:$true] %s174
          %177 = dma.hbm_to_vmem [thread:$0]  %s172, 128, %s175, %s163
        $region32: #{tpu_custom_call.1} parent=27 // pred_fallthru
          _
      $region28: #{tpu_custom_call.1} parent=5 // pred_fallthru
        _
      %p178 = scmp.le.s32.totalorder 1, %s16
      %p179 = scmp.lt.s32.totalorder %s16, 3
      %p180 = pnand %p178, %p179
      %p181 = pneg %p180
      // Predicated region
      $region33: #{tpu_custom_call.1} parent=5 // pred_check
        _
      $region34: #{tpu_custom_call.1} parent=5 // pred_check_branch
        %183 = sbr.rel (%p180) target = $region36
      $region35: #{tpu_custom_call.1} parent=5 // pred_region
        %s184 = ssub.s32 %s16, 1
        %s185 = sand.u32 %s29, 1
        %s186 = scalar_lea.sflag [#allocation3], %s185
        %s187 = sand.u32 %s29, 1
        %s188 = smul.addr %s187, 8
        %s189 = scalar_lea.vmem [#allocation2], %s188
        // Predicated region
        $region37: #{tpu_custom_call.1} parent=35 // pred_check
          %p190 = pneg %p42
        $region38: #{tpu_custom_call.1} parent=35 // pred_check_branch
          %192 = sbr.rel (%p190) target = $region40
        $region39: #{tpu_custom_call.1} parent=35 // pred_region
          %193 = dma.done %s186, 128
        $region40: #{tpu_custom_call.1} parent=35 // pred_fallthru
          _
        %s194 = sand.u32 %s29, 1
        %s195 = scalar_lea.sflag [#allocation3], %s194
        %s196 = sand.u32 %s29, 1
        %s197 = smul.addr %s196, 8
        %s198 = scalar_lea.vmem [#allocation2], %s197
        %p199 = pneg %p42
        %p200 = pneg %p39
        %p201 = pneg %p63
        %p202 = pneg %p60
        %p203 = pneg %p84
        %p204 = pneg %p81
        %p205 = pneg %p105
        %p206 = pneg %p102
        %p207 = pneg %p131
        %p208 = pneg %p128
        %s209 = sand.u32 %s118, 1
        %s210 = scalar_lea.sflag [#allocation4], %s209
        %s211 = sand.u32 %s118, 1
        %s212 = smul.addr %s211, 16
        %s213 = scalar_lea.vmem [#allocation5], %s212
        %s214 = smul.u32 2, %s21
        %s215 = smul.u32 2, %s21
        %v216 = vld [vmem:[%s189] sm:$0xff]
        %v217 = vld [vmem:[%s1] sm:$0xf]
        %v218 = vld [vmem:[%s1] sm:$0xff]
        %220 = vset.pattern.permute.xlu0 0
        %221 = vperm.xlu0 %220, %v217
        %v222 = vpop.permute.xlu0 %221
        %v224 = vunpack.c.l.s4 839922192
        %v225 = vunpack.c.0.s8 %v224
        %v226 = vlaneseq
        %v227 = vshrl.u32 %v226, 7
        %v228 = vsub.s32 %v225, %v227
        %v229 = vrot.slane %v222, %v228
        %v231 = vmul.f32 %v216, %v229
        %232 = vset.pattern.permute.xlu0 1
        %233 = vperm.xlu0 %232, %v217
        %v234 = vpop.permute.xlu0 %233
        %v236 = vunpack.c.l.s4 839922192
        %v237 = vunpack.c.0.s8 %v236
        %v238 = vlaneseq
        %v239 = vshrl.u32 %v238, 7
        %v240 = vsub.s32 %v237, %v239
        %v241 = vrot.slane %v234, %v240
        %v243 = vadd.f32 %v231, %v241
        %vm244 = vcmp.ge.f32.partialorder %v243, 0.0
        %v245 = vmul.f32 %v243, 0.01
        %v246 = vsel %vm244, %v243, %v245
        %v247 = vld [vmem:[%s2] sm:$0xff]
        %249 = vset.pattern.permute.xlu0 2
        %250 = vperm.xlu0 %249, %v218
        %v251 = vpop.permute.xlu0 %250
        %v254 = vcombine.high %v246, %v246
        %vm255 = vcmask 31744
        %v257 = vsel %vm255, %v247, 0
        %vm259 = vcmask 1043456
        %v260 = vsel %vm259, %v246, 0
        %v262 = vsel %vm259, %v254, 0
        %264 = vmatprep.subr.mxu0 0.0
        %265 = vmatpush1.msra.mxu0 0.0
        %266 = vmatprep.subr.mxu0 0.0
        %267 = vmatpush1.msra.mxu0 0.0
        %268 = vmatprep.subr.mxu0 0.0
        %269 = vmatpush1.msra.mxu0 0.0
        %270 = vmatprep.subr.mxu0 0.0
        %271 = vmatpush1.msra.mxu0 0.0
        %272 = vmatprep.subr.mxu0 0.0
        %273 = vmatpush1.msra.mxu0 0.0
        %274 = vmatprep.subr.mxu0 0.0
        %275 = vmatpush1.msra.mxu0 0.0
        %276 = vmatprep.subr.mxu0 0.0
        %277 = vmatpush1.msra.mxu0 0.0
        %278 = vmatprep.subr.mxu0 0.0
        %279 = vmatpush1.msra.mxu0 0.0
        %280 = vmatprep.subr.mxu0 0.0
        %281 = vmatpush1.msra.mxu0 0.0
        %282 = vmatprep.subr.mxu0 0.0
        %283 = vmatpush1.msra.mxu0 0.0
        %284 = vmatprep.subr.mxu0 0.0
        %285 = vmatpush1.msra.mxu0 0.0
        %286 = vmatprep.subr.mxu0 0.0
        %287 = vmatpush1.msra.mxu0 0.0
        %288 = vmatprep.subr.mxu0 0.0
        %289 = vmatpush1.msra.mxu0 0.0
        %290 = vmatprep.subr.mxu0 0.0
        %291 = vmatpush1.msra.mxu0 0.0
        %292 = vmatprep.subr.mxu0 0.0
        %293 = vmatpush1.msra.mxu0 0.0
        %v294 = vand.u32 %v262, 4294901760
        %295 = vmatprep.subr.mxu0 %v294
        %v296 = vand.u32 %v260, 4294901760
        %297 = vmatpush1.msra.mxu0 %v296
        %298 = vmatprep.subr.mxu0 0.0
        %299 = vmatpush2.msra.mxu0 0.0
        %300 = vmatprep.subr.mxu0 0.0
        %301 = vmatpush2.msra.mxu0 0.0
        %302 = vmatprep.subr.mxu0 0.0
        %303 = vmatpush2.msra.mxu0 0.0
        %304 = vmatprep.subr.mxu0 0.0
        %305 = vmatpush2.msra.mxu0 0.0
        %306 = vmatprep.subr.mxu0 0.0
        %307 = vmatpush2.msra.mxu0 0.0
        %308 = vmatprep.subr.mxu0 0.0
        %309 = vmatpush2.msra.mxu0 0.0
        %310 = vmatprep.subr.mxu0 0.0
        %311 = vmatpush2.msra.mxu0 0.0
        %312 = vmatprep.subr.mxu0 0.0
        %313 = vmatpush2.msra.mxu0 0.0
        %314 = vmatprep.subr.mxu0 0.0
        %315 = vmatpush2.msra.mxu0 0.0
        %316 = vmatprep.subr.mxu0 0.0
        %317 = vmatpush2.msra.mxu0 0.0
        %318 = vmatprep.subr.mxu0 0.0
        %319 = vmatpush2.msra.mxu0 0.0
        %320 = vmatprep.subr.mxu0 0.0
        %321 = vmatpush2.msra.mxu0 0.0
        %322 = vmatprep.subr.mxu0 0.0
        %323 = vmatpush2.msra.mxu0 0.0
        %324 = vmatprep.subr.mxu0 0.0
        %325 = vmatpush2.msra.mxu0 0.0
        %326 = vmatprep.subr.mxu0 0.0
        %327 = vmatpush2.msra.mxu0 0.0
        %328 = vmatprep.subr.mxu0 0.0
        %329 = vmatpush2.msra.mxu0 0.0
        %330 = vmatprep.mubr.f32.mxu0 0.0
        %v331 = vand.u32 %v257, 4294901760
        %v332 = vsub.f32 %v257, %v331
        %v333 = vand.u32 %v332, 4294901760
        %v334 = vsub.f32 %v332, %v333
        %v335 = vand.u32 %v334, 4294901760
        %336 = vmatmul.mubr.f32.gmra.mxu0 %v335
        %v337 = vpop.f32.mrf.mxu0
        %v338 = vadd.f32 %v251, %v337
        %v339 = vpop.f32.mrf.mxu0
        %v340 = vadd.f32 %v251, %v339
        %341 = vdwg.mxu0
        %342 = vmatprep.subr.mxu0 0.0
        %343 = vmatpush1.msra.mxu0 0.0
        %344 = vmatprep.subr.mxu0 0.0
        %345 = vmatpush1.msra.mxu0 0.0
        %346 = vmatprep.subr.mxu0 0.0
        %347 = vmatpush1.msra.mxu0 0.0
        %348 = vmatprep.subr.mxu0 0.0
        %349 = vmatpush1.msra.mxu0 0.0
        %350 = vmatprep.subr.mxu0 0.0
        %351 = vmatpush1.msra.mxu0 0.0
        %352 = vmatprep.subr.mxu0 0.0
        %353 = vmatpush1.msra.mxu0 0.0
        %354 = vmatprep.subr.mxu0 0.0
        %355 = vmatpush1.msra.mxu0 0.0
        %356 = vmatprep.subr.mxu0 0.0
        %357 = vmatpush1.msra.mxu0 0.0
        %358 = vmatprep.subr.mxu0 0.0
        %359 = vmatpush1.msra.mxu0 0.0
        %360 = vmatprep.subr.mxu0 0.0
        %361 = vmatpush1.msra.mxu0 0.0
        %362 = vmatprep.subr.mxu0 0.0
        %363 = vmatpush1.msra.mxu0 0.0
        %364 = vmatprep.subr.mxu0 0.0
        %365 = vmatpush1.msra.mxu0 0.0
        %366 = vmatprep.subr.mxu0 0.0
        %367 = vmatpush1.msra.mxu0 0.0
        %368 = vmatprep.subr.mxu0 0.0
        %369 = vmatpush1.msra.mxu0 0.0
        %370 = vmatprep.subr.mxu0 0.0
        %371 = vmatpush1.msra.mxu0 0.0
        %v372 = vand.u32 %v262, 4294901760
        %v373 = vsub.f32 %v262, %v372
        %v374 = vand.u32 %v373, 4294901760
        %v375 = vsub.f32 %v373, %v374
        %v376 = vand.u32 %v375, 4294901760
        %377 = vmatprep.subr.mxu0 %v376
        %v378 = vand.u32 %v260, 4294901760
        %v379 = vsub.f32 %v260, %v378
        %v380 = vand.u32 %v379, 4294901760
        %v381 = vsub.f32 %v379, %v380
        %v382 = vand.u32 %v381, 4294901760
        %383 = vmatpush1.msra.mxu0 %v382
        %384 = vmatprep.subr.mxu0 0.0
        %385 = vmatpush2.msra.mxu0 0.0
        %386 = vmatprep.subr.mxu0 0.0
        %387 = vmatpush2.msra.mxu0 0.0
        %388 = vmatprep.subr.mxu0 0.0
        %389 = vmatpush2.msra.mxu0 0.0
        %390 = vmatprep.subr.mxu0 0.0
        %391 = vmatpush2.msra.mxu0 0.0
        %392 = vmatprep.subr.mxu0 0.0
        %393 = vmatpush2.msra.mxu0 0.0
        %394 = vmatprep.subr.mxu0 0.0
        %395 = vmatpush2.msra.mxu0 0.0
        %396 = vmatprep.subr.mxu0 0.0
        %397 = vmatpush2.msra.mxu0 0.0
        %398 = vmatprep.subr.mxu0 0.0
        %399 = vmatpush2.msra.mxu0 0.0
        %400 = vmatprep.subr.mxu0 0.0
        %401 = vmatpush2.msra.mxu0 0.0
        %402 = vmatprep.subr.mxu0 0.0
        %403 = vmatpush2.msra.mxu0 0.0
        %404 = vmatprep.subr.mxu0 0.0
        %405 = vmatpush2.msra.mxu0 0.0
        %406 = vmatprep.subr.mxu0 0.0
        %407 = vmatpush2.msra.mxu0 0.0
        %408 = vmatprep.subr.mxu0 0.0
        %409 = vmatpush2.msra.mxu0 0.0
        %410 = vmatprep.subr.mxu0 0.0
        %411 = vmatpush2.msra.mxu0 0.0
        %412 = vmatprep.subr.mxu0 0.0
        %413 = vmatpush2.msra.mxu0 0.0
        %414 = vmatprep.subr.mxu0 0.0
        %415 = vmatpush2.msra.mxu0 0.0
        %416 = vmatprep.mubr.f32.mxu0 0.0
        %v417 = vand.u32 %v257, 4294901760
        %418 = vmatmul.mubr.f32.gmra.mxu0 %v417
        %v419 = vpop.f32.mrf.mxu0
        %v420 = vadd.f32 %v338, %v419
        %v421 = vpop.f32.mrf.mxu0
        %v422 = vadd.f32 %v340, %v421
        %423 = vdwg.mxu0
        %424 = vmatprep.subr.mxu0 0.0
        %425 = vmatpush1.msra.mxu0 0.0
        %426 = vmatprep.subr.mxu0 0.0
        %427 = vmatpush1.msra.mxu0 0.0
        %428 = vmatprep.subr.mxu0 0.0
        %429 = vmatpush1.msra.mxu0 0.0
        %430 = vmatprep.subr.mxu0 0.0
        %431 = vmatpush1.msra.mxu0 0.0
        %432 = vmatprep.subr.mxu0 0.0
        %433 = vmatpush1.msra.mxu0 0.0
        %434 = vmatprep.subr.mxu0 0.0
        %435 = vmatpush1.msra.mxu0 0.0
        %436 = vmatprep.subr.mxu0 0.0
        %437 = vmatpush1.msra.mxu0 0.0
        %438 = vmatprep.subr.mxu0 0.0
        %439 = vmatpush1.msra.mxu0 0.0
        %440 = vmatprep.subr.mxu0 0.0
        %441 = vmatpush1.msra.mxu0 0.0
        %442 = vmatprep.subr.mxu0 0.0
        %443 = vmatpush1.msra.mxu0 0.0
        %444 = vmatprep.subr.mxu0 0.0
        %445 = vmatpush1.msra.mxu0 0.0
        %446 = vmatprep.subr.mxu0 0.0
        %447 = vmatpush1.msra.mxu0 0.0
        %448 = vmatprep.subr.mxu0 0.0
        %449 = vmatpush1.msra.mxu0 0.0
        %450 = vmatprep.subr.mxu0 0.0
        %451 = vmatpush1.msra.mxu0 0.0
        %452 = vmatprep.subr.mxu0 0.0
        %453 = vmatpush1.msra.mxu0 0.0
        %v454 = vand.u32 %v262, 4294901760
        %v455 = vsub.f32 %v262, %v454
        %456 = vmatprep.subr.mxu0 %v455
        %v457 = vand.u32 %v260, 4294901760
        %v458 = vsub.f32 %v260, %v457
        %459 = vmatpush1.msra.mxu0 %v458
        %460 = vmatprep.subr.mxu0 0.0
        %461 = vmatpush2.msra.mxu0 0.0
        %462 = vmatprep.subr.mxu0 0.0
        %463 = vmatpush2.msra.mxu0 0.0
        %464 = vmatprep.subr.mxu0 0.0
        %465 = vmatpush2.msra.mxu0 0.0
        %466 = vmatprep.subr.mxu0 0.0
        %467 = vmatpush2.msra.mxu0 0.0
        %468 = vmatprep.subr.mxu0 0.0
        %469 = vmatpush2.msra.mxu0 0.0
        %470 = vmatprep.subr.mxu0 0.0
        %471 = vmatpush2.msra.mxu0 0.0
        %472 = vmatprep.subr.mxu0 0.0
        %473 = vmatpush2.msra.mxu0 0.0
        %474 = vmatprep.subr.mxu0 0.0
        %475 = vmatpush2.msra.mxu0 0.0
        %476 = vmatprep.subr.mxu0 0.0
        %477 = vmatpush2.msra.mxu0 0.0
        %478 = vmatprep.subr.mxu0 0.0
        %479 = vmatpush2.msra.mxu0 0.0
        %480 = vmatprep.subr.mxu0 0.0
        %481 = vmatpush2.msra.mxu0 0.0
        %482 = vmatprep.subr.mxu0 0.0
        %483 = vmatpush2.msra.mxu0 0.0
        %484 = vmatprep.subr.mxu0 0.0
        %485 = vmatpush2.msra.mxu0 0.0
        %486 = vmatprep.subr.mxu0 0.0
        %487 = vmatpush2.msra.mxu0 0.0
        %488 = vmatprep.subr.mxu0 0.0
        %489 = vmatpush2.msra.mxu0 0.0
        %490 = vmatprep.subr.mxu0 0.0
        %491 = vmatpush2.msra.mxu0 0.0
        %492 = vmatprep.mubr.f32.mxu0 0.0
        %v493 = vand.u32 %v257, 4294901760
        %v494 = vsub.f32 %v257, %v493
        %495 = vmatmul.mubr.f32.gmra.mxu0 %v494
        %v496 = vpop.f32.mrf.mxu0
        %v497 = vadd.f32 %v420, %v496
        %v498 = vpop.f32.mrf.mxu0
        %v499 = vadd.f32 %v422, %v498
        %500 = vdwg.mxu0
        %501 = vmatprep.subr.mxu0 0.0
        %502 = vmatpush1.msra.mxu0 0.0
        %503 = vmatprep.subr.mxu0 0.0
        %504 = vmatpush1.msra.mxu0 0.0
        %505 = vmatprep.subr.mxu0 0.0
        %506 = vmatpush1.msra.mxu0 0.0
        %507 = vmatprep.subr.mxu0 0.0
        %508 = vmatpush1.msra.mxu0 0.0
        %509 = vmatprep.subr.mxu0 0.0
        %510 = vmatpush1.msra.mxu0 0.0
        %511 = vmatprep.subr.mxu0 0.0
        %512 = vmatpush1.msra.mxu0 0.0
        %513 = vmatprep.subr.mxu0 0.0
        %514 = vmatpush1.msra.mxu0 0.0
        %515 = vmatprep.subr.mxu0 0.0
        %516 = vmatpush1.msra.mxu0 0.0
        %517 = vmatprep.subr.mxu0 0.0
        %518 = vmatpush1.msra.mxu0 0.0
        %519 = vmatprep.subr.mxu0 0.0
        %520 = vmatpush1.msra.mxu0 0.0
        %521 = vmatprep.subr.mxu0 0.0
        %522 = vmatpush1.msra.mxu0 0.0
        %523 = vmatprep.subr.mxu0 0.0
        %524 = vmatpush1.msra.mxu0 0.0
        %525 = vmatprep.subr.mxu0 0.0
        %526 = vmatpush1.msra.mxu0 0.0
        %527 = vmatprep.subr.mxu0 0.0
        %528 = vmatpush1.msra.mxu0 0.0
        %529 = vmatprep.subr.mxu0 0.0
        %530 = vmatpush1.msra.mxu0 0.0
        %v531 = vand.u32 %v262, 4294901760
        %532 = vmatprep.subr.mxu0 %v531
        %v533 = vand.u32 %v260, 4294901760
        %534 = vmatpush1.msra.mxu0 %v533
        %535 = vmatprep.subr.mxu0 0.0
        %536 = vmatpush2.msra.mxu0 0.0
        %537 = vmatprep.subr.mxu0 0.0
        %538 = vmatpush2.msra.mxu0 0.0
        %539 = vmatprep.subr.mxu0 0.0
        %540 = vmatpush2.msra.mxu0 0.0
        %541 = vmatprep.subr.mxu0 0.0
        %542 = vmatpush2.msra.mxu0 0.0
        %543 = vmatprep.subr.mxu0 0.0
        %544 = vmatpush2.msra.mxu0 0.0
        %545 = vmatprep.subr.mxu0 0.0
        %546 = vmatpush2.msra.mxu0 0.0
        %547 = vmatprep.subr.mxu0 0.0
        %548 = vmatpush2.msra.mxu0 0.0
        %549 = vmatprep.subr.mxu0 0.0
        %550 = vmatpush2.msra.mxu0 0.0
        %551 = vmatprep.subr.mxu0 0.0
        %552 = vmatpush2.msra.mxu0 0.0
        %553 = vmatprep.subr.mxu0 0.0
        %554 = vmatpush2.msra.mxu0 0.0
        %555 = vmatprep.subr.mxu0 0.0
        %556 = vmatpush2.msra.mxu0 0.0
        %557 = vmatprep.subr.mxu0 0.0
        %558 = vmatpush2.msra.mxu0 0.0
        %559 = vmatprep.subr.mxu0 0.0
        %560 = vmatpush2.msra.mxu0 0.0
        %561 = vmatprep.subr.mxu0 0.0
        %562 = vmatpush2.msra.mxu0 0.0
        %563 = vmatprep.subr.mxu0 0.0
        %564 = vmatpush2.msra.mxu0 0.0
        %565 = vmatprep.subr.mxu0 0.0
        %566 = vmatpush2.msra.mxu0 0.0
        %567 = vmatprep.mubr.f32.mxu0 0.0
        %v568 = vand.u32 %v257, 4294901760
        %v569 = vsub.f32 %v257, %v568
        %v570 = vand.u32 %v569, 4294901760
        %571 = vmatmul.mubr.f32.gmra.mxu0 %v570
        %v572 = vpop.f32.mrf.mxu0
        %v573 = vadd.f32 %v497, %v572
        %v574 = vpop.f32.mrf.mxu0
        %v575 = vadd.f32 %v499, %v574
        %576 = vdwg.mxu0
        %577 = vmatprep.subr.mxu0 0.0
        %578 = vmatpush1.msra.mxu0 0.0
        %579 = vmatprep.subr.mxu0 0.0
        %580 = vmatpush1.msra.mxu0 0.0
        %581 = vmatprep.subr.mxu0 0.0
        %582 = vmatpush1.msra.mxu0 0.0
        %583 = vmatprep.subr.mxu0 0.0
        %584 = vmatpush1.msra.mxu0 0.0
        %585 = vmatprep.subr.mxu0 0.0
        %586 = vmatpush1.msra.mxu0 0.0
        %587 = vmatprep.subr.mxu0 0.0
        %588 = vmatpush1.msra.mxu0 0.0
        %589 = vmatprep.subr.mxu0 0.0
        %590 = vmatpush1.msra.mxu0 0.0
        %591 = vmatprep.subr.mxu0 0.0
        %592 = vmatpush1.msra.mxu0 0.0
        %593 = vmatprep.subr.mxu0 0.0
        %594 = vmatpush1.msra.mxu0 0.0
        %595 = vmatprep.subr.mxu0 0.0
        %596 = vmatpush1.msra.mxu0 0.0
        %597 = vmatprep.subr.mxu0 0.0
        %598 = vmatpush1.msra.mxu0 0.0
        %599 = vmatprep.subr.mxu0 0.0
        %600 = vmatpush1.msra.mxu0 0.0
        %601 = vmatprep.subr.mxu0 0.0
        %602 = vmatpush1.msra.mxu0 0.0
        %603 = vmatprep.subr.mxu0 0.0
        %604 = vmatpush1.msra.mxu0 0.0
        %605 = vmatprep.subr.mxu0 0.0
        %606 = vmatpush1.msra.mxu0 0.0
        %v607 = vand.u32 %v262, 4294901760
        %v608 = vsub.f32 %v262, %v607
        %v609 = vand.u32 %v608, 4294901760
        %610 = vmatprep.subr.mxu0 %v609
        %v611 = vand.u32 %v260, 4294901760
        %v612 = vsub.f32 %v260, %v611
        %v613 = vand.u32 %v612, 4294901760
        %614 = vmatpush1.msra.mxu0 %v613
        %615 = vmatprep.subr.mxu0 0.0
        %616 = vmatpush2.msra.mxu0 0.0
        %617 = vmatprep.subr.mxu0 0.0
        %618 = vmatpush2.msra.mxu0 0.0
        %619 = vmatprep.subr.mxu0 0.0
        %620 = vmatpush2.msra.mxu0 0.0
        %621 = vmatprep.subr.mxu0 0.0
        %622 = vmatpush2.msra.mxu0 0.0
        %623 = vmatprep.subr.mxu0 0.0
        %624 = vmatpush2.msra.mxu0 0.0
        %625 = vmatprep.subr.mxu0 0.0
        %626 = vmatpush2.msra.mxu0 0.0
        %627 = vmatprep.subr.mxu0 0.0
        %628 = vmatpush2.msra.mxu0 0.0
        %629 = vmatprep.subr.mxu0 0.0
        %630 = vmatpush2.msra.mxu0 0.0
        %631 = vmatprep.subr.mxu0 0.0
        %632 = vmatpush2.msra.mxu0 0.0
        %633 = vmatprep.subr.mxu0 0.0
        %634 = vmatpush2.msra.mxu0 0.0
        %635 = vmatprep.subr.mxu0 0.0
        %636 = vmatpush2.msra.mxu0 0.0
        %637 = vmatprep.subr.mxu0 0.0
        %638 = vmatpush2.msra.mxu0 0.0
        %639 = vmatprep.subr.mxu0 0.0
        %640 = vmatpush2.msra.mxu0 0.0
        %641 = vmatprep.subr.mxu0 0.0
        %642 = vmatpush2.msra.mxu0 0.0
        %643 = vmatprep.subr.mxu0 0.0
        %644 = vmatpush2.msra.mxu0 0.0
        %645 = vmatprep.subr.mxu0 0.0
        %646 = vmatpush2.msra.mxu0 0.0
        %647 = vmatprep.mubr.f32.mxu0 0.0
        %v648 = vand.u32 %v257, 4294901760
        %649 = vmatmul.mubr.f32.gmra.mxu0 %v648
        %v650 = vpop.f32.mrf.mxu0
        %v651 = vadd.f32 %v573, %v650
        %v652 = vpop.f32.mrf.mxu0
        %v653 = vadd.f32 %v575, %v652
        %654 = vdwg.mxu0
        %655 = vmatprep.subr.mxu0 0.0
        %656 = vmatpush1.msra.mxu0 0.0
        %657 = vmatprep.subr.mxu0 0.0
        %658 = vmatpush1.msra.mxu0 0.0
        %659 = vmatprep.subr.mxu0 0.0
        %660 = vmatpush1.msra.mxu0 0.0
        %661 = vmatprep.subr.mxu0 0.0
        %662 = vmatpush1.msra.mxu0 0.0
        %663 = vmatprep.subr.mxu0 0.0
        %664 = vmatpush1.msra.mxu0 0.0
        %665 = vmatprep.subr.mxu0 0.0
        %666 = vmatpush1.msra.mxu0 0.0
        %667 = vmatprep.subr.mxu0 0.0
        %668 = vmatpush1.msra.mxu0 0.0
        %669 = vmatprep.subr.mxu0 0.0
        %670 = vmatpush1.msra.mxu0 0.0
        %671 = vmatprep.subr.mxu0 0.0
        %672 = vmatpush1.msra.mxu0 0.0
        %673 = vmatprep.subr.mxu0 0.0
        %674 = vmatpush1.msra.mxu0 0.0
        %675 = vmatprep.subr.mxu0 0.0
        %676 = vmatpush1.msra.mxu0 0.0
        %677 = vmatprep.subr.mxu0 0.0
        %678 = vmatpush1.msra.mxu0 0.0
        %679 = vmatprep.subr.mxu0 0.0
        %680 = vmatpush1.msra.mxu0 0.0
        %681 = vmatprep.subr.mxu0 0.0
        %682 = vmatpush1.msra.mxu0 0.0
        %683 = vmatprep.subr.mxu0 0.0
        %684 = vmatpush1.msra.mxu0 0.0
        %v685 = vand.u32 %v262, 4294901760
        %686 = vmatprep.subr.mxu0 %v685
        %v687 = vand.u32 %v260, 4294901760
        %688 = vmatpush1.msra.mxu0 %v687
        %689 = vmatprep.subr.mxu0 0.0
        %690 = vmatpush2.msra.mxu0 0.0
        %691 = vmatprep.subr.mxu0 0.0
        %692 = vmatpush2.msra.mxu0 0.0
        %693 = vmatprep.subr.mxu0 0.0
        %694 = vmatpush2.msra.mxu0 0.0
        %695 = vmatprep.subr.mxu0 0.0
        %696 = vmatpush2.msra.mxu0 0.0
        %697 = vmatprep.subr.mxu0 0.0
        %698 = vmatpush2.msra.mxu0 0.0
        %699 = vmatprep.subr.mxu0 0.0
        %700 = vmatpush2.msra.mxu0 0.0
        %701 = vmatprep.subr.mxu0 0.0
        %702 = vmatpush2.msra.mxu0 0.0
        %703 = vmatprep.subr.mxu0 0.0
        %704 = vmatpush2.msra.mxu0 0.0
        %705 = vmatprep.subr.mxu0 0.0
        %706 = vmatpush2.msra.mxu0 0.0
        %707 = vmatprep.subr.mxu0 0.0
        %708 = vmatpush2.msra.mxu0 0.0
        %709 = vmatprep.subr.mxu0 0.0
        %710 = vmatpush2.msra.mxu0 0.0
        %711 = vmatprep.subr.mxu0 0.0
        %712 = vmatpush2.msra.mxu0 0.0
        %713 = vmatprep.subr.mxu0 0.0
        %714 = vmatpush2.msra.mxu0 0.0
        %715 = vmatprep.subr.mxu0 0.0
        %716 = vmatpush2.msra.mxu0 0.0
        %717 = vmatprep.subr.mxu0 0.0
        %718 = vmatpush2.msra.mxu0 0.0
        %719 = vmatprep.subr.mxu0 0.0
        %720 = vmatpush2.msra.mxu0 0.0
        %721 = vmatprep.mubr.f32.mxu0 0.0
        %v722 = vand.u32 %v257, 4294901760
        %723 = vmatmul.mubr.f32.gmra.mxu0 %v722
        %v724 = vpop.f32.mrf.mxu0
        %v725 = vadd.f32 %v651, %v724
        %v726 = vpop.f32.mrf.mxu0
        %v727 = vadd.f32 %v653, %v726
        %728 = vdwg.mxu0
        %vm729 = vcmp.ge.f32.partialorder %v725, 0.0
        %vm730 = vcmp.ge.f32.partialorder %v727, 0.0
        %v731 = vmul.f32 %v725, 0.01
        %v732 = vmul.f32 %v727, 0.01
        %v733 = vsel %vm729, %v725, %v731
        %v734 = vsel %vm730, %v727, %v732
        %v735 = vlaneseq
        %v736 = vand.u32 %v735, 127
        %v737 = vadd.s32 %v736, 128
        %v738 = vand.u32 %v736, 255
        %v739 = vand.u32 %v737, 255
        %740 = vrot.lane.b32.xlu0 %v733, 32
        %v741 = vpop.permute.xlu0 %740
        %742 = vrot.lane.b32.xlu0 %v734, 32
        %v743 = vpop.permute.xlu0 %742
        %vm744 = vcmp.lt.s32.totalorder %v736, 32
        %v745 = vsel %vm744, %v741, %v743
        %v746 = vsel %vm744, %v743, %v741
        %vm747 = vcmp.ge.s32.totalorder %v738, 32
        %vm748 = vcmp.ge.s32.totalorder %v739, 32
        %v749 = vsel %vm747, %v746, 0.0
        %v750 = vsel %vm748, %v745, 0.0
        %v751 = vld [vmem:[%s3] sm:$0xf]
        %752 = vrot.lane.b32.xlu0 %v733, 16
        %v753 = vpop.permute.xlu0 %752
        %754 = vrot.lane.b32.xlu0 %v734, 16
        %v755 = vpop.permute.xlu0 %754
        %vm756 = vcmp.lt.s32.totalorder %v736, 16
        %v757 = vsel %vm756, %v753, %v755
        %v758 = vsel %vm756, %v755, %v753
        %vm759 = vcmp.ge.s32.totalorder %v738, 16
        %vm760 = vcmp.ge.s32.totalorder %v739, 16
        %v761 = vsel %vm759, %v758, 0.0
        %v762 = vsel %vm760, %v757, 0.0
        %s763 = scalar_lea.vmem %s3, 4
        %v764 = vld [vmem:[%s763] sm:$0xf]
        %vm765 = vcmask 64512
        %v767 = vsel %vm765, %v764, 0
        %769 = vmatprep.subr.mxu0 0.0
        %770 = vmatpush1.msra.mxu0 0.0
        %771 = vmatprep.subr.mxu0 0.0
        %772 = vmatpush1.msra.mxu0 0.0
        %773 = vmatprep.subr.mxu0 0.0
        %774 = vmatpush1.msra.mxu0 0.0
        %775 = vmatprep.subr.mxu0 0.0
        %776 = vmatpush1.msra.mxu0 0.0
        %777 = vmatprep.subr.mxu0 0.0
        %778 = vmatpush1.msra.mxu0 0.0
        %779 = vmatprep.subr.mxu0 0.0
        %780 = vmatpush1.msra.mxu0 0.0
        %781 = vmatprep.subr.mxu0 0.0
        %782 = vmatpush1.msra.mxu0 0.0
        %783 = vmatprep.subr.mxu0 0.0
        %784 = vmatpush1.msra.mxu0 0.0
        %785 = vmatprep.subr.mxu0 0.0
        %786 = vmatpush1.msra.mxu0 0.0
        %787 = vmatprep.subr.mxu0 0.0
        %788 = vmatpush1.msra.mxu0 0.0
        %789 = vmatprep.subr.mxu0 0.0
        %790 = vmatpush1.msra.mxu0 0.0
        %791 = vmatprep.subr.mxu0 0.0
        %792 = vmatpush1.msra.mxu0 0.0
        %793 = vmatprep.subr.mxu0 0.0
        %794 = vmatpush1.msra.mxu0 0.0
        %795 = vmatprep.subr.mxu0 0.0
        %796 = vmatpush1.msra.mxu0 0.0
        %797 = vmatprep.subr.mxu0 0.0
        %798 = vmatpush1.msra.mxu0 0.0
        %v799 = vand.u32 %v762, 4294901760
        %800 = vmatprep.subr.mxu0 %v799
        %v801 = vand.u32 %v761, 4294901760
        %802 = vmatpush1.msra.mxu0 %v801
        %803 = vmatprep.subr.mxu0 0.0
        %804 = vmatpush2.msra.mxu0 0.0
        %805 = vmatprep.subr.mxu0 0.0
        %806 = vmatpush2.msra.mxu0 0.0
        %807 = vmatprep.subr.mxu0 0.0
        %808 = vmatpush2.msra.mxu0 0.0
        %809 = vmatprep.subr.mxu0 0.0
        %810 = vmatpush2.msra.mxu0 0.0
        %811 = vmatprep.subr.mxu0 0.0
        %812 = vmatpush2.msra.mxu0 0.0
        %813 = vmatprep.subr.mxu0 0.0
        %814 = vmatpush2.msra.mxu0 0.0
        %815 = vmatprep.subr.mxu0 0.0
        %816 = vmatpush2.msra.mxu0 0.0
        %817 = vmatprep.subr.mxu0 0.0
        %818 = vmatpush2.msra.mxu0 0.0
        %819 = vmatprep.subr.mxu0 0.0
        %820 = vmatpush2.msra.mxu0 0.0
        %821 = vmatprep.subr.mxu0 0.0
        %822 = vmatpush2.msra.mxu0 0.0
        %823 = vmatprep.subr.mxu0 0.0
        %824 = vmatpush2.msra.mxu0 0.0
        %825 = vmatprep.subr.mxu0 0.0
        %826 = vmatpush2.msra.mxu0 0.0
        %827 = vmatprep.subr.mxu0 0.0
        %828 = vmatpush2.msra.mxu0 0.0
        %829 = vmatprep.subr.mxu0 0.0
        %830 = vmatpush2.msra.mxu0 0.0
        %831 = vmatprep.subr.mxu0 0.0
        %832 = vmatpush2.msra.mxu0 0.0
        %833 = vmatprep.subr.mxu0 0.0
        %834 = vmatpush2.msra.mxu0 0.0
        %835 = vmatprep.mubr.f32.mxu0 0.0
        %v836 = vand.u32 %v767, 4294901760
        %v837 = vsub.f32 %v767, %v836
        %v838 = vand.u32 %v837, 4294901760
        %v839 = vsub.f32 %v837, %v838
        %v840 = vand.u32 %v839, 4294901760
        %841 = vmatmul.mubr.f32.gmra.mxu0 %v840
        %v842 = vpop.f32.mrf.mxu0
        %v843 = vadd.f32 0.0, %v842
        %v844 = vpop.f32.mrf.mxu0
        %v845 = vadd.f32 0.0, %v844
        %846 = vdwg.mxu0
        %847 = vmatprep.subr.mxu0 0.0
        %848 = vmatpush1.msra.mxu0 0.0
        %849 = vmatprep.subr.mxu0 0.0
        %850 = vmatpush1.msra.mxu0 0.0
        %851 = vmatprep.subr.mxu0 0.0
        %852 = vmatpush1.msra.mxu0 0.0
        %853 = vmatprep.subr.mxu0 0.0
        %854 = vmatpush1.msra.mxu0 0.0
        %855 = vmatprep.subr.mxu0 0.0
        %856 = vmatpush1.msra.mxu0 0.0
        %857 = vmatprep.subr.mxu0 0.0
        %858 = vmatpush1.msra.mxu0 0.0
        %859 = vmatprep.subr.mxu0 0.0
        %860 = vmatpush1.msra.mxu0 0.0
        %861 = vmatprep.subr.mxu0 0.0
        %862 = vmatpush1.msra.mxu0 0.0
        %863 = vmatprep.subr.mxu0 0.0
        %864 = vmatpush1.msra.mxu0 0.0
        %865 = vmatprep.subr.mxu0 0.0
        %866 = vmatpush1.msra.mxu0 0.0
        %867 = vmatprep.subr.mxu0 0.0
        %868 = vmatpush1.msra.mxu0 0.0
        %869 = vmatprep.subr.mxu0 0.0
        %870 = vmatpush1.msra.mxu0 0.0
        %871 = vmatprep.subr.mxu0 0.0
        %872 = vmatpush1.msra.mxu0 0.0
        %873 = vmatprep.subr.mxu0 0.0
        %874 = vmatpush1.msra.mxu0 0.0
        %875 = vmatprep.subr.mxu0 0.0
        %876 = vmatpush1.msra.mxu0 0.0
        %v877 = vand.u32 %v762, 4294901760
        %v878 = vsub.f32 %v762, %v877
        %v879 = vand.u32 %v878, 4294901760
        %v880 = vsub.f32 %v878, %v879
        %v881 = vand.u32 %v880, 4294901760
        %882 = vmatprep.subr.mxu0 %v881
        %v883 = vand.u32 %v761, 4294901760
        %v884 = vsub.f32 %v761, %v883
        %v885 = vand.u32 %v884, 4294901760
        %v886 = vsub.f32 %v884, %v885
        %v887 = vand.u32 %v886, 4294901760
        %888 = vmatpush1.msra.mxu0 %v887
        %889 = vmatprep.subr.mxu0 0.0
        %890 = vmatpush2.msra.mxu0 0.0
        %891 = vmatprep.subr.mxu0 0.0
        %892 = vmatpush2.msra.mxu0 0.0
        %893 = vmatprep.subr.mxu0 0.0
        %894 = vmatpush2.msra.mxu0 0.0
        %895 = vmatprep.subr.mxu0 0.0
        %896 = vmatpush2.msra.mxu0 0.0
        %897 = vmatprep.subr.mxu0 0.0
        %898 = vmatpush2.msra.mxu0 0.0
        %899 = vmatprep.subr.mxu0 0.0
        %900 = vmatpush2.msra.mxu0 0.0
        %901 = vmatprep.subr.mxu0 0.0
        %902 = vmatpush2.msra.mxu0 0.0
        %903 = vmatprep.subr.mxu0 0.0
        %904 = vmatpush2.msra.mxu0 0.0
        %905 = vmatprep.subr.mxu0 0.0
        %906 = vmatpush2.msra.mxu0 0.0
        %907 = vmatprep.subr.mxu0 0.0
        %908 = vmatpush2.msra.mxu0 0.0
        %909 = vmatprep.subr.mxu0 0.0
        %910 = vmatpush2.msra.mxu0 0.0
        %911 = vmatprep.subr.mxu0 0.0
        %912 = vmatpush2.msra.mxu0 0.0
        %913 = vmatprep.subr.mxu0 0.0
        %914 = vmatpush2.msra.mxu0 0.0
        %915 = vmatprep.subr.mxu0 0.0
        %916 = vmatpush2.msra.mxu0 0.0
        %917 = vmatprep.subr.mxu0 0.0
        %918 = vmatpush2.msra.mxu0 0.0
        %919 = vmatprep.subr.mxu0 0.0
        %920 = vmatpush2.msra.mxu0 0.0
        %921 = vmatprep.mubr.f32.mxu0 0.0
        %v922 = vand.u32 %v767, 4294901760
        %923 = vmatmul.mubr.f32.gmra.mxu0 %v922
        %v924 = vpop.f32.mrf.mxu0
        %v925 = vadd.f32 %v843, %v924
        %v926 = vpop.f32.mrf.mxu0
        %v927 = vadd.f32 %v845, %v926
        %928 = vdwg.mxu0
        %929 = vmatprep.subr.mxu0 0.0
        %930 = vmatpush1.msra.mxu0 0.0
        %931 = vmatprep.subr.mxu0 0.0
        %932 = vmatpush1.msra.mxu0 0.0
        %933 = vmatprep.subr.mxu0 0.0
        %934 = vmatpush1.msra.mxu0 0.0
        %935 = vmatprep.subr.mxu0 0.0
        %936 = vmatpush1.msra.mxu0 0.0
        %937 = vmatprep.subr.mxu0 0.0
        %938 = vmatpush1.msra.mxu0 0.0
        %939 = vmatprep.subr.mxu0 0.0
        %940 = vmatpush1.msra.mxu0 0.0
        %941 = vmatprep.subr.mxu0 0.0
        %942 = vmatpush1.msra.mxu0 0.0
        %943 = vmatprep.subr.mxu0 0.0
        %944 = vmatpush1.msra.mxu0 0.0
        %945 = vmatprep.subr.mxu0 0.0
        %946 = vmatpush1.msra.mxu0 0.0
        %947 = vmatprep.subr.mxu0 0.0
        %948 = vmatpush1.msra.mxu0 0.0
        %949 = vmatprep.subr.mxu0 0.0
        %950 = vmatpush1.msra.mxu0 0.0
        %951 = vmatprep.subr.mxu0 0.0
        %952 = vmatpush1.msra.mxu0 0.0
        %953 = vmatprep.subr.mxu0 0.0
        %954 = vmatpush1.msra.mxu0 0.0
        %955 = vmatprep.subr.mxu0 0.0
        %956 = vmatpush1.msra.mxu0 0.0
        %957 = vmatprep.subr.mxu0 0.0
        %958 = vmatpush1.msra.mxu0 0.0
        %v959 = vand.u32 %v762, 4294901760
        %v960 = vsub.f32 %v762, %v959
        %961 = vmatprep.subr.mxu0 %v960
        %v962 = vand.u32 %v761, 4294901760
        %v963 = vsub.f32 %v761, %v962
        %964 = vmatpush1.msra.mxu0 %v963
        %965 = vmatprep.subr.mxu0 0.0
        %966 = vmatpush2.msra.mxu0 0.0
        %967 = vmatprep.subr.mxu0 0.0
        %968 = vmatpush2.msra.mxu0 0.0
        %969 = vmatprep.subr.mxu0 0.0
        %970 = vmatpush2.msra.mxu0 0.0
        %971 = vmatprep.subr.mxu0 0.0
        %972 = vmatpush2.msra.mxu0 0.0
        %973 = vmatprep.subr.mxu0 0.0
        %974 = vmatpush2.msra.mxu0 0.0
        %975 = vmatprep.subr.mxu0 0.0
        %976 = vmatpush2.msra.mxu0 0.0
        %977 = vmatprep.subr.mxu0 0.0
        %978 = vmatpush2.msra.mxu0 0.0
        %979 = vmatprep.subr.mxu0 0.0
        %980 = vmatpush2.msra.mxu0 0.0
        %981 = vmatprep.subr.mxu0 0.0
        %982 = vmatpush2.msra.mxu0 0.0
        %983 = vmatprep.subr.mxu0 0.0
        %984 = vmatpush2.msra.mxu0 0.0
        %985 = vmatprep.subr.mxu0 0.0
        %986 = vmatpush2.msra.mxu0 0.0
        %987 = vmatprep.subr.mxu0 0.0
        %988 = vmatpush2.msra.mxu0 0.0
        %989 = vmatprep.subr.mxu0 0.0
        %990 = vmatpush2.msra.mxu0 0.0
        %991 = vmatprep.subr.mxu0 0.0
        %992 = vmatpush2.msra.mxu0 0.0
        %993 = vmatprep.subr.mxu0 0.0
        %994 = vmatpush2.msra.mxu0 0.0
        %995 = vmatprep.subr.mxu0 0.0
        %996 = vmatpush2.msra.mxu0 0.0
        %997 = vmatprep.mubr.f32.mxu0 0.0
        %v998 = vand.u32 %v767, 4294901760
        %v999 = vsub.f32 %v767, %v998
        %1000 = vmatmul.mubr.f32.gmra.mxu0 %v999
        %v1001 = vpop.f32.mrf.mxu0
        %v1002 = vadd.f32 %v925, %v1001
        %v1003 = vpop.f32.mrf.mxu0
        %v1004 = vadd.f32 %v927, %v1003
        %1005 = vdwg.mxu0
        %1006 = vmatprep.subr.mxu0 0.0
        %1007 = vmatpush1.msra.mxu0 0.0
        %1008 = vmatprep.subr.mxu0 0.0
        %1009 = vmatpush1.msra.mxu0 0.0
        %1010 = vmatprep.subr.mxu0 0.0
        %1011 = vmatpush1.msra.mxu0 0.0
        %1012 = vmatprep.subr.mxu0 0.0
        %1013 = vmatpush1.msra.mxu0 0.0
        %1014 = vmatprep.subr.mxu0 0.0
        %1015 = vmatpush1.msra.mxu0 0.0
        %1016 = vmatprep.subr.mxu0 0.0
        %1017 = vmatpush1.msra.mxu0 0.0
        %1018 = vmatprep.subr.mxu0 0.0
        %1019 = vmatpush1.msra.mxu0 0.0
        %1020 = vmatprep.subr.mxu0 0.0
        %1021 = vmatpush1.msra.mxu0 0.0
        %1022 = vmatprep.subr.mxu0 0.0
        %1023 = vmatpush1.msra.mxu0 0.0
        %1024 = vmatprep.subr.mxu0 0.0
        %1025 = vmatpush1.msra.mxu0 0.0
        %1026 = vmatprep.subr.mxu0 0.0
        %1027 = vmatpush1.msra.mxu0 0.0
        %1028 = vmatprep.subr.mxu0 0.0
        %1029 = vmatpush1.msra.mxu0 0.0
        %1030 = vmatprep.subr.mxu0 0.0
        %1031 = vmatpush1.msra.mxu0 0.0
        %1032 = vmatprep.subr.mxu0 0.0
        %1033 = vmatpush1.msra.mxu0 0.0
        %1034 = vmatprep.subr.mxu0 0.0
        %1035 = vmatpush1.msra.mxu0 0.0
        %v1036 = vand.u32 %v762, 4294901760
        %1037 = vmatprep.subr.mxu0 %v1036
        %v1038 = vand.u32 %v761, 4294901760
        %1039 = vmatpush1.msra.mxu0 %v1038
        %1040 = vmatprep.subr.mxu0 0.0
        %1041 = vmatpush2.msra.mxu0 0.0
        %1042 = vmatprep.subr.mxu0 0.0
        %1043 = vmatpush2.msra.mxu0 0.0
        %1044 = vmatprep.subr.mxu0 0.0
        %1045 = vmatpush2.msra.mxu0 0.0
        %1046 = vmatprep.subr.mxu0 0.0
        %1047 = vmatpush2.msra.mxu0 0.0
        %1048 = vmatprep.subr.mxu0 0.0
        %1049 = vmatpush2.msra.mxu0 0.0
        %1050 = vmatprep.subr.mxu0 0.0
        %1051 = vmatpush2.msra.mxu0 0.0
        %1052 = vmatprep.subr.mxu0 0.0
        %1053 = vmatpush2.msra.mxu0 0.0
        %1054 = vmatprep.subr.mxu0 0.0
        %1055 = vmatpush2.msra.mxu0 0.0
        %1056 = vmatprep.subr.mxu0 0.0
        %1057 = vmatpush2.msra.mxu0 0.0
        %1058 = vmatprep.subr.mxu0 0.0
        %1059 = vmatpush2.msra.mxu0 0.0
        %1060 = vmatprep.subr.mxu0 0.0
        %1061 = vmatpush2.msra.mxu0 0.0
        %1062 = vmatprep.subr.mxu0 0.0
        %1063 = vmatpush2.msra.mxu0 0.0
        %1064 = vmatprep.subr.mxu0 0.0
        %1065 = vmatpush2.msra.mxu0 0.0
        %1066 = vmatprep.subr.mxu0 0.0
        %1067 = vmatpush2.msra.mxu0 0.0
        %1068 = vmatprep.subr.mxu0 0.0
        %1069 = vmatpush2.msra.mxu0 0.0
        %1070 = vmatprep.subr.mxu0 0.0
        %1071 = vmatpush2.msra.mxu0 0.0
        %1072 = vmatprep.mubr.f32.mxu0 0.0
        %v1073 = vand.u32 %v767, 4294901760
        %v1074 = vsub.f32 %v767, %v1073
        %v1075 = vand.u32 %v1074, 4294901760
        %1076 = vmatmul.mubr.f32.gmra.mxu0 %v1075
        %v1077 = vpop.f32.mrf.mxu0
        %v1078 = vadd.f32 %v1002, %v1077
        %v1079 = vpop.f32.mrf.mxu0
        %v1080 = vadd.f32 %v1004, %v1079
        %1081 = vdwg.mxu0
        %1082 = vmatprep.subr.mxu0 0.0
        %1083 = vmatpush1.msra.mxu0 0.0
        %1084 = vmatprep.subr.mxu0 0.0
        %1085 = vmatpush1.msra.mxu0 0.0
        %1086 = vmatprep.subr.mxu0 0.0
        %1087 = vmatpush1.msra.mxu0 0.0
        %1088 = vmatprep.subr.mxu0 0.0
        %1089 = vmatpush1.msra.mxu0 0.0
        %1090 = vmatprep.subr.mxu0 0.0
        %1091 = vmatpush1.msra.mxu0 0.0
        %1092 = vmatprep.subr.mxu0 0.0
        %1093 = vmatpush1.msra.mxu0 0.0
        %1094 = vmatprep.subr.mxu0 0.0
        %1095 = vmatpush1.msra.mxu0 0.0
        %1096 = vmatprep.subr.mxu0 0.0
        %1097 = vmatpush1.msra.mxu0 0.0
        %1098 = vmatprep.subr.mxu0 0.0
        %1099 = vmatpush1.msra.mxu0 0.0
        %1100 = vmatprep.subr.mxu0 0.0
        %1101 = vmatpush1.msra.mxu0 0.0
        %1102 = vmatprep.subr.mxu0 0.0
        %1103 = vmatpush1.msra.mxu0 0.0
        %1104 = vmatprep.subr.mxu0 0.0
        %1105 = vmatpush1.msra.mxu0 0.0
        %1106 = vmatprep.subr.mxu0 0.0
        %1107 = vmatpush1.msra.mxu0 0.0
        %1108 = vmatprep.subr.mxu0 0.0
        %1109 = vmatpush1.msra.mxu0 0.0
        %1110 = vmatprep.subr.mxu0 0.0
        %1111 = vmatpush1.msra.mxu0 0.0
        %v1112 = vand.u32 %v762, 4294901760
        %v1113 = vsub.f32 %v762, %v1112
        %v1114 = vand.u32 %v1113, 4294901760
        %1115 = vmatprep.subr.mxu0 %v1114
        %v1116 = vand.u32 %v761, 4294901760
        %v1117 = vsub.f32 %v761, %v1116
        %v1118 = vand.u32 %v1117, 4294901760
        %1119 = vmatpush1.msra.mxu0 %v1118
        %1120 = vmatprep.subr.mxu0 0.0
        %1121 = vmatpush2.msra.mxu0 0.0
        %1122 = vmatprep.subr.mxu0 0.0
        %1123 = vmatpush2.msra.mxu0 0.0
        %1124 = vmatprep.subr.mxu0 0.0
        %1125 = vmatpush2.msra.mxu0 0.0
        %1126 = vmatprep.subr.mxu0 0.0
        %1127 = vmatpush2.msra.mxu0 0.0
        %1128 = vmatprep.subr.mxu0 0.0
        %1129 = vmatpush2.msra.mxu0 0.0
        %1130 = vmatprep.subr.mxu0 0.0
        %1131 = vmatpush2.msra.mxu0 0.0
        %1132 = vmatprep.subr.mxu0 0.0
        %1133 = vmatpush2.msra.mxu0 0.0
        %1134 = vmatprep.subr.mxu0 0.0
        %1135 = vmatpush2.msra.mxu0 0.0
        %1136 = vmatprep.subr.mxu0 0.0
        %1137 = vmatpush2.msra.mxu0 0.0
        %1138 = vmatprep.subr.mxu0 0.0
        %1139 = vmatpush2.msra.mxu0 0.0
        %1140 = vmatprep.subr.mxu0 0.0
        %1141 = vmatpush2.msra.mxu0 0.0
        %1142 = vmatprep.subr.mxu0 0.0
        %1143 = vmatpush2.msra.mxu0 0.0
        %1144 = vmatprep.subr.mxu0 0.0
        %1145 = vmatpush2.msra.mxu0 0.0
        %1146 = vmatprep.subr.mxu0 0.0
        %1147 = vmatpush2.msra.mxu0 0.0
        %1148 = vmatprep.subr.mxu0 0.0
        %1149 = vmatpush2.msra.mxu0 0.0
        %1150 = vmatprep.subr.mxu0 0.0
        %1151 = vmatpush2.msra.mxu0 0.0
        %1152 = vmatprep.mubr.f32.mxu0 0.0
        %v1153 = vand.u32 %v767, 4294901760
        %1154 = vmatmul.mubr.f32.gmra.mxu0 %v1153
        %v1155 = vpop.f32.mrf.mxu0
        %v1156 = vadd.f32 %v1078, %v1155
        %v1157 = vpop.f32.mrf.mxu0
        %v1158 = vadd.f32 %v1080, %v1157
        %1159 = vdwg.mxu0
        %1160 = vmatprep.subr.mxu0 0.0
        %1161 = vmatpush1.msra.mxu0 0.0
        %1162 = vmatprep.subr.mxu0 0.0
        %1163 = vmatpush1.msra.mxu0 0.0
        %1164 = vmatprep.subr.mxu0 0.0
        %1165 = vmatpush1.msra.mxu0 0.0
        %1166 = vmatprep.subr.mxu0 0.0
        %1167 = vmatpush1.msra.mxu0 0.0
        %1168 = vmatprep.subr.mxu0 0.0
        %1169 = vmatpush1.msra.mxu0 0.0
        %1170 = vmatprep.subr.mxu0 0.0
        %1171 = vmatpush1.msra.mxu0 0.0
        %1172 = vmatprep.subr.mxu0 0.0
        %1173 = vmatpush1.msra.mxu0 0.0
        %1174 = vmatprep.subr.mxu0 0.0
        %1175 = vmatpush1.msra.mxu0 0.0
        %1176 = vmatprep.subr.mxu0 0.0
        %1177 = vmatpush1.msra.mxu0 0.0
        %1178 = vmatprep.subr.mxu0 0.0
        %1179 = vmatpush1.msra.mxu0 0.0
        %1180 = vmatprep.subr.mxu0 0.0
        %1181 = vmatpush1.msra.mxu0 0.0
        %1182 = vmatprep.subr.mxu0 0.0
        %1183 = vmatpush1.msra.mxu0 0.0
        %1184 = vmatprep.subr.mxu0 0.0
        %1185 = vmatpush1.msra.mxu0 0.0
        %1186 = vmatprep.subr.mxu0 0.0
        %1187 = vmatpush1.msra.mxu0 0.0
        %1188 = vmatprep.subr.mxu0 0.0
        %1189 = vmatpush1.msra.mxu0 0.0
        %v1190 = vand.u32 %v762, 4294901760
        %1191 = vmatprep.subr.mxu0 %v1190
        %v1192 = vand.u32 %v761, 4294901760
        %1193 = vmatpush1.msra.mxu0 %v1192
        %1194 = vmatprep.subr.mxu0 0.0
        %1195 = vmatpush2.msra.mxu0 0.0
        %1196 = vmatprep.subr.mxu0 0.0
        %1197 = vmatpush2.msra.mxu0 0.0
        %1198 = vmatprep.subr.mxu0 0.0
        %1199 = vmatpush2.msra.mxu0 0.0
        %1200 = vmatprep.subr.mxu0 0.0
        %1201 = vmatpush2.msra.mxu0 0.0
        %1202 = vmatprep.subr.mxu0 0.0
        %1203 = vmatpush2.msra.mxu0 0.0
        %1204 = vmatprep.subr.mxu0 0.0
        %1205 = vmatpush2.msra.mxu0 0.0
        %1206 = vmatprep.subr.mxu0 0.0
        %1207 = vmatpush2.msra.mxu0 0.0
        %1208 = vmatprep.subr.mxu0 0.0
        %1209 = vmatpush2.msra.mxu0 0.0
        %1210 = vmatprep.subr.mxu0 0.0
        %1211 = vmatpush2.msra.mxu0 0.0
        %1212 = vmatprep.subr.mxu0 0.0
        %1213 = vmatpush2.msra.mxu0 0.0
        %1214 = vmatprep.subr.mxu0 0.0
        %1215 = vmatpush2.msra.mxu0 0.0
        %1216 = vmatprep.subr.mxu0 0.0
        %1217 = vmatpush2.msra.mxu0 0.0
        %1218 = vmatprep.subr.mxu0 0.0
        %1219 = vmatpush2.msra.mxu0 0.0
        %1220 = vmatprep.subr.mxu0 0.0
        %1221 = vmatpush2.msra.mxu0 0.0
        %1222 = vmatprep.subr.mxu0 0.0
        %1223 = vmatpush2.msra.mxu0 0.0
        %1224 = vmatprep.subr.mxu0 0.0
        %1225 = vmatpush2.msra.mxu0 0.0
        %1226 = vmatprep.mubr.f32.mxu0 0.0
        %v1227 = vand.u32 %v767, 4294901760
        %1228 = vmatmul.mubr.f32.gmra.mxu0 %v1227
        %v1229 = vpop.f32.mrf.mxu0
        %v1230 = vadd.f32 %v1156, %v1229
        %v1231 = vpop.f32.mrf.mxu0
        %v1232 = vadd.f32 %v1158, %v1231
        %1233 = vdwg.mxu0
        %v1235 = vsel %vm765, %v751, 0
        %1237 = vmatprep.subr.mxu0 0.0
        %1238 = vmatpush1.msra.mxu0 0.0
        %1239 = vmatprep.subr.mxu0 0.0
        %1240 = vmatpush1.msra.mxu0 0.0
        %1241 = vmatprep.subr.mxu0 0.0
        %1242 = vmatpush1.msra.mxu0 0.0
        %1243 = vmatprep.subr.mxu0 0.0
        %1244 = vmatpush1.msra.mxu0 0.0
        %1245 = vmatprep.subr.mxu0 0.0
        %1246 = vmatpush1.msra.mxu0 0.0
        %1247 = vmatprep.subr.mxu0 0.0
        %1248 = vmatpush1.msra.mxu0 0.0
        %1249 = vmatprep.subr.mxu0 0.0
        %1250 = vmatpush1.msra.mxu0 0.0
        %1251 = vmatprep.subr.mxu0 0.0
        %1252 = vmatpush1.msra.mxu0 0.0
        %1253 = vmatprep.subr.mxu0 0.0
        %1254 = vmatpush1.msra.mxu0 0.0
        %1255 = vmatprep.subr.mxu0 0.0
        %1256 = vmatpush1.msra.mxu0 0.0
        %1257 = vmatprep.subr.mxu0 0.0
        %1258 = vmatpush1.msra.mxu0 0.0
        %1259 = vmatprep.subr.mxu0 0.0
        %1260 = vmatpush1.msra.mxu0 0.0
        %1261 = vmatprep.subr.mxu0 0.0
        %1262 = vmatpush1.msra.mxu0 0.0
        %1263 = vmatprep.subr.mxu0 0.0
        %1264 = vmatpush1.msra.mxu0 0.0
        %1265 = vmatprep.subr.mxu0 0.0
        %1266 = vmatpush1.msra.mxu0 0.0
        %v1267 = vand.u32 %v750, 4294901760
        %1268 = vmatprep.subr.mxu0 %v1267
        %v1269 = vand.u32 %v749, 4294901760
        %1270 = vmatpush1.msra.mxu0 %v1269
        %1271 = vmatprep.subr.mxu0 0.0
        %1272 = vmatpush2.msra.mxu0 0.0
        %1273 = vmatprep.subr.mxu0 0.0
        %1274 = vmatpush2.msra.mxu0 0.0
        %1275 = vmatprep.subr.mxu0 0.0
        %1276 = vmatpush2.msra.mxu0 0.0
        %1277 = vmatprep.subr.mxu0 0.0
        %1278 = vmatpush2.msra.mxu0 0.0
        %1279 = vmatprep.subr.mxu0 0.0
        %1280 = vmatpush2.msra.mxu0 0.0
        %1281 = vmatprep.subr.mxu0 0.0
        %1282 = vmatpush2.msra.mxu0 0.0
        %1283 = vmatprep.subr.mxu0 0.0
        %1284 = vmatpush2.msra.mxu0 0.0
        %1285 = vmatprep.subr.mxu0 0.0
        %1286 = vmatpush2.msra.mxu0 0.0
        %1287 = vmatprep.subr.mxu0 0.0
        %1288 = vmatpush2.msra.mxu0 0.0
        %1289 = vmatprep.subr.mxu0 0.0
        %1290 = vmatpush2.msra.mxu0 0.0
        %1291 = vmatprep.subr.mxu0 0.0
        %1292 = vmatpush2.msra.mxu0 0.0
        %1293 = vmatprep.subr.mxu0 0.0
        %1294 = vmatpush2.msra.mxu0 0.0
        %1295 = vmatprep.subr.mxu0 0.0
        %1296 = vmatpush2.msra.mxu0 0.0
        %1297 = vmatprep.subr.mxu0 0.0
        %1298 = vmatpush2.msra.mxu0 0.0
        %1299 = vmatprep.subr.mxu0 0.0
        %1300 = vmatpush2.msra.mxu0 0.0
        %1301 = vmatprep.subr.mxu0 0.0
        %1302 = vmatpush2.msra.mxu0 0.0
        %1303 = vmatprep.mubr.f32.mxu0 0.0
        %v1304 = vand.u32 %v1235, 4294901760
        %v1305 = vsub.f32 %v1235, %v1304
        %v1306 = vand.u32 %v1305, 4294901760
        %v1307 = vsub.f32 %v1305, %v1306
        %v1308 = vand.u32 %v1307, 4294901760
        %1309 = vmatmul.mubr.f32.gmra.mxu0 %v1308
        %v1310 = vpop.f32.mrf.mxu0
        %v1311 = vadd.f32 %v1230, %v1310
        %v1312 = vpop.f32.mrf.mxu0
        %v1313 = vadd.f32 %v1232, %v1312
        %1314 = vdwg.mxu0
        %1315 = vmatprep.subr.mxu0 0.0
        %1316 = vmatpush1.msra.mxu0 0.0
        %1317 = vmatprep.subr.mxu0 0.0
        %1318 = vmatpush1.msra.mxu0 0.0
        %1319 = vmatprep.subr.mxu0 0.0
        %1320 = vmatpush1.msra.mxu0 0.0
        %1321 = vmatprep.subr.mxu0 0.0
        %1322 = vmatpush1.msra.mxu0 0.0
        %1323 = vmatprep.subr.mxu0 0.0
        %1324 = vmatpush1.msra.mxu0 0.0
        %1325 = vmatprep.subr.mxu0 0.0
        %1326 = vmatpush1.msra.mxu0 0.0
        %1327 = vmatprep.subr.mxu0 0.0
        %1328 = vmatpush1.msra.mxu0 0.0
        %1329 = vmatprep.subr.mxu0 0.0
        %1330 = vmatpush1.msra.mxu0 0.0
        %1331 = vmatprep.subr.mxu0 0.0
        %1332 = vmatpush1.msra.mxu0 0.0
        %1333 = vmatprep.subr.mxu0 0.0
        %1334 = vmatpush1.msra.mxu0 0.0
        %1335 = vmatprep.subr.mxu0 0.0
        %1336 = vmatpush1.msra.mxu0 0.0
        %1337 = vmatprep.subr.mxu0 0.0
        %1338 = vmatpush1.msra.mxu0 0.0
        %1339 = vmatprep.subr.mxu0 0.0
        %1340 = vmatpush1.msra.mxu0 0.0
        %1341 = vmatprep.subr.mxu0 0.0
        %1342 = vmatpush1.msra.mxu0 0.0
        %1343 = vmatprep.subr.mxu0 0.0
        %1344 = vmatpush1.msra.mxu0 0.0
        %v1345 = vand.u32 %v750, 4294901760
        %v1346 = vsub.f32 %v750, %v1345
        %v1347 = vand.u32 %v1346, 4294901760
        %v1348 = vsub.f32 %v1346, %v1347
        %v1349 = vand.u32 %v1348, 4294901760
        %1350 = vmatprep.subr.mxu0 %v1349
        %v1351 = vand.u32 %v749, 4294901760
        %v1352 = vsub.f32 %v749, %v1351
        %v1353 = vand.u32 %v1352, 4294901760
        %v1354 = vsub.f32 %v1352, %v1353
        %v1355 = vand.u32 %v1354, 4294901760
        %1356 = vmatpush1.msra.mxu0 %v1355
        %1357 = vmatprep.subr.mxu0 0.0
        %1358 = vmatpush2.msra.mxu0 0.0
        %1359 = vmatprep.subr.mxu0 0.0
        %1360 = vmatpush2.msra.mxu0 0.0
        %1361 = vmatprep.subr.mxu0 0.0
        %1362 = vmatpush2.msra.mxu0 0.0
        %1363 = vmatprep.subr.mxu0 0.0
        %1364 = vmatpush2.msra.mxu0 0.0
        %1365 = vmatprep.subr.mxu0 0.0
        %1366 = vmatpush2.msra.mxu0 0.0
        %1367 = vmatprep.subr.mxu0 0.0
        %1368 = vmatpush2.msra.mxu0 0.0
        %1369 = vmatprep.subr.mxu0 0.0
        %1370 = vmatpush2.msra.mxu0 0.0
        %1371 = vmatprep.subr.mxu0 0.0
        %1372 = vmatpush2.msra.mxu0 0.0
        %1373 = vmatprep.subr.mxu0 0.0
        %1374 = vmatpush2.msra.mxu0 0.0
        %1375 = vmatprep.subr.mxu0 0.0
        %1376 = vmatpush2.msra.mxu0 0.0
        %1377 = vmatprep.subr.mxu0 0.0
        %1378 = vmatpush2.msra.mxu0 0.0
        %1379 = vmatprep.subr.mxu0 0.0
        %1380 = vmatpush2.msra.mxu0 0.0
        %1381 = vmatprep.subr.mxu0 0.0
        %1382 = vmatpush2.msra.mxu0 0.0
        %1383 = vmatprep.subr.mxu0 0.0
        %1384 = vmatpush2.msra.mxu0 0.0
        %1385 = vmatprep.subr.mxu0 0.0
        %1386 = vmatpush2.msra.mxu0 0.0
        %1387 = vmatprep.subr.mxu0 0.0
        %1388 = vmatpush2.msra.mxu0 0.0
        %1389 = vmatprep.mubr.f32.mxu0 0.0
        %v1390 = vand.u32 %v1235, 4294901760
        %1391 = vmatmul.mubr.f32.gmra.mxu0 %v1390
        %v1392 = vpop.f32.mrf.mxu0
        %v1393 = vadd.f32 %v1311, %v1392
        %v1394 = vpop.f32.mrf.mxu0
        %v1395 = vadd.f32 %v1313, %v1394
        %1396 = vdwg.mxu0
        %1397 = vmatprep.subr.mxu0 0.0
        %1398 = vmatpush1.msra.mxu0 0.0
        %1399 = vmatprep.subr.mxu0 0.0
        %1400 = vmatpush1.msra.mxu0 0.0
        %1401 = vmatprep.subr.mxu0 0.0
        %1402 = vmatpush1.msra.mxu0 0.0
        %1403 = vmatprep.subr.mxu0 0.0
        %1404 = vmatpush1.msra.mxu0 0.0
        %1405 = vmatprep.subr.mxu0 0.0
        %1406 = vmatpush1.msra.mxu0 0.0
        %1407 = vmatprep.subr.mxu0 0.0
        %1408 = vmatpush1.msra.mxu0 0.0
        %1409 = vmatprep.subr.mxu0 0.0
        %1410 = vmatpush1.msra.mxu0 0.0
        %1411 = vmatprep.subr.mxu0 0.0
        %1412 = vmatpush1.msra.mxu0 0.0
        %1413 = vmatprep.subr.mxu0 0.0
        %1414 = vmatpush1.msra.mxu0 0.0
        %1415 = vmatprep.subr.mxu0 0.0
        %1416 = vmatpush1.msra.mxu0 0.0
        %1417 = vmatprep.subr.mxu0 0.0
        %1418 = vmatpush1.msra.mxu0 0.0
        %1419 = vmatprep.subr.mxu0 0.0
        %1420 = vmatpush1.msra.mxu0 0.0
        %1421 = vmatprep.subr.mxu0 0.0
        %1422 = vmatpush1.msra.mxu0 0.0
        %1423 = vmatprep.subr.mxu0 0.0
        %1424 = vmatpush1.msra.mxu0 0.0
        %1425 = vmatprep.subr.mxu0 0.0
        %1426 = vmatpush1.msra.mxu0 0.0
        %v1427 = vand.u32 %v750, 4294901760
        %v1428 = vsub.f32 %v750, %v1427
        %1429 = vmatprep.subr.mxu0 %v1428
        %v1430 = vand.u32 %v749, 4294901760
        %v1431 = vsub.f32 %v749, %v1430
        %1432 = vmatpush1.msra.mxu0 %v1431
        %1433 = vmatprep.subr.mxu0 0.0
        %1434 = vmatpush2.msra.mxu0 0.0
        %1435 = vmatprep.subr.mxu0 0.0
        %1436 = vmatpush2.msra.mxu0 0.0
        %1437 = vmatprep.subr.mxu0 0.0
        %1438 = vmatpush2.msra.mxu0 0.0
        %1439 = vmatprep.subr.mxu0 0.0
        %1440 = vmatpush2.msra.mxu0 0.0
        %1441 = vmatprep.subr.mxu0 0.0
        %1442 = vmatpush2.msra.mxu0 0.0
        %1443 = vmatprep.subr.mxu0 0.0
        %1444 = vmatpush2.msra.mxu0 0.0
        %1445 = vmatprep.subr.mxu0 0.0
        %1446 = vmatpush2.msra.mxu0 0.0
        %1447 = vmatprep.subr.mxu0 0.0
        %1448 = vmatpush2.msra.mxu0 0.0
        %1449 = vmatprep.subr.mxu0 0.0
        %1450 = vmatpush2.msra.mxu0 0.0
        %1451 = vmatprep.subr.mxu0 0.0
        %1452 = vmatpush2.msra.mxu0 0.0
        %1453 = vmatprep.subr.mxu0 0.0
        %1454 = vmatpush2.msra.mxu0 0.0
        %1455 = vmatprep.subr.mxu0 0.0
        %1456 = vmatpush2.msra.mxu0 0.0
        %1457 = vmatprep.subr.mxu0 0.0
        %1458 = vmatpush2.msra.mxu0 0.0
        %1459 = vmatprep.subr.mxu0 0.0
        %1460 = vmatpush2.msra.mxu0 0.0
        %1461 = vmatprep.subr.mxu0 0.0
        %1462 = vmatpush2.msra.mxu0 0.0
        %1463 = vmatprep.subr.mxu0 0.0
        %1464 = vmatpush2.msra.mxu0 0.0
        %1465 = vmatprep.mubr.f32.mxu0 0.0
        %v1466 = vand.u32 %v1235, 4294901760
        %v1467 = vsub.f32 %v1235, %v1466
        %1468 = vmatmul.mubr.f32.gmra.mxu0 %v1467
        %v1469 = vpop.f32.mrf.mxu0
        %v1470 = vadd.f32 %v1393, %v1469
        %v1471 = vpop.f32.mrf.mxu0
        %v1472 = vadd.f32 %v1395, %v1471
        %1473 = vdwg.mxu0
        %1474 = vmatprep.subr.mxu0 0.0
        %1475 = vmatpush1.msra.mxu0 0.0
        %1476 = vmatprep.subr.mxu0 0.0
        %1477 = vmatpush1.msra.mxu0 0.0
        %1478 = vmatprep.subr.mxu0 0.0
        %1479 = vmatpush1.msra.mxu0 0.0
        %1480 = vmatprep.subr.mxu0 0.0
        %1481 = vmatpush1.msra.mxu0 0.0
        %1482 = vmatprep.subr.mxu0 0.0
        %1483 = vmatpush1.msra.mxu0 0.0
        %1484 = vmatprep.subr.mxu0 0.0
        %1485 = vmatpush1.msra.mxu0 0.0
        %1486 = vmatprep.subr.mxu0 0.0
        %1487 = vmatpush1.msra.mxu0 0.0
        %1488 = vmatprep.subr.mxu0 0.0
        %1489 = vmatpush1.msra.mxu0 0.0
        %1490 = vmatprep.subr.mxu0 0.0
        %1491 = vmatpush1.msra.mxu0 0.0
        %1492 = vmatprep.subr.mxu0 0.0
        %1493 = vmatpush1.msra.mxu0 0.0
        %1494 = vmatprep.subr.mxu0 0.0
        %1495 = vmatpush1.msra.mxu0 0.0
        %1496 = vmatprep.subr.mxu0 0.0
        %1497 = vmatpush1.msra.mxu0 0.0
        %1498 = vmatprep.subr.mxu0 0.0
        %1499 = vmatpush1.msra.mxu0 0.0
        %1500 = vmatprep.subr.mxu0 0.0
        %1501 = vmatpush1.msra.mxu0 0.0
        %1502 = vmatprep.subr.mxu0 0.0
        %1503 = vmatpush1.msra.mxu0 0.0
        %v1504 = vand.u32 %v750, 4294901760
        %1505 = vmatprep.subr.mxu0 %v1504
        %v1506 = vand.u32 %v749, 4294901760
        %1507 = vmatpush1.msra.mxu0 %v1506
        %1508 = vmatprep.subr.mxu0 0.0
        %1509 = vmatpush2.msra.mxu0 0.0
        %1510 = vmatprep.subr.mxu0 0.0
        %1511 = vmatpush2.msra.mxu0 0.0
        %1512 = vmatprep.subr.mxu0 0.0
        %1513 = vmatpush2.msra.mxu0 0.0
        %1514 = vmatprep.subr.mxu0 0.0
        %1515 = vmatpush2.msra.mxu0 0.0
        %1516 = vmatprep.subr.mxu0 0.0
        %1517 = vmatpush2.msra.mxu0 0.0
        %1518 = vmatprep.subr.mxu0 0.0
        %1519 = vmatpush2.msra.mxu0 0.0
        %1520 = vmatprep.subr.mxu0 0.0
        %1521 = vmatpush2.msra.mxu0 0.0
        %1522 = vmatprep.subr.mxu0 0.0
        %1523 = vmatpush2.msra.mxu0 0.0
        %1524 = vmatprep.subr.mxu0 0.0
        %1525 = vmatpush2.msra.mxu0 0.0
        %1526 = vmatprep.subr.mxu0 0.0
        %1527 = vmatpush2.msra.mxu0 0.0
        %1528 = vmatprep.subr.mxu0 0.0
        %1529 = vmatpush2.msra.mxu0 0.0
        %1530 = vmatprep.subr.mxu0 0.0
        %1531 = vmatpush2.msra.mxu0 0.0
        %1532 = vmatprep.subr.mxu0 0.0
        %1533 = vmatpush2.msra.mxu0 0.0
        %1534 = vmatprep.subr.mxu0 0.0
        %1535 = vmatpush2.msra.mxu0 0.0
        %1536 = vmatprep.subr.mxu0 0.0
        %1537 = vmatpush2.msra.mxu0 0.0
        %1538 = vmatprep.subr.mxu0 0.0
        %1539 = vmatpush2.msra.mxu0 0.0
        %1540 = vmatprep.mubr.f32.mxu0 0.0
        %v1541 = vand.u32 %v1235, 4294901760
        %v1542 = vsub.f32 %v1235, %v1541
        %v1543 = vand.u32 %v1542, 4294901760
        %1544 = vmatmul.mubr.f32.gmra.mxu0 %v1543
        %v1545 = vpop.f32.mrf.mxu0
        %v1546 = vadd.f32 %v1470, %v1545
        %v1547 = vpop.f32.mrf.mxu0
        %v1548 = vadd.f32 %v1472, %v1547
        %1549 = vdwg.mxu0
        %1550 = vmatprep.subr.mxu0 0.0
        %1551 = vmatpush1.msra.mxu0 0.0
        %1552 = vmatprep.subr.mxu0 0.0
        %1553 = vmatpush1.msra.mxu0 0.0
        %1554 = vmatprep.subr.mxu0 0.0
        %1555 = vmatpush1.msra.mxu0 0.0
        %1556 = vmatprep.subr.mxu0 0.0
        %1557 = vmatpush1.msra.mxu0 0.0
        %1558 = vmatprep.subr.mxu0 0.0
        %1559 = vmatpush1.msra.mxu0 0.0
        %1560 = vmatprep.subr.mxu0 0.0
        %1561 = vmatpush1.msra.mxu0 0.0
        %1562 = vmatprep.subr.mxu0 0.0
        %1563 = vmatpush1.msra.mxu0 0.0
        %1564 = vmatprep.subr.mxu0 0.0
        %1565 = vmatpush1.msra.mxu0 0.0
        %1566 = vmatprep.subr.mxu0 0.0
        %1567 = vmatpush1.msra.mxu0 0.0
        %1568 = vmatprep.subr.mxu0 0.0
        %1569 = vmatpush1.msra.mxu0 0.0
        %1570 = vmatprep.subr.mxu0 0.0
        %1571 = vmatpush1.msra.mxu0 0.0
        %1572 = vmatprep.subr.mxu0 0.0
        %1573 = vmatpush1.msra.mxu0 0.0
        %1574 = vmatprep.subr.mxu0 0.0
        %1575 = vmatpush1.msra.mxu0 0.0
        %1576 = vmatprep.subr.mxu0 0.0
        %1577 = vmatpush1.msra.mxu0 0.0
        %1578 = vmatprep.subr.mxu0 0.0
        %1579 = vmatpush1.msra.mxu0 0.0
        %v1580 = vand.u32 %v750, 4294901760
        %v1581 = vsub.f32 %v750, %v1580
        %v1582 = vand.u32 %v1581, 4294901760
        %1583 = vmatprep.subr.mxu0 %v1582
        %v1584 = vand.u32 %v749, 4294901760
        %v1585 = vsub.f32 %v749, %v1584
        %v1586 = vand.u32 %v1585, 4294901760
        %1587 = vmatpush1.msra.mxu0 %v1586
        %1588 = vmatprep.subr.mxu0 0.0
        %1589 = vmatpush2.msra.mxu0 0.0
        %1590 = vmatprep.subr.mxu0 0.0
        %1591 = vmatpush2.msra.mxu0 0.0
        %1592 = vmatprep.subr.mxu0 0.0
        %1593 = vmatpush2.msra.mxu0 0.0
        %1594 = vmatprep.subr.mxu0 0.0
        %1595 = vmatpush2.msra.mxu0 0.0
        %1596 = vmatprep.subr.mxu0 0.0
        %1597 = vmatpush2.msra.mxu0 0.0
        %1598 = vmatprep.subr.mxu0 0.0
        %1599 = vmatpush2.msra.mxu0 0.0
        %1600 = vmatprep.subr.mxu0 0.0
        %1601 = vmatpush2.msra.mxu0 0.0
        %1602 = vmatprep.subr.mxu0 0.0
        %1603 = vmatpush2.msra.mxu0 0.0
        %1604 = vmatprep.subr.mxu0 0.0
        %1605 = vmatpush2.msra.mxu0 0.0
        %1606 = vmatprep.subr.mxu0 0.0
        %1607 = vmatpush2.msra.mxu0 0.0
        %1608 = vmatprep.subr.mxu0 0.0
        %1609 = vmatpush2.msra.mxu0 0.0
        %1610 = vmatprep.subr.mxu0 0.0
        %1611 = vmatpush2.msra.mxu0 0.0
        %1612 = vmatprep.subr.mxu0 0.0
        %1613 = vmatpush2.msra.mxu0 0.0
        %1614 = vmatprep.subr.mxu0 0.0
        %1615 = vmatpush2.msra.mxu0 0.0
        %1616 = vmatprep.subr.mxu0 0.0
        %1617 = vmatpush2.msra.mxu0 0.0
        %1618 = vmatprep.subr.mxu0 0.0
        %1619 = vmatpush2.msra.mxu0 0.0
        %1620 = vmatprep.mubr.f32.mxu0 0.0
        %v1621 = vand.u32 %v1235, 4294901760
        %1622 = vmatmul.mubr.f32.gmra.mxu0 %v1621
        %v1623 = vpop.f32.mrf.mxu0
        %v1624 = vadd.f32 %v1546, %v1623
        %v1625 = vpop.f32.mrf.mxu0
        %v1626 = vadd.f32 %v1548, %v1625
        %1627 = vdwg.mxu0
        %1628 = vmatprep.subr.mxu0 0.0
        %1629 = vmatpush1.msra.mxu0 0.0
        %1630 = vmatprep.subr.mxu0 0.0
        %1631 = vmatpush1.msra.mxu0 0.0
        %1632 = vmatprep.subr.mxu0 0.0
        %1633 = vmatpush1.msra.mxu0 0.0
        %1634 = vmatprep.subr.mxu0 0.0
        %1635 = vmatpush1.msra.mxu0 0.0
        %1636 = vmatprep.subr.mxu0 0.0
        %1637 = vmatpush1.msra.mxu0 0.0
        %1638 = vmatprep.subr.mxu0 0.0
        %1639 = vmatpush1.msra.mxu0 0.0
        %1640 = vmatprep.subr.mxu0 0.0
        %1641 = vmatpush1.msra.mxu0 0.0
        %1642 = vmatprep.subr.mxu0 0.0
        %1643 = vmatpush1.msra.mxu0 0.0
        %1644 = vmatprep.subr.mxu0 0.0
        %1645 = vmatpush1.msra.mxu0 0.0
        %1646 = vmatprep.subr.mxu0 0.0
        %1647 = vmatpush1.msra.mxu0 0.0
        %1648 = vmatprep.subr.mxu0 0.0
        %1649 = vmatpush1.msra.mxu0 0.0
        %1650 = vmatprep.subr.mxu0 0.0
        %1651 = vmatpush1.msra.mxu0 0.0
        %1652 = vmatprep.subr.mxu0 0.0
        %1653 = vmatpush1.msra.mxu0 0.0
        %1654 = vmatprep.subr.mxu0 0.0
        %1655 = vmatpush1.msra.mxu0 0.0
        %1656 = vmatprep.subr.mxu0 0.0
        %1657 = vmatpush1.msra.mxu0 0.0
        %v1658 = vand.u32 %v750, 4294901760
        %1659 = vmatprep.subr.mxu0 %v1658
        %v1660 = vand.u32 %v749, 4294901760
        %1661 = vmatpush1.msra.mxu0 %v1660
        %1662 = vmatprep.subr.mxu0 0.0
        %1663 = vmatpush2.msra.mxu0 0.0
        %1664 = vmatprep.subr.mxu0 0.0
        %1665 = vmatpush2.msra.mxu0 0.0
        %1666 = vmatprep.subr.mxu0 0.0
        %1667 = vmatpush2.msra.mxu0 0.0
        %1668 = vmatprep.subr.mxu0 0.0
        %1669 = vmatpush2.msra.mxu0 0.0
        %1670 = vmatprep.subr.mxu0 0.0
        %1671 = vmatpush2.msra.mxu0 0.0
        %1672 = vmatprep.subr.mxu0 0.0
        %1673 = vmatpush2.msra.mxu0 0.0
        %1674 = vmatprep.subr.mxu0 0.0
        %1675 = vmatpush2.msra.mxu0 0.0
        %1676 = vmatprep.subr.mxu0 0.0
        %1677 = vmatpush2.msra.mxu0 0.0
        %1678 = vmatprep.subr.mxu0 0.0
        %1679 = vmatpush2.msra.mxu0 0.0
        %1680 = vmatprep.subr.mxu0 0.0
        %1681 = vmatpush2.msra.mxu0 0.0
        %1682 = vmatprep.subr.mxu0 0.0
        %1683 = vmatpush2.msra.mxu0 0.0
        %1684 = vmatprep.subr.mxu0 0.0
        %1685 = vmatpush2.msra.mxu0 0.0
        %1686 = vmatprep.subr.mxu0 0.0
        %1687 = vmatpush2.msra.mxu0 0.0
        %1688 = vmatprep.subr.mxu0 0.0
        %1689 = vmatpush2.msra.mxu0 0.0
        %1690 = vmatprep.subr.mxu0 0.0
        %1691 = vmatpush2.msra.mxu0 0.0
        %1692 = vmatprep.subr.mxu0 0.0
        %1693 = vmatpush2.msra.mxu0 0.0
        %1694 = vmatprep.mubr.f32.mxu0 0.0
        %v1695 = vand.u32 %v1235, 4294901760
        %1696 = vmatmul.mubr.f32.gmra.mxu0 %v1695
        %v1697 = vpop.f32.mrf.mxu0
        %v1698 = vadd.f32 %v1624, %v1697
        %v1699 = vpop.f32.mrf.mxu0
        %v1700 = vadd.f32 %v1626, %v1699
        %1701 = vdwg.mxu0
        %s1702 = scalar_lea.vmem %s3, 8
        %v1703 = vld [vmem:[%s1702] sm:$0xf]
        %v1705 = vsel %vm765, %v1703, 0
        %1707 = vmatprep.subr.mxu0 0.0
        %1708 = vmatpush1.msra.mxu0 0.0
        %1709 = vmatprep.subr.mxu0 0.0
        %1710 = vmatpush1.msra.mxu0 0.0
        %1711 = vmatprep.subr.mxu0 0.0
        %1712 = vmatpush1.msra.mxu0 0.0
        %1713 = vmatprep.subr.mxu0 0.0
        %1714 = vmatpush1.msra.mxu0 0.0
        %1715 = vmatprep.subr.mxu0 0.0
        %1716 = vmatpush1.msra.mxu0 0.0
        %1717 = vmatprep.subr.mxu0 0.0
        %1718 = vmatpush1.msra.mxu0 0.0
        %1719 = vmatprep.subr.mxu0 0.0
        %1720 = vmatpush1.msra.mxu0 0.0
        %1721 = vmatprep.subr.mxu0 0.0
        %1722 = vmatpush1.msra.mxu0 0.0
        %1723 = vmatprep.subr.mxu0 0.0
        %1724 = vmatpush1.msra.mxu0 0.0
        %1725 = vmatprep.subr.mxu0 0.0
        %1726 = vmatpush1.msra.mxu0 0.0
        %1727 = vmatprep.subr.mxu0 0.0
        %1728 = vmatpush1.msra.mxu0 0.0
        %1729 = vmatprep.subr.mxu0 0.0
        %1730 = vmatpush1.msra.mxu0 0.0
        %1731 = vmatprep.subr.mxu0 0.0
        %1732 = vmatpush1.msra.mxu0 0.0
        %1733 = vmatprep.subr.mxu0 0.0
        %1734 = vmatpush1.msra.mxu0 0.0
        %1735 = vmatprep.subr.mxu0 0.0
        %1736 = vmatpush1.msra.mxu0 0.0
        %v1737 = vand.u32 %v734, 4294901760
        %1738 = vmatprep.subr.mxu0 %v1737
        %v1739 = vand.u32 %v733, 4294901760
        %1740 = vmatpush1.msra.mxu0 %v1739
        %1741 = vmatprep.subr.mxu0 0.0
        %1742 = vmatpush2.msra.mxu0 0.0
        %1743 = vmatprep.subr.mxu0 0.0
        %1744 = vmatpush2.msra.mxu0 0.0
        %1745 = vmatprep.subr.mxu0 0.0
        %1746 = vmatpush2.msra.mxu0 0.0
        %1747 = vmatprep.subr.mxu0 0.0
        %1748 = vmatpush2.msra.mxu0 0.0
        %1749 = vmatprep.subr.mxu0 0.0
        %1750 = vmatpush2.msra.mxu0 0.0
        %1751 = vmatprep.subr.mxu0 0.0
        %1752 = vmatpush2.msra.mxu0 0.0
        %1753 = vmatprep.subr.mxu0 0.0
        %1754 = vmatpush2.msra.mxu0 0.0
        %1755 = vmatprep.subr.mxu0 0.0
        %1756 = vmatpush2.msra.mxu0 0.0
        %1757 = vmatprep.subr.mxu0 0.0
        %1758 = vmatpush2.msra.mxu0 0.0
        %1759 = vmatprep.subr.mxu0 0.0
        %1760 = vmatpush2.msra.mxu0 0.0
        %1761 = vmatprep.subr.mxu0 0.0
        %1762 = vmatpush2.msra.mxu0 0.0
        %1763 = vmatprep.subr.mxu0 0.0
        %1764 = vmatpush2.msra.mxu0 0.0
        %1765 = vmatprep.subr.mxu0 0.0
        %1766 = vmatpush2.msra.mxu0 0.0
        %1767 = vmatprep.subr.mxu0 0.0
        %1768 = vmatpush2.msra.mxu0 0.0
        %1769 = vmatprep.subr.mxu0 0.0
        %1770 = vmatpush2.msra.mxu0 0.0
        %1771 = vmatprep.subr.mxu0 0.0
        %1772 = vmatpush2.msra.mxu0 0.0
        %1773 = vmatprep.mubr.f32.mxu0 0.0
        %v1774 = vand.u32 %v1705, 4294901760
        %v1775 = vsub.f32 %v1705, %v1774
        %v1776 = vand.u32 %v1775, 4294901760
        %v1777 = vsub.f32 %v1775, %v1776
        %v1778 = vand.u32 %v1777, 4294901760
        %1779 = vmatmul.mubr.f32.gmra.mxu0 %v1778
        %v1780 = vpop.f32.mrf.mxu0
        %v1781 = vadd.f32 0.0, %v1780
        %v1782 = vpop.f32.mrf.mxu0
        %v1783 = vadd.f32 0.0, %v1782
        %1784 = vdwg.mxu0
        %1785 = vmatprep.subr.mxu0 0.0
        %1786 = vmatpush1.msra.mxu0 0.0
        %1787 = vmatprep.subr.mxu0 0.0
        %1788 = vmatpush1.msra.mxu0 0.0
        %1789 = vmatprep.subr.mxu0 0.0
        %1790 = vmatpush1.msra.mxu0 0.0
        %1791 = vmatprep.subr.mxu0 0.0
        %1792 = vmatpush1.msra.mxu0 0.0
        %1793 = vmatprep.subr.mxu0 0.0
        %1794 = vmatpush1.msra.mxu0 0.0
        %1795 = vmatprep.subr.mxu0 0.0
        %1796 = vmatpush1.msra.mxu0 0.0
        %1797 = vmatprep.subr.mxu0 0.0
        %1798 = vmatpush1.msra.mxu0 0.0
        %1799 = vmatprep.subr.mxu0 0.0
        %1800 = vmatpush1.msra.mxu0 0.0
        %1801 = vmatprep.subr.mxu0 0.0
        %1802 = vmatpush1.msra.mxu0 0.0
        %1803 = vmatprep.subr.mxu0 0.0
        %1804 = vmatpush1.msra.mxu0 0.0
        %1805 = vmatprep.subr.mxu0 0.0
        %1806 = vmatpush1.msra.mxu0 0.0
        %1807 = vmatprep.subr.mxu0 0.0
        %1808 = vmatpush1.msra.mxu0 0.0
        %1809 = vmatprep.subr.mxu0 0.0
        %1810 = vmatpush1.msra.mxu0 0.0
        %1811 = vmatprep.subr.mxu0 0.0
        %1812 = vmatpush1.msra.mxu0 0.0
        %1813 = vmatprep.subr.mxu0 0.0
        %1814 = vmatpush1.msra.mxu0 0.0
        %v1815 = vand.u32 %v734, 4294901760
        %v1816 = vsub.f32 %v734, %v1815
        %v1817 = vand.u32 %v1816, 4294901760
        %v1818 = vsub.f32 %v1816, %v1817
        %v1819 = vand.u32 %v1818, 4294901760
        %1820 = vmatprep.subr.mxu0 %v1819
        %v1821 = vand.u32 %v733, 4294901760
        %v1822 = vsub.f32 %v733, %v1821
        %v1823 = vand.u32 %v1822, 4294901760
        %v1824 = vsub.f32 %v1822, %v1823
        %v1825 = vand.u32 %v1824, 4294901760
        %1826 = vmatpush1.msra.mxu0 %v1825
        %1827 = vmatprep.subr.mxu0 0.0
        %1828 = vmatpush2.msra.mxu0 0.0
        %1829 = vmatprep.subr.mxu0 0.0
        %1830 = vmatpush2.msra.mxu0 0.0
        %1831 = vmatprep.subr.mxu0 0.0
        %1832 = vmatpush2.msra.mxu0 0.0
        %1833 = vmatprep.subr.mxu0 0.0
        %1834 = vmatpush2.msra.mxu0 0.0
        %1835 = vmatprep.subr.mxu0 0.0
        %1836 = vmatpush2.msra.mxu0 0.0
        %1837 = vmatprep.subr.mxu0 0.0
        %1838 = vmatpush2.msra.mxu0 0.0
        %1839 = vmatprep.subr.mxu0 0.0
        %1840 = vmatpush2.msra.mxu0 0.0
        %1841 = vmatprep.subr.mxu0 0.0
        %1842 = vmatpush2.msra.mxu0 0.0
        %1843 = vmatprep.subr.mxu0 0.0
        %1844 = vmatpush2.msra.mxu0 0.0
        %1845 = vmatprep.subr.mxu0 0.0
        %1846 = vmatpush2.msra.mxu0 0.0
        %1847 = vmatprep.subr.mxu0 0.0
        %1848 = vmatpush2.msra.mxu0 0.0
        %1849 = vmatprep.subr.mxu0 0.0
        %1850 = vmatpush2.msra.mxu0 0.0
        %1851 = vmatprep.subr.mxu0 0.0
        %1852 = vmatpush2.msra.mxu0 0.0
        %1853 = vmatprep.subr.mxu0 0.0
        %1854 = vmatpush2.msra.mxu0 0.0
        %1855 = vmatprep.subr.mxu0 0.0
        %1856 = vmatpush2.msra.mxu0 0.0
        %1857 = vmatprep.subr.mxu0 0.0
        %1858 = vmatpush2.msra.mxu0 0.0
        %1859 = vmatprep.mubr.f32.mxu0 0.0
        %v1860 = vand.u32 %v1705, 4294901760
        %1861 = vmatmul.mubr.f32.gmra.mxu0 %v1860
        %v1862 = vpop.f32.mrf.mxu0
        %v1863 = vadd.f32 %v1781, %v1862
        %v1864 = vpop.f32.mrf.mxu0
        %v1865 = vadd.f32 %v1783, %v1864
        %1866 = vdwg.mxu0
        %1867 = vmatprep.subr.mxu0 0.0
        %1868 = vmatpush1.msra.mxu0 0.0
        %1869 = vmatprep.subr.mxu0 0.0
        %1870 = vmatpush1.msra.mxu0 0.0
        %1871 = vmatprep.subr.mxu0 0.0
        %1872 = vmatpush1.msra.mxu0 0.0
        %1873 = vmatprep.subr.mxu0 0.0
        %1874 = vmatpush1.msra.mxu0 0.0
        %1875 = vmatprep.subr.mxu0 0.0
        %1876 = vmatpush1.msra.mxu0 0.0
        %1877 = vmatprep.subr.mxu0 0.0
        %1878 = vmatpush1.msra.mxu0 0.0
        %1879 = vmatprep.subr.mxu0 0.0
        %1880 = vmatpush1.msra.mxu0 0.0
        %1881 = vmatprep.subr.mxu0 0.0
        %1882 = vmatpush1.msra.mxu0 0.0
        %1883 = vmatprep.subr.mxu0 0.0
        %1884 = vmatpush1.msra.mxu0 0.0
        %1885 = vmatprep.subr.mxu0 0.0
        %1886 = vmatpush1.msra.mxu0 0.0
        %1887 = vmatprep.subr.mxu0 0.0
        %1888 = vmatpush1.msra.mxu0 0.0
        %1889 = vmatprep.subr.mxu0 0.0
        %1890 = vmatpush1.msra.mxu0 0.0
        %1891 = vmatprep.subr.mxu0 0.0
        %1892 = vmatpush1.msra.mxu0 0.0
        %1893 = vmatprep.subr.mxu0 0.0
        %1894 = vmatpush1.msra.mxu0 0.0
        %1895 = vmatprep.subr.mxu0 0.0
        %1896 = vmatpush1.msra.mxu0 0.0
        %v1897 = vand.u32 %v734, 4294901760
        %v1898 = vsub.f32 %v734, %v1897
        %1899 = vmatprep.subr.mxu0 %v1898
        %v1900 = vand.u32 %v733, 4294901760
        %v1901 = vsub.f32 %v733, %v1900
        %1902 = vmatpush1.msra.mxu0 %v1901
        %1903 = vmatprep.subr.mxu0 0.0
        %1904 = vmatpush2.msra.mxu0 0.0
        %1905 = vmatprep.subr.mxu0 0.0
        %1906 = vmatpush2.msra.mxu0 0.0
        %1907 = vmatprep.subr.mxu0 0.0
        %1908 = vmatpush2.msra.mxu0 0.0
        %1909 = vmatprep.subr.mxu0 0.0
        %1910 = vmatpush2.msra.mxu0 0.0
        %1911 = vmatprep.subr.mxu0 0.0
        %1912 = vmatpush2.msra.mxu0 0.0
        %1913 = vmatprep.subr.mxu0 0.0
        %1914 = vmatpush2.msra.mxu0 0.0
        %1915 = vmatprep.subr.mxu0 0.0
        %1916 = vmatpush2.msra.mxu0 0.0
        %1917 = vmatprep.subr.mxu0 0.0
        %1918 = vmatpush2.msra.mxu0 0.0
        %1919 = vmatprep.subr.mxu0 0.0
        %1920 = vmatpush2.msra.mxu0 0.0
        %1921 = vmatprep.subr.mxu0 0.0
        %1922 = vmatpush2.msra.mxu0 0.0
        %1923 = vmatprep.subr.mxu0 0.0
        %1924 = vmatpush2.msra.mxu0 0.0
        %1925 = vmatprep.subr.mxu0 0.0
        %1926 = vmatpush2.msra.mxu0 0.0
        %1927 = vmatprep.subr.mxu0 0.0
        %1928 = vmatpush2.msra.mxu0 0.0
        %1929 = vmatprep.subr.mxu0 0.0
        %1930 = vmatpush2.msra.mxu0 0.0
        %1931 = vmatprep.subr.mxu0 0.0
        %1932 = vmatpush2.msra.mxu0 0.0
        %1933 = vmatprep.subr.mxu0 0.0
        %1934 = vmatpush2.msra.mxu0 0.0
        %1935 = vmatprep.mubr.f32.mxu0 0.0
        %v1936 = vand.u32 %v1705, 4294901760
        %v1937 = vsub.f32 %v1705, %v1936
        %1938 = vmatmul.mubr.f32.gmra.mxu0 %v1937
        %v1939 = vpop.f32.mrf.mxu0
        %v1940 = vadd.f32 %v1863, %v1939
        %v1941 = vpop.f32.mrf.mxu0
        %v1942 = vadd.f32 %v1865, %v1941
        %1943 = vdwg.mxu0
        %1944 = vmatprep.subr.mxu0 0.0
        %1945 = vmatpush1.msra.mxu0 0.0
        %1946 = vmatprep.subr.mxu0 0.0
        %1947 = vmatpush1.msra.mxu0 0.0
        %1948 = vmatprep.subr.mxu0 0.0
        %1949 = vmatpush1.msra.mxu0 0.0
        %1950 = vmatprep.subr.mxu0 0.0
        %1951 = vmatpush1.msra.mxu0 0.0
        %1952 = vmatprep.subr.mxu0 0.0
        %1953 = vmatpush1.msra.mxu0 0.0
        %1954 = vmatprep.subr.mxu0 0.0
        %1955 = vmatpush1.msra.mxu0 0.0
        %1956 = vmatprep.subr.mxu0 0.0
        %1957 = vmatpush1.msra.mxu0 0.0
        %1958 = vmatprep.subr.mxu0 0.0
        %1959 = vmatpush1.msra.mxu0 0.0
        %1960 = vmatprep.subr.mxu0 0.0
        %1961 = vmatpush1.msra.mxu0 0.0
        %1962 = vmatprep.subr.mxu0 0.0
        %1963 = vmatpush1.msra.mxu0 0.0
        %1964 = vmatprep.subr.mxu0 0.0
        %1965 = vmatpush1.msra.mxu0 0.0
        %1966 = vmatprep.subr.mxu0 0.0
        %1967 = vmatpush1.msra.mxu0 0.0
        %1968 = vmatprep.subr.mxu0 0.0
        %1969 = vmatpush1.msra.mxu0 0.0
        %1970 = vmatprep.subr.mxu0 0.0
        %1971 = vmatpush1.msra.mxu0 0.0
        %1972 = vmatprep.subr.mxu0 0.0
        %1973 = vmatpush1.msra.mxu0 0.0
        %v1974 = vand.u32 %v734, 4294901760
        %1975 = vmatprep.subr.mxu0 %v1974
        %v1976 = vand.u32 %v733, 4294901760
        %1977 = vmatpush1.msra.mxu0 %v1976
        %1978 = vmatprep.subr.mxu0 0.0
        %1979 = vmatpush2.msra.mxu0 0.0
        %1980 = vmatprep.subr.mxu0 0.0
        %1981 = vmatpush2.msra.mxu0 0.0
        %1982 = vmatprep.subr.mxu0 0.0
        %1983 = vmatpush2.msra.mxu0 0.0
        %1984 = vmatprep.subr.mxu0 0.0
        %1985 = vmatpush2.msra.mxu0 0.0
        %1986 = vmatprep.subr.mxu0 0.0
        %1987 = vmatpush2.msra.mxu0 0.0
        %1988 = vmatprep.subr.mxu0 0.0
        %1989 = vmatpush2.msra.mxu0 0.0
        %1990 = vmatprep.subr.mxu0 0.0
        %1991 = vmatpush2.msra.mxu0 0.0
        %1992 = vmatprep.subr.mxu0 0.0
        %1993 = vmatpush2.msra.mxu0 0.0
        %1994 = vmatprep.subr.mxu0 0.0
        %1995 = vmatpush2.msra.mxu0 0.0
        %1996 = vmatprep.subr.mxu0 0.0
        %1997 = vmatpush2.msra.mxu0 0.0
        %1998 = vmatprep.subr.mxu0 0.0
        %1999 = vmatpush2.msra.mxu0 0.0
        %2000 = vmatprep.subr.mxu0 0.0
        %2001 = vmatpush2.msra.mxu0 0.0
        %2002 = vmatprep.subr.mxu0 0.0
        %2003 = vmatpush2.msra.mxu0 0.0
        %2004 = vmatprep.subr.mxu0 0.0
        %2005 = vmatpush2.msra.mxu0 0.0
        %2006 = vmatprep.subr.mxu0 0.0
        %2007 = vmatpush2.msra.mxu0 0.0
        %2008 = vmatprep.subr.mxu0 0.0
        %2009 = vmatpush2.msra.mxu0 0.0
        %2010 = vmatprep.mubr.f32.mxu0 0.0
        %v2011 = vand.u32 %v1705, 4294901760
        %v2012 = vsub.f32 %v1705, %v2011
        %v2013 = vand.u32 %v2012, 4294901760
        %2014 = vmatmul.mubr.f32.gmra.mxu0 %v2013
        %v2015 = vpop.f32.mrf.mxu0
        %v2016 = vadd.f32 %v1940, %v2015
        %v2017 = vpop.f32.mrf.mxu0
        %v2018 = vadd.f32 %v1942, %v2017
        %2019 = vdwg.mxu0
        %2020 = vmatprep.subr.mxu0 0.0
        %2021 = vmatpush1.msra.mxu0 0.0
        %2022 = vmatprep.subr.mxu0 0.0
        %2023 = vmatpush1.msra.mxu0 0.0
        %2024 = vmatprep.subr.mxu0 0.0
        %2025 = vmatpush1.msra.mxu0 0.0
        %2026 = vmatprep.subr.mxu0 0.0
        %2027 = vmatpush1.msra.mxu0 0.0
        %2028 = vmatprep.subr.mxu0 0.0
        %2029 = vmatpush1.msra.mxu0 0.0
        %2030 = vmatprep.subr.mxu0 0.0
        %2031 = vmatpush1.msra.mxu0 0.0
        %2032 = vmatprep.subr.mxu0 0.0
        %2033 = vmatpush1.msra.mxu0 0.0
        %2034 = vmatprep.subr.mxu0 0.0
        %2035 = vmatpush1.msra.mxu0 0.0
        %2036 = vmatprep.subr.mxu0 0.0
        %2037 = vmatpush1.msra.mxu0 0.0
        %2038 = vmatprep.subr.mxu0 0.0
        %2039 = vmatpush1.msra.mxu0 0.0
        %2040 = vmatprep.subr.mxu0 0.0
        %2041 = vmatpush1.msra.mxu0 0.0
        %2042 = vmatprep.subr.mxu0 0.0
        %2043 = vmatpush1.msra.mxu0 0.0
        %2044 = vmatprep.subr.mxu0 0.0
        %2045 = vmatpush1.msra.mxu0 0.0
        %2046 = vmatprep.subr.mxu0 0.0
        %2047 = vmatpush1.msra.mxu0 0.0
        %2048 = vmatprep.subr.mxu0 0.0
        %2049 = vmatpush1.msra.mxu0 0.0
        %v2050 = vand.u32 %v734, 4294901760
        %v2051 = vsub.f32 %v734, %v2050
        %v2052 = vand.u32 %v2051, 4294901760
        %2053 = vmatprep.subr.mxu0 %v2052
        %v2054 = vand.u32 %v733, 4294901760
        %v2055 = vsub.f32 %v733, %v2054
        %v2056 = vand.u32 %v2055, 4294901760
        %2057 = vmatpush1.msra.mxu0 %v2056
        %2058 = vmatprep.subr.mxu0 0.0
        %2059 = vmatpush2.msra.mxu0 0.0
        %2060 = vmatprep.subr.mxu0 0.0
        %2061 = vmatpush2.msra.mxu0 0.0
        %2062 = vmatprep.subr.mxu0 0.0
        %2063 = vmatpush2.msra.mxu0 0.0
        %2064 = vmatprep.subr.mxu0 0.0
        %2065 = vmatpush2.msra.mxu0 0.0
        %2066 = vmatprep.subr.mxu0 0.0
        %2067 = vmatpush2.msra.mxu0 0.0
        %2068 = vmatprep.subr.mxu0 0.0
        %2069 = vmatpush2.msra.mxu0 0.0
        %2070 = vmatprep.subr.mxu0 0.0
        %2071 = vmatpush2.msra.mxu0 0.0
        %2072 = vmatprep.subr.mxu0 0.0
        %2073 = vmatpush2.msra.mxu0 0.0
        %2074 = vmatprep.subr.mxu0 0.0
        %2075 = vmatpush2.msra.mxu0 0.0
        %2076 = vmatprep.subr.mxu0 0.0
        %2077 = vmatpush2.msra.mxu0 0.0
        %2078 = vmatprep.subr.mxu0 0.0
        %2079 = vmatpush2.msra.mxu0 0.0
        %2080 = vmatprep.subr.mxu0 0.0
        %2081 = vmatpush2.msra.mxu0 0.0
        %2082 = vmatprep.subr.mxu0 0.0
        %2083 = vmatpush2.msra.mxu0 0.0
        %2084 = vmatprep.subr.mxu0 0.0
        %2085 = vmatpush2.msra.mxu0 0.0
        %2086 = vmatprep.subr.mxu0 0.0
        %2087 = vmatpush2.msra.mxu0 0.0
        %2088 = vmatprep.subr.mxu0 0.0
        %2089 = vmatpush2.msra.mxu0 0.0
        %2090 = vmatprep.mubr.f32.mxu0 0.0
        %v2091 = vand.u32 %v1705, 4294901760
        %2092 = vmatmul.mubr.f32.gmra.mxu0 %v2091
        %v2093 = vpop.f32.mrf.mxu0
        %v2094 = vadd.f32 %v2016, %v2093
        %v2095 = vpop.f32.mrf.mxu0
        %v2096 = vadd.f32 %v2018, %v2095
        %2097 = vdwg.mxu0
        %2098 = vmatprep.subr.mxu0 0.0
        %2099 = vmatpush1.msra.mxu0 0.0
        %2100 = vmatprep.subr.mxu0 0.0
        %2101 = vmatpush1.msra.mxu0 0.0
        %2102 = vmatprep.subr.mxu0 0.0
        %2103 = vmatpush1.msra.mxu0 0.0
        %2104 = vmatprep.subr.mxu0 0.0
        %2105 = vmatpush1.msra.mxu0 0.0
        %2106 = vmatprep.subr.mxu0 0.0
        %2107 = vmatpush1.msra.mxu0 0.0
        %2108 = vmatprep.subr.mxu0 0.0
        %2109 = vmatpush1.msra.mxu0 0.0
        %2110 = vmatprep.subr.mxu0 0.0
        %2111 = vmatpush1.msra.mxu0 0.0
        %2112 = vmatprep.subr.mxu0 0.0
        %2113 = vmatpush1.msra.mxu0 0.0
        %2114 = vmatprep.subr.mxu0 0.0
        %2115 = vmatpush1.msra.mxu0 0.0
        %2116 = vmatprep.subr.mxu0 0.0
        %2117 = vmatpush1.msra.mxu0 0.0
        %2118 = vmatprep.subr.mxu0 0.0
        %2119 = vmatpush1.msra.mxu0 0.0
        %2120 = vmatprep.subr.mxu0 0.0
        %2121 = vmatpush1.msra.mxu0 0.0
        %2122 = vmatprep.subr.mxu0 0.0
        %2123 = vmatpush1.msra.mxu0 0.0
        %2124 = vmatprep.subr.mxu0 0.0
        %2125 = vmatpush1.msra.mxu0 0.0
        %2126 = vmatprep.subr.mxu0 0.0
        %2127 = vmatpush1.msra.mxu0 0.0
        %v2128 = vand.u32 %v734, 4294901760
        %2129 = vmatprep.subr.mxu0 %v2128
        %v2130 = vand.u32 %v733, 4294901760
        %2131 = vmatpush1.msra.mxu0 %v2130
        %2132 = vmatprep.subr.mxu0 0.0
        %2133 = vmatpush2.msra.mxu0 0.0
        %2134 = vmatprep.subr.mxu0 0.0
        %2135 = vmatpush2.msra.mxu0 0.0
        %2136 = vmatprep.subr.mxu0 0.0
        %2137 = vmatpush2.msra.mxu0 0.0
        %2138 = vmatprep.subr.mxu0 0.0
        %2139 = vmatpush2.msra.mxu0 0.0
        %2140 = vmatprep.subr.mxu0 0.0
        %2141 = vmatpush2.msra.mxu0 0.0
        %2142 = vmatprep.subr.mxu0 0.0
        %2143 = vmatpush2.msra.mxu0 0.0
        %2144 = vmatprep.subr.mxu0 0.0
        %2145 = vmatpush2.msra.mxu0 0.0
        %2146 = vmatprep.subr.mxu0 0.0
        %2147 = vmatpush2.msra.mxu0 0.0
        %2148 = vmatprep.subr.mxu0 0.0
        %2149 = vmatpush2.msra.mxu0 0.0
        %2150 = vmatprep.subr.mxu0 0.0
        %2151 = vmatpush2.msra.mxu0 0.0
        %2152 = vmatprep.subr.mxu0 0.0
        %2153 = vmatpush2.msra.mxu0 0.0
        %2154 = vmatprep.subr.mxu0 0.0
        %2155 = vmatpush2.msra.mxu0 0.0
        %2156 = vmatprep.subr.mxu0 0.0
        %2157 = vmatpush2.msra.mxu0 0.0
        %2158 = vmatprep.subr.mxu0 0.0
        %2159 = vmatpush2.msra.mxu0 0.0
        %2160 = vmatprep.subr.mxu0 0.0
        %2161 = vmatpush2.msra.mxu0 0.0
        %2162 = vmatprep.subr.mxu0 0.0
        %2163 = vmatpush2.msra.mxu0 0.0
        %2164 = vmatprep.mubr.f32.mxu0 0.0
        %v2165 = vand.u32 %v1705, 4294901760
        %2166 = vmatmul.mubr.f32.gmra.mxu0 %v2165
        %v2167 = vpop.f32.mrf.mxu0
        %v2168 = vadd.f32 %v2094, %v2167
        %v2169 = vpop.f32.mrf.mxu0
        %v2170 = vadd.f32 %v2096, %v2169
        %2171 = vdwg.mxu0
        %v2172 = vadd.f32 %v1698, %v2168
        %v2173 = vadd.f32 %v1700, %v2170
        %2174 = vrot.lane.b32.xlu0 %v733, 112
        %v2175 = vpop.permute.xlu0 %2174
        %2176 = vrot.lane.b32.xlu0 %v734, 112
        %v2177 = vpop.permute.xlu0 %2176
        %vm2178 = vcmp.lt.s32.totalorder %v736, 112
        %v2179 = vsel %vm2178, %v2175, %v2177
        %v2180 = vsel %vm2178, %v2177, %v2175
        %vm2181 = vcmp.lt.s32.totalorder %v738, 240
        %vm2182 = vcmp.lt.s32.totalorder %v739, 240
        %v2183 = vsel %vm2181, %v2179, 0.0
        %v2184 = vsel %vm2182, %v2180, 0.0
        %s2185 = scalar_lea.vmem %s3, 12
        %v2186 = vld [vmem:[%s2185] sm:$0xf]
        %v2188 = vsel %vm765, %v2186, 0
        %2190 = vmatprep.subr.mxu0 0.0
        %2191 = vmatpush1.msra.mxu0 0.0
        %2192 = vmatprep.subr.mxu0 0.0
        %2193 = vmatpush1.msra.mxu0 0.0
        %2194 = vmatprep.subr.mxu0 0.0
        %2195 = vmatpush1.msra.mxu0 0.0
        %2196 = vmatprep.subr.mxu0 0.0
        %2197 = vmatpush1.msra.mxu0 0.0
        %2198 = vmatprep.subr.mxu0 0.0
        %2199 = vmatpush1.msra.mxu0 0.0
        %2200 = vmatprep.subr.mxu0 0.0
        %2201 = vmatpush1.msra.mxu0 0.0
        %2202 = vmatprep.subr.mxu0 0.0
        %2203 = vmatpush1.msra.mxu0 0.0
        %2204 = vmatprep.subr.mxu0 0.0
        %2205 = vmatpush1.msra.mxu0 0.0
        %2206 = vmatprep.subr.mxu0 0.0
        %2207 = vmatpush1.msra.mxu0 0.0
        %2208 = vmatprep.subr.mxu0 0.0
        %2209 = vmatpush1.msra.mxu0 0.0
        %2210 = vmatprep.subr.mxu0 0.0
        %2211 = vmatpush1.msra.mxu0 0.0
        %2212 = vmatprep.subr.mxu0 0.0
        %2213 = vmatpush1.msra.mxu0 0.0
        %2214 = vmatprep.subr.mxu0 0.0
        %2215 = vmatpush1.msra.mxu0 0.0
        %2216 = vmatprep.subr.mxu0 0.0
        %2217 = vmatpush1.msra.mxu0 0.0
        %2218 = vmatprep.subr.mxu0 0.0
        %2219 = vmatpush1.msra.mxu0 0.0
        %v2220 = vand.u32 %v2184, 4294901760
        %2221 = vmatprep.subr.mxu0 %v2220
        %v2222 = vand.u32 %v2183, 4294901760
        %2223 = vmatpush1.msra.mxu0 %v2222
        %2224 = vmatprep.subr.mxu0 0.0
        %2225 = vmatpush2.msra.mxu0 0.0
        %2226 = vmatprep.subr.mxu0 0.0
        %2227 = vmatpush2.msra.mxu0 0.0
        %2228 = vmatprep.subr.mxu0 0.0
        %2229 = vmatpush2.msra.mxu0 0.0
        %2230 = vmatprep.subr.mxu0 0.0
        %2231 = vmatpush2.msra.mxu0 0.0
        %2232 = vmatprep.subr.mxu0 0.0
        %2233 = vmatpush2.msra.mxu0 0.0
        %2234 = vmatprep.subr.mxu0 0.0
        %2235 = vmatpush2.msra.mxu0 0.0
        %2236 = vmatprep.subr.mxu0 0.0
        %2237 = vmatpush2.msra.mxu0 0.0
        %2238 = vmatprep.subr.mxu0 0.0
        %2239 = vmatpush2.msra.mxu0 0.0
        %2240 = vmatprep.subr.mxu0 0.0
        %2241 = vmatpush2.msra.mxu0 0.0
        %2242 = vmatprep.subr.mxu0 0.0
        %2243 = vmatpush2.msra.mxu0 0.0
        %2244 = vmatprep.subr.mxu0 0.0
        %2245 = vmatpush2.msra.mxu0 0.0
        %2246 = vmatprep.subr.mxu0 0.0
        %2247 = vmatpush2.msra.mxu0 0.0
        %2248 = vmatprep.subr.mxu0 0.0
        %2249 = vmatpush2.msra.mxu0 0.0
        %2250 = vmatprep.subr.mxu0 0.0
        %2251 = vmatpush2.msra.mxu0 0.0
        %2252 = vmatprep.subr.mxu0 0.0
        %2253 = vmatpush2.msra.mxu0 0.0
        %2254 = vmatprep.subr.mxu0 0.0
        %2255 = vmatpush2.msra.mxu0 0.0
        %2256 = vmatprep.mubr.f32.mxu0 0.0
        %v2257 = vand.u32 %v2188, 4294901760
        %v2258 = vsub.f32 %v2188, %v2257
        %v2259 = vand.u32 %v2258, 4294901760
        %v2260 = vsub.f32 %v2258, %v2259
        %v2261 = vand.u32 %v2260, 4294901760
        %2262 = vmatmul.mubr.f32.gmra.mxu0 %v2261
        %v2263 = vpop.f32.mrf.mxu0
        %v2264 = vadd.f32 0.0, %v2263
        %v2265 = vpop.f32.mrf.mxu0
        %v2266 = vadd.f32 0.0, %v2265
        %2267 = vdwg.mxu0
        %2268 = vmatprep.subr.mxu0 0.0
        %2269 = vmatpush1.msra.mxu0 0.0
        %2270 = vmatprep.subr.mxu0 0.0
        %2271 = vmatpush1.msra.mxu0 0.0
        %2272 = vmatprep.subr.mxu0 0.0
        %2273 = vmatpush1.msra.mxu0 0.0
        %2274 = vmatprep.subr.mxu0 0.0
        %2275 = vmatpush1.msra.mxu0 0.0
        %2276 = vmatprep.subr.mxu0 0.0
        %2277 = vmatpush1.msra.mxu0 0.0
        %2278 = vmatprep.subr.mxu0 0.0
        %2279 = vmatpush1.msra.mxu0 0.0
        %2280 = vmatprep.subr.mxu0 0.0
        %2281 = vmatpush1.msra.mxu0 0.0
        %2282 = vmatprep.subr.mxu0 0.0
        %2283 = vmatpush1.msra.mxu0 0.0
        %2284 = vmatprep.subr.mxu0 0.0
        %2285 = vmatpush1.msra.mxu0 0.0
        %2286 = vmatprep.subr.mxu0 0.0
        %2287 = vmatpush1.msra.mxu0 0.0
        %2288 = vmatprep.subr.mxu0 0.0
        %2289 = vmatpush1.msra.mxu0 0.0
        %2290 = vmatprep.subr.mxu0 0.0
        %2291 = vmatpush1.msra.mxu0 0.0
        %2292 = vmatprep.subr.mxu0 0.0
        %2293 = vmatpush1.msra.mxu0 0.0
        %2294 = vmatprep.subr.mxu0 0.0
        %2295 = vmatpush1.msra.mxu0 0.0
        %2296 = vmatprep.subr.mxu0 0.0
        %2297 = vmatpush1.msra.mxu0 0.0
        %v2298 = vand.u32 %v2184, 4294901760
        %v2299 = vsub.f32 %v2184, %v2298
        %v2300 = vand.u32 %v2299, 4294901760
        %v2301 = vsub.f32 %v2299, %v2300
        %v2302 = vand.u32 %v2301, 4294901760
        %2303 = vmatprep.subr.mxu0 %v2302
        %v2304 = vand.u32 %v2183, 4294901760
        %v2305 = vsub.f32 %v2183, %v2304
        %v2306 = vand.u32 %v2305, 4294901760
        %v2307 = vsub.f32 %v2305, %v2306
        %v2308 = vand.u32 %v2307, 4294901760
        %2309 = vmatpush1.msra.mxu0 %v2308
        %2310 = vmatprep.subr.mxu0 0.0
        %2311 = vmatpush2.msra.mxu0 0.0
        %2312 = vmatprep.subr.mxu0 0.0
        %2313 = vmatpush2.msra.mxu0 0.0
        %2314 = vmatprep.subr.mxu0 0.0
        %2315 = vmatpush2.msra.mxu0 0.0
        %2316 = vmatprep.subr.mxu0 0.0
        %2317 = vmatpush2.msra.mxu0 0.0
        %2318 = vmatprep.subr.mxu0 0.0
        %2319 = vmatpush2.msra.mxu0 0.0
        %2320 = vmatprep.subr.mxu0 0.0
        %2321 = vmatpush2.msra.mxu0 0.0
        %2322 = vmatprep.subr.mxu0 0.0
        %2323 = vmatpush2.msra.mxu0 0.0
        %2324 = vmatprep.subr.mxu0 0.0
        %2325 = vmatpush2.msra.mxu0 0.0
        %2326 = vmatprep.subr.mxu0 0.0
        %2327 = vmatpush2.msra.mxu0 0.0
        %2328 = vmatprep.subr.mxu0 0.0
        %2329 = vmatpush2.msra.mxu0 0.0
        %2330 = vmatprep.subr.mxu0 0.0
        %2331 = vmatpush2.msra.mxu0 0.0
        %2332 = vmatprep.subr.mxu0 0.0
        %2333 = vmatpush2.msra.mxu0 0.0
        %2334 = vmatprep.subr.mxu0 0.0
        %2335 = vmatpush2.msra.mxu0 0.0
        %2336 = vmatprep.subr.mxu0 0.0
        %2337 = vmatpush2.msra.mxu0 0.0
        %2338 = vmatprep.subr.mxu0 0.0
        %2339 = vmatpush2.msra.mxu0 0.0
        %2340 = vmatprep.subr.mxu0 0.0
        %2341 = vmatpush2.msra.mxu0 0.0
        %2342 = vmatprep.mubr.f32.mxu0 0.0
        %v2343 = vand.u32 %v2188, 4294901760
        %2344 = vmatmul.mubr.f32.gmra.mxu0 %v2343
        %v2345 = vpop.f32.mrf.mxu0
        %v2346 = vadd.f32 %v2264, %v2345
        %v2347 = vpop.f32.mrf.mxu0
        %v2348 = vadd.f32 %v2266, %v2347
        %2349 = vdwg.mxu0
        %2350 = vmatprep.subr.mxu0 0.0
        %2351 = vmatpush1.msra.mxu0 0.0
        %2352 = vmatprep.subr.mxu0 0.0
        %2353 = vmatpush1.msra.mxu0 0.0
        %2354 = vmatprep.subr.mxu0 0.0
        %2355 = vmatpush1.msra.mxu0 0.0
        %2356 = vmatprep.subr.mxu0 0.0
        %2357 = vmatpush1.msra.mxu0 0.0
        %2358 = vmatprep.subr.mxu0 0.0
        %2359 = vmatpush1.msra.mxu0 0.0
        %2360 = vmatprep.subr.mxu0 0.0
        %2361 = vmatpush1.msra.mxu0 0.0
        %2362 = vmatprep.subr.mxu0 0.0
        %2363 = vmatpush1.msra.mxu0 0.0
        %2364 = vmatprep.subr.mxu0 0.0
        %2365 = vmatpush1.msra.mxu0 0.0
        %2366 = vmatprep.subr.mxu0 0.0
        %2367 = vmatpush1.msra.mxu0 0.0
        %2368 = vmatprep.subr.mxu0 0.0
        %2369 = vmatpush1.msra.mxu0 0.0
        %2370 = vmatprep.subr.mxu0 0.0
        %2371 = vmatpush1.msra.mxu0 0.0
        %2372 = vmatprep.subr.mxu0 0.0
        %2373 = vmatpush1.msra.mxu0 0.0
        %2374 = vmatprep.subr.mxu0 0.0
        %2375 = vmatpush1.msra.mxu0 0.0
        %2376 = vmatprep.subr.mxu0 0.0
        %2377 = vmatpush1.msra.mxu0 0.0
        %2378 = vmatprep.subr.mxu0 0.0
        %2379 = vmatpush1.msra.mxu0 0.0
        %v2380 = vand.u32 %v2184, 4294901760
        %v2381 = vsub.f32 %v2184, %v2380
        %2382 = vmatprep.subr.mxu0 %v2381
        %v2383 = vand.u32 %v2183, 4294901760
        %v2384 = vsub.f32 %v2183, %v2383
        %2385 = vmatpush1.msra.mxu0 %v2384
        %2386 = vmatprep.subr.mxu0 0.0
        %2387 = vmatpush2.msra.mxu0 0.0
        %2388 = vmatprep.subr.mxu0 0.0
        %2389 = vmatpush2.msra.mxu0 0.0
        %2390 = vmatprep.subr.mxu0 0.0
        %2391 = vmatpush2.msra.mxu0 0.0
        %2392 = vmatprep.subr.mxu0 0.0
        %2393 = vmatpush2.msra.mxu0 0.0
        %2394 = vmatprep.subr.mxu0 0.0
        %2395 = vmatpush2.msra.mxu0 0.0
        %2396 = vmatprep.subr.mxu0 0.0
        %2397 = vmatpush2.msra.mxu0 0.0
        %2398 = vmatprep.subr.mxu0 0.0
        %2399 = vmatpush2.msra.mxu0 0.0
        %2400 = vmatprep.subr.mxu0 0.0
        %2401 = vmatpush2.msra.mxu0 0.0
        %2402 = vmatprep.subr.mxu0 0.0
        %2403 = vmatpush2.msra.mxu0 0.0
        %2404 = vmatprep.subr.mxu0 0.0
        %2405 = vmatpush2.msra.mxu0 0.0
        %2406 = vmatprep.subr.mxu0 0.0
        %2407 = vmatpush2.msra.mxu0 0.0
        %2408 = vmatprep.subr.mxu0 0.0
        %2409 = vmatpush2.msra.mxu0 0.0
        %2410 = vmatprep.subr.mxu0 0.0
        %2411 = vmatpush2.msra.mxu0 0.0
        %2412 = vmatprep.subr.mxu0 0.0
        %2413 = vmatpush2.msra.mxu0 0.0
        %2414 = vmatprep.subr.mxu0 0.0
        %2415 = vmatpush2.msra.mxu0 0.0
        %2416 = vmatprep.subr.mxu0 0.0
        %2417 = vmatpush2.msra.mxu0 0.0
        %2418 = vmatprep.mubr.f32.mxu0 0.0
        %v2419 = vand.u32 %v2188, 4294901760
        %v2420 = vsub.f32 %v2188, %v2419
        %2421 = vmatmul.mubr.f32.gmra.mxu0 %v2420
        %v2422 = vpop.f32.mrf.mxu0
        %v2423 = vadd.f32 %v2346, %v2422
        %v2424 = vpop.f32.mrf.mxu0
        %v2425 = vadd.f32 %v2348, %v2424
        %2426 = vdwg.mxu0
        %2427 = vmatprep.subr.mxu0 0.0
        %2428 = vmatpush1.msra.mxu0 0.0
        %2429 = vmatprep.subr.mxu0 0.0
        %2430 = vmatpush1.msra.mxu0 0.0
        %2431 = vmatprep.subr.mxu0 0.0
        %2432 = vmatpush1.msra.mxu0 0.0
        %2433 = vmatprep.subr.mxu0 0.0
        %2434 = vmatpush1.msra.mxu0 0.0
        %2435 = vmatprep.subr.mxu0 0.0
        %2436 = vmatpush1.msra.mxu0 0.0
        %2437 = vmatprep.subr.mxu0 0.0
        %2438 = vmatpush1.msra.mxu0 0.0
        %2439 = vmatprep.subr.mxu0 0.0
        %2440 = vmatpush1.msra.mxu0 0.0
        %2441 = vmatprep.subr.mxu0 0.0
        %2442 = vmatpush1.msra.mxu0 0.0
        %2443 = vmatprep.subr.mxu0 0.0
        %2444 = vmatpush1.msra.mxu0 0.0
        %2445 = vmatprep.subr.mxu0 0.0
        %2446 = vmatpush1.msra.mxu0 0.0
        %2447 = vmatprep.subr.mxu0 0.0
        %2448 = vmatpush1.msra.mxu0 0.0
        %2449 = vmatprep.subr.mxu0 0.0
        %2450 = vmatpush1.msra.mxu0 0.0
        %2451 = vmatprep.subr.mxu0 0.0
        %2452 = vmatpush1.msra.mxu0 0.0
        %2453 = vmatprep.subr.mxu0 0.0
        %2454 = vmatpush1.msra.mxu0 0.0
        %2455 = vmatprep.subr.mxu0 0.0
        %2456 = vmatpush1.msra.mxu0 0.0
        %v2457 = vand.u32 %v2184, 4294901760
        %2458 = vmatprep.subr.mxu0 %v2457
        %v2459 = vand.u32 %v2183, 4294901760
        %2460 = vmatpush1.msra.mxu0 %v2459
        %2461 = vmatprep.subr.mxu0 0.0
        %2462 = vmatpush2.msra.mxu0 0.0
        %2463 = vmatprep.subr.mxu0 0.0
        %2464 = vmatpush2.msra.mxu0 0.0
        %2465 = vmatprep.subr.mxu0 0.0
        %2466 = vmatpush2.msra.mxu0 0.0
        %2467 = vmatprep.subr.mxu0 0.0
        %2468 = vmatpush2.msra.mxu0 0.0
        %2469 = vmatprep.subr.mxu0 0.0
        %2470 = vmatpush2.msra.mxu0 0.0
        %2471 = vmatprep.subr.mxu0 0.0
        %2472 = vmatpush2.msra.mxu0 0.0
        %2473 = vmatprep.subr.mxu0 0.0
        %2474 = vmatpush2.msra.mxu0 0.0
        %2475 = vmatprep.subr.mxu0 0.0
        %2476 = vmatpush2.msra.mxu0 0.0
        %2477 = vmatprep.subr.mxu0 0.0
        %2478 = vmatpush2.msra.mxu0 0.0
        %2479 = vmatprep.subr.mxu0 0.0
        %2480 = vmatpush2.msra.mxu0 0.0
        %2481 = vmatprep.subr.mxu0 0.0
        %2482 = vmatpush2.msra.mxu0 0.0
        %2483 = vmatprep.subr.mxu0 0.0
        %2484 = vmatpush2.msra.mxu0 0.0
        %2485 = vmatprep.subr.mxu0 0.0
        %2486 = vmatpush2.msra.mxu0 0.0
        %2487 = vmatprep.subr.mxu0 0.0
        %2488 = vmatpush2.msra.mxu0 0.0
        %2489 = vmatprep.subr.mxu0 0.0
        %2490 = vmatpush2.msra.mxu0 0.0
        %2491 = vmatprep.subr.mxu0 0.0
        %2492 = vmatpush2.msra.mxu0 0.0
        %2493 = vmatprep.mubr.f32.mxu0 0.0
        %v2494 = vand.u32 %v2188, 4294901760
        %v2495 = vsub.f32 %v2188, %v2494
        %v2496 = vand.u32 %v2495, 4294901760
        %2497 = vmatmul.mubr.f32.gmra.mxu0 %v2496
        %v2498 = vpop.f32.mrf.mxu0
        %v2499 = vadd.f32 %v2423, %v2498
        %v2500 = vpop.f32.mrf.mxu0
        %v2501 = vadd.f32 %v2425, %v2500
        %2502 = vdwg.mxu0
        %2503 = vmatprep.subr.mxu0 0.0
        %2504 = vmatpush1.msra.mxu0 0.0
        %2505 = vmatprep.subr.mxu0 0.0
        %2506 = vmatpush1.msra.mxu0 0.0
        %2507 = vmatprep.subr.mxu0 0.0
        %2508 = vmatpush1.msra.mxu0 0.0
        %2509 = vmatprep.subr.mxu0 0.0
        %2510 = vmatpush1.msra.mxu0 0.0
        %2511 = vmatprep.subr.mxu0 0.0
        %2512 = vmatpush1.msra.mxu0 0.0
        %2513 = vmatprep.subr.mxu0 0.0
        %2514 = vmatpush1.msra.mxu0 0.0
        %2515 = vmatprep.subr.mxu0 0.0
        %2516 = vmatpush1.msra.mxu0 0.0
        %2517 = vmatprep.subr.mxu0 0.0
        %2518 = vmatpush1.msra.mxu0 0.0
        %2519 = vmatprep.subr.mxu0 0.0
        %2520 = vmatpush1.msra.mxu0 0.0
        %2521 = vmatprep.subr.mxu0 0.0
        %2522 = vmatpush1.msra.mxu0 0.0
        %2523 = vmatprep.subr.mxu0 0.0
        %2524 = vmatpush1.msra.mxu0 0.0
        %2525 = vmatprep.subr.mxu0 0.0
        %2526 = vmatpush1.msra.mxu0 0.0
        %2527 = vmatprep.subr.mxu0 0.0
        %2528 = vmatpush1.msra.mxu0 0.0
        %2529 = vmatprep.subr.mxu0 0.0
        %2530 = vmatpush1.msra.mxu0 0.0
        %2531 = vmatprep.subr.mxu0 0.0
        %2532 = vmatpush1.msra.mxu0 0.0
        %v2533 = vand.u32 %v2184, 4294901760
        %v2534 = vsub.f32 %v2184, %v2533
        %v2535 = vand.u32 %v2534, 4294901760
        %2536 = vmatprep.subr.mxu0 %v2535
        %v2537 = vand.u32 %v2183, 4294901760
        %v2538 = vsub.f32 %v2183, %v2537
        %v2539 = vand.u32 %v2538, 4294901760
        %2540 = vmatpush1.msra.mxu0 %v2539
        %2541 = vmatprep.subr.mxu0 0.0
        %2542 = vmatpush2.msra.mxu0 0.0
        %2543 = vmatprep.subr.mxu0 0.0
        %2544 = vmatpush2.msra.mxu0 0.0
        %2545 = vmatprep.subr.mxu0 0.0
        %2546 = vmatpush2.msra.mxu0 0.0
        %2547 = vmatprep.subr.mxu0 0.0
        %2548 = vmatpush2.msra.mxu0 0.0
        %2549 = vmatprep.subr.mxu0 0.0
        %2550 = vmatpush2.msra.mxu0 0.0
        %2551 = vmatprep.subr.mxu0 0.0
        %2552 = vmatpush2.msra.mxu0 0.0
        %2553 = vmatprep.subr.mxu0 0.0
        %2554 = vmatpush2.msra.mxu0 0.0
        %2555 = vmatprep.subr.mxu0 0.0
        %2556 = vmatpush2.msra.mxu0 0.0
        %2557 = vmatprep.subr.mxu0 0.0
        %2558 = vmatpush2.msra.mxu0 0.0
        %2559 = vmatprep.subr.mxu0 0.0
        %2560 = vmatpush2.msra.mxu0 0.0
        %2561 = vmatprep.subr.mxu0 0.0
        %2562 = vmatpush2.msra.mxu0 0.0
        %2563 = vmatprep.subr.mxu0 0.0
        %2564 = vmatpush2.msra.mxu0 0.0
        %2565 = vmatprep.subr.mxu0 0.0
        %2566 = vmatpush2.msra.mxu0 0.0
        %2567 = vmatprep.subr.mxu0 0.0
        %2568 = vmatpush2.msra.mxu0 0.0
        %2569 = vmatprep.subr.mxu0 0.0
        %2570 = vmatpush2.msra.mxu0 0.0
        %2571 = vmatprep.subr.mxu0 0.0
        %2572 = vmatpush2.msra.mxu0 0.0
        %2573 = vmatprep.mubr.f32.mxu0 0.0
        %v2574 = vand.u32 %v2188, 4294901760
        %2575 = vmatmul.mubr.f32.gmra.mxu0 %v2574
        %v2576 = vpop.f32.mrf.mxu0
        %v2577 = vadd.f32 %v2499, %v2576
        %v2578 = vpop.f32.mrf.mxu0
        %v2579 = vadd.f32 %v2501, %v2578
        %2580 = vdwg.mxu0
        %2581 = vmatprep.subr.mxu0 0.0
        %2582 = vmatpush1.msra.mxu0 0.0
        %2583 = vmatprep.subr.mxu0 0.0
        %2584 = vmatpush1.msra.mxu0 0.0
        %2585 = vmatprep.subr.mxu0 0.0
        %2586 = vmatpush1.msra.mxu0 0.0
        %2587 = vmatprep.subr.mxu0 0.0
        %2588 = vmatpush1.msra.mxu0 0.0
        %2589 = vmatprep.subr.mxu0 0.0
        %2590 = vmatpush1.msra.mxu0 0.0
        %2591 = vmatprep.subr.mxu0 0.0
        %2592 = vmatpush1.msra.mxu0 0.0
        %2593 = vmatprep.subr.mxu0 0.0
        %2594 = vmatpush1.msra.mxu0 0.0
        %2595 = vmatprep.subr.mxu0 0.0
        %2596 = vmatpush1.msra.mxu0 0.0
        %2597 = vmatprep.subr.mxu0 0.0
        %2598 = vmatpush1.msra.mxu0 0.0
        %2599 = vmatprep.subr.mxu0 0.0
        %2600 = vmatpush1.msra.mxu0 0.0
        %2601 = vmatprep.subr.mxu0 0.0
        %2602 = vmatpush1.msra.mxu0 0.0
        %2603 = vmatprep.subr.mxu0 0.0
        %2604 = vmatpush1.msra.mxu0 0.0
        %2605 = vmatprep.subr.mxu0 0.0
        %2606 = vmatpush1.msra.mxu0 0.0
        %2607 = vmatprep.subr.mxu0 0.0
        %2608 = vmatpush1.msra.mxu0 0.0
        %2609 = vmatprep.subr.mxu0 0.0
        %2610 = vmatpush1.msra.mxu0 0.0
        %v2611 = vand.u32 %v2184, 4294901760
        %2612 = vmatprep.subr.mxu0 %v2611
        %v2613 = vand.u32 %v2183, 4294901760
        %2614 = vmatpush1.msra.mxu0 %v2613
        %2615 = vmatprep.subr.mxu0 0.0
        %2616 = vmatpush2.msra.mxu0 0.0
        %2617 = vmatprep.subr.mxu0 0.0
        %2618 = vmatpush2.msra.mxu0 0.0
        %2619 = vmatprep.subr.mxu0 0.0
        %2620 = vmatpush2.msra.mxu0 0.0
        %2621 = vmatprep.subr.mxu0 0.0
        %2622 = vmatpush2.msra.mxu0 0.0
        %2623 = vmatprep.subr.mxu0 0.0
        %2624 = vmatpush2.msra.mxu0 0.0
        %2625 = vmatprep.subr.mxu0 0.0
        %2626 = vmatpush2.msra.mxu0 0.0
        %2627 = vmatprep.subr.mxu0 0.0
        %2628 = vmatpush2.msra.mxu0 0.0
        %2629 = vmatprep.subr.mxu0 0.0
        %2630 = vmatpush2.msra.mxu0 0.0
        %2631 = vmatprep.subr.mxu0 0.0
        %2632 = vmatpush2.msra.mxu0 0.0
        %2633 = vmatprep.subr.mxu0 0.0
        %2634 = vmatpush2.msra.mxu0 0.0
        %2635 = vmatprep.subr.mxu0 0.0
        %2636 = vmatpush2.msra.mxu0 0.0
        %2637 = vmatprep.subr.mxu0 0.0
        %2638 = vmatpush2.msra.mxu0 0.0
        %2639 = vmatprep.subr.mxu0 0.0
        %2640 = vmatpush2.msra.mxu0 0.0
        %2641 = vmatprep.subr.mxu0 0.0
        %2642 = vmatpush2.msra.mxu0 0.0
        %2643 = vmatprep.subr.mxu0 0.0
        %2644 = vmatpush2.msra.mxu0 0.0
        %2645 = vmatprep.subr.mxu0 0.0
        %2646 = vmatpush2.msra.mxu0 0.0
        %2647 = vmatprep.mubr.f32.mxu0 0.0
        %v2648 = vand.u32 %v2188, 4294901760
        %2649 = vmatmul.mubr.f32.gmra.mxu0 %v2648
        %v2650 = vpop.f32.mrf.mxu0
        %v2651 = vadd.f32 %v2577, %v2650
        %v2652 = vpop.f32.mrf.mxu0
        %v2653 = vadd.f32 %v2579, %v2652
        %2654 = vdwg.mxu0
        %v2655 = vadd.f32 %v2172, %v2651
        %v2656 = vadd.f32 %v2173, %v2653
        %2657 = vrot.lane.b32.xlu0 %v733, 96
        %v2658 = vpop.permute.xlu0 %2657
        %2659 = vrot.lane.b32.xlu0 %v734, 96
        %v2660 = vpop.permute.xlu0 %2659
        %vm2661 = vcmp.lt.s32.totalorder %v736, 96
        %v2662 = vsel %vm2661, %v2658, %v2660
        %v2663 = vsel %vm2661, %v2660, %v2658
        %vm2664 = vcmp.lt.s32.totalorder %v738, 224
        %vm2665 = vcmp.lt.s32.totalorder %v739, 224
        %v2666 = vsel %vm2664, %v2662, 0.0
        %v2667 = vsel %vm2665, %v2663, 0.0
        %s2668 = scalar_lea.vmem %s3, 16
        %v2669 = vld [vmem:[%s2668] sm:$0xf]
        %v2671 = vsel %vm765, %v2669, 0
        %2673 = vmatprep.subr.mxu0 0.0
        %2674 = vmatpush1.msra.mxu0 0.0
        %2675 = vmatprep.subr.mxu0 0.0
        %2676 = vmatpush1.msra.mxu0 0.0
        %2677 = vmatprep.subr.mxu0 0.0
        %2678 = vmatpush1.msra.mxu0 0.0
        %2679 = vmatprep.subr.mxu0 0.0
        %2680 = vmatpush1.msra.mxu0 0.0
        %2681 = vmatprep.subr.mxu0 0.0
        %2682 = vmatpush1.msra.mxu0 0.0
        %2683 = vmatprep.subr.mxu0 0.0
        %2684 = vmatpush1.msra.mxu0 0.0
        %2685 = vmatprep.subr.mxu0 0.0
        %2686 = vmatpush1.msra.mxu0 0.0
        %2687 = vmatprep.subr.mxu0 0.0
        %2688 = vmatpush1.msra.mxu0 0.0
        %2689 = vmatprep.subr.mxu0 0.0
        %2690 = vmatpush1.msra.mxu0 0.0
        %2691 = vmatprep.subr.mxu0 0.0
        %2692 = vmatpush1.msra.mxu0 0.0
        %2693 = vmatprep.subr.mxu0 0.0
        %2694 = vmatpush1.msra.mxu0 0.0
        %2695 = vmatprep.subr.mxu0 0.0
        %2696 = vmatpush1.msra.mxu0 0.0
        %2697 = vmatprep.subr.mxu0 0.0
        %2698 = vmatpush1.msra.mxu0 0.0
        %2699 = vmatprep.subr.mxu0 0.0
        %2700 = vmatpush1.msra.mxu0 0.0
        %2701 = vmatprep.subr.mxu0 0.0
        %2702 = vmatpush1.msra.mxu0 0.0
        %v2703 = vand.u32 %v2667, 4294901760
        %2704 = vmatprep.subr.mxu0 %v2703
        %v2705 = vand.u32 %v2666, 4294901760
        %2706 = vmatpush1.msra.mxu0 %v2705
        %2707 = vmatprep.subr.mxu0 0.0
        %2708 = vmatpush2.msra.mxu0 0.0
        %2709 = vmatprep.subr.mxu0 0.0
        %2710 = vmatpush2.msra.mxu0 0.0
        %2711 = vmatprep.subr.mxu0 0.0
        %2712 = vmatpush2.msra.mxu0 0.0
        %2713 = vmatprep.subr.mxu0 0.0
        %2714 = vmatpush2.msra.mxu0 0.0
        %2715 = vmatprep.subr.mxu0 0.0
        %2716 = vmatpush2.msra.mxu0 0.0
        %2717 = vmatprep.subr.mxu0 0.0
        %2718 = vmatpush2.msra.mxu0 0.0
        %2719 = vmatprep.subr.mxu0 0.0
        %2720 = vmatpush2.msra.mxu0 0.0
        %2721 = vmatprep.subr.mxu0 0.0
        %2722 = vmatpush2.msra.mxu0 0.0
        %2723 = vmatprep.subr.mxu0 0.0
        %2724 = vmatpush2.msra.mxu0 0.0
        %2725 = vmatprep.subr.mxu0 0.0
        %2726 = vmatpush2.msra.mxu0 0.0
        %2727 = vmatprep.subr.mxu0 0.0
        %2728 = vmatpush2.msra.mxu0 0.0
        %2729 = vmatprep.subr.mxu0 0.0
        %2730 = vmatpush2.msra.mxu0 0.0
        %2731 = vmatprep.subr.mxu0 0.0
        %2732 = vmatpush2.msra.mxu0 0.0
        %2733 = vmatprep.subr.mxu0 0.0
        %2734 = vmatpush2.msra.mxu0 0.0
        %2735 = vmatprep.subr.mxu0 0.0
        %2736 = vmatpush2.msra.mxu0 0.0
        %2737 = vmatprep.subr.mxu0 0.0
        %2738 = vmatpush2.msra.mxu0 0.0
        %2739 = vmatprep.mubr.f32.mxu0 0.0
        %v2740 = vand.u32 %v2671, 4294901760
        %v2741 = vsub.f32 %v2671, %v2740
        %v2742 = vand.u32 %v2741, 4294901760
        %v2743 = vsub.f32 %v2741, %v2742
        %v2744 = vand.u32 %v2743, 4294901760
        %2745 = vmatmul.mubr.f32.gmra.mxu0 %v2744
        %v2746 = vpop.f32.mrf.mxu0
        %v2747 = vadd.f32 0.0, %v2746
        %v2748 = vpop.f32.mrf.mxu0
        %v2749 = vadd.f32 0.0, %v2748
        %2750 = vdwg.mxu0
        %2751 = vmatprep.subr.mxu0 0.0
        %2752 = vmatpush1.msra.mxu0 0.0
        %2753 = vmatprep.subr.mxu0 0.0
        %2754 = vmatpush1.msra.mxu0 0.0
        %2755 = vmatprep.subr.mxu0 0.0
        %2756 = vmatpush1.msra.mxu0 0.0
        %2757 = vmatprep.subr.mxu0 0.0
        %2758 = vmatpush1.msra.mxu0 0.0
        %2759 = vmatprep.subr.mxu0 0.0
        %2760 = vmatpush1.msra.mxu0 0.0
        %2761 = vmatprep.subr.mxu0 0.0
        %2762 = vmatpush1.msra.mxu0 0.0
        %2763 = vmatprep.subr.mxu0 0.0
        %2764 = vmatpush1.msra.mxu0 0.0
        %2765 = vmatprep.subr.mxu0 0.0
        %2766 = vmatpush1.msra.mxu0 0.0
        %2767 = vmatprep.subr.mxu0 0.0
        %2768 = vmatpush1.msra.mxu0 0.0
        %2769 = vmatprep.subr.mxu0 0.0
        %2770 = vmatpush1.msra.mxu0 0.0
        %2771 = vmatprep.subr.mxu0 0.0
        %2772 = vmatpush1.msra.mxu0 0.0
        %2773 = vmatprep.subr.mxu0 0.0
        %2774 = vmatpush1.msra.mxu0 0.0
        %2775 = vmatprep.subr.mxu0 0.0
        %2776 = vmatpush1.msra.mxu0 0.0
        %2777 = vmatprep.subr.mxu0 0.0
        %2778 = vmatpush1.msra.mxu0 0.0
        %2779 = vmatprep.subr.mxu0 0.0
        %2780 = vmatpush1.msra.mxu0 0.0
        %v2781 = vand.u32 %v2667, 4294901760
        %v2782 = vsub.f32 %v2667, %v2781
        %v2783 = vand.u32 %v2782, 4294901760
        %v2784 = vsub.f32 %v2782, %v2783
        %v2785 = vand.u32 %v2784, 4294901760
        %2786 = vmatprep.subr.mxu0 %v2785
        %v2787 = vand.u32 %v2666, 4294901760
        %v2788 = vsub.f32 %v2666, %v2787
        %v2789 = vand.u32 %v2788, 4294901760
        %v2790 = vsub.f32 %v2788, %v2789
        %v2791 = vand.u32 %v2790, 4294901760
        %2792 = vmatpush1.msra.mxu0 %v2791
        %2793 = vmatprep.subr.mxu0 0.0
        %2794 = vmatpush2.msra.mxu0 0.0
        %2795 = vmatprep.subr.mxu0 0.0
        %2796 = vmatpush2.msra.mxu0 0.0
        %2797 = vmatprep.subr.mxu0 0.0
        %2798 = vmatpush2.msra.mxu0 0.0
        %2799 = vmatprep.subr.mxu0 0.0
        %2800 = vmatpush2.msra.mxu0 0.0
        %2801 = vmatprep.subr.mxu0 0.0
        %2802 = vmatpush2.msra.mxu0 0.0
        %2803 = vmatprep.subr.mxu0 0.0
        %2804 = vmatpush2.msra.mxu0 0.0
        %2805 = vmatprep.subr.mxu0 0.0
        %2806 = vmatpush2.msra.mxu0 0.0
        %2807 = vmatprep.subr.mxu0 0.0
        %2808 = vmatpush2.msra.mxu0 0.0
        %2809 = vmatprep.subr.mxu0 0.0
        %2810 = vmatpush2.msra.mxu0 0.0
        %2811 = vmatprep.subr.mxu0 0.0
        %2812 = vmatpush2.msra.mxu0 0.0
        %2813 = vmatprep.subr.mxu0 0.0
        %2814 = vmatpush2.msra.mxu0 0.0
        %2815 = vmatprep.subr.mxu0 0.0
        %2816 = vmatpush2.msra.mxu0 0.0
        %2817 = vmatprep.subr.mxu0 0.0
        %2818 = vmatpush2.msra.mxu0 0.0
        %2819 = vmatprep.subr.mxu0 0.0
        %2820 = vmatpush2.msra.mxu0 0.0
        %2821 = vmatprep.subr.mxu0 0.0
        %2822 = vmatpush2.msra.mxu0 0.0
        %2823 = vmatprep.subr.mxu0 0.0
        %2824 = vmatpush2.msra.mxu0 0.0
        %2825 = vmatprep.mubr.f32.mxu0 0.0
        %v2826 = vand.u32 %v2671, 4294901760
        %2827 = vmatmul.mubr.f32.gmra.mxu0 %v2826
        %v2828 = vpop.f32.mrf.mxu0
        %v2829 = vadd.f32 %v2747, %v2828
        %v2830 = vpop.f32.mrf.mxu0
        %v2831 = vadd.f32 %v2749, %v2830
        %2832 = vdwg.mxu0
        %2833 = vmatprep.subr.mxu0 0.0
        %2834 = vmatpush1.msra.mxu0 0.0
        %2835 = vmatprep.subr.mxu0 0.0
        %2836 = vmatpush1.msra.mxu0 0.0
        %2837 = vmatprep.subr.mxu0 0.0
        %2838 = vmatpush1.msra.mxu0 0.0
        %2839 = vmatprep.subr.mxu0 0.0
        %2840 = vmatpush1.msra.mxu0 0.0
        %2841 = vmatprep.subr.mxu0 0.0
        %2842 = vmatpush1.msra.mxu0 0.0
        %2843 = vmatprep.subr.mxu0 0.0
        %2844 = vmatpush1.msra.mxu0 0.0
        %2845 = vmatprep.subr.mxu0 0.0
        %2846 = vmatpush1.msra.mxu0 0.0
        %2847 = vmatprep.subr.mxu0 0.0
        %2848 = vmatpush1.msra.mxu0 0.0
        %2849 = vmatprep.subr.mxu0 0.0
        %2850 = vmatpush1.msra.mxu0 0.0
        %2851 = vmatprep.subr.mxu0 0.0
        %2852 = vmatpush1.msra.mxu0 0.0
        %2853 = vmatprep.subr.mxu0 0.0
        %2854 = vmatpush1.msra.mxu0 0.0
        %2855 = vmatprep.subr.mxu0 0.0
        %2856 = vmatpush1.msra.mxu0 0.0
        %2857 = vmatprep.subr.mxu0 0.0
        %2858 = vmatpush1.msra.mxu0 0.0
        %2859 = vmatprep.subr.mxu0 0.0
        %2860 = vmatpush1.msra.mxu0 0.0
        %2861 = vmatprep.subr.mxu0 0.0
        %2862 = vmatpush1.msra.mxu0 0.0
        %v2863 = vand.u32 %v2667, 4294901760
        %v2864 = vsub.f32 %v2667, %v2863
        %2865 = vmatprep.subr.mxu0 %v2864
        %v2866 = vand.u32 %v2666, 4294901760
        %v2867 = vsub.f32 %v2666, %v2866
        %2868 = vmatpush1.msra.mxu0 %v2867
        %2869 = vmatprep.subr.mxu0 0.0
        %2870 = vmatpush2.msra.mxu0 0.0
        %2871 = vmatprep.subr.mxu0 0.0
        %2872 = vmatpush2.msra.mxu0 0.0
        %2873 = vmatprep.subr.mxu0 0.0
        %2874 = vmatpush2.msra.mxu0 0.0
        %2875 = vmatprep.subr.mxu0 0.0
        %2876 = vmatpush2.msra.mxu0 0.0
        %2877 = vmatprep.subr.mxu0 0.0
        %2878 = vmatpush2.msra.mxu0 0.0
        %2879 = vmatprep.subr.mxu0 0.0
        %2880 = vmatpush2.msra.mxu0 0.0
        %2881 = vmatprep.subr.mxu0 0.0
        %2882 = vmatpush2.msra.mxu0 0.0
        %2883 = vmatprep.subr.mxu0 0.0
        %2884 = vmatpush2.msra.mxu0 0.0
        %2885 = vmatprep.subr.mxu0 0.0
        %2886 = vmatpush2.msra.mxu0 0.0
        %2887 = vmatprep.subr.mxu0 0.0
        %2888 = vmatpush2.msra.mxu0 0.0
        %2889 = vmatprep.subr.mxu0 0.0
        %2890 = vmatpush2.msra.mxu0 0.0
        %2891 = vmatprep.subr.mxu0 0.0
        %2892 = vmatpush2.msra.mxu0 0.0
        %2893 = vmatprep.subr.mxu0 0.0
        %2894 = vmatpush2.msra.mxu0 0.0
        %2895 = vmatprep.subr.mxu0 0.0
        %2896 = vmatpush2.msra.mxu0 0.0
        %2897 = vmatprep.subr.mxu0 0.0
        %2898 = vmatpush2.msra.mxu0 0.0
        %2899 = vmatprep.subr.mxu0 0.0
        %2900 = vmatpush2.msra.mxu0 0.0
        %2901 = vmatprep.mubr.f32.mxu0 0.0
        %v2902 = vand.u32 %v2671, 4294901760
        %v2903 = vsub.f32 %v2671, %v2902
        %2904 = vmatmul.mubr.f32.gmra.mxu0 %v2903
        %v2905 = vpop.f32.mrf.mxu0
        %v2906 = vadd.f32 %v2829, %v2905
        %v2907 = vpop.f32.mrf.mxu0
        %v2908 = vadd.f32 %v2831, %v2907
        %2909 = vdwg.mxu0
        %2910 = vmatprep.subr.mxu0 0.0
        %2911 = vmatpush1.msra.mxu0 0.0
        %2912 = vmatprep.subr.mxu0 0.0
        %2913 = vmatpush1.msra.mxu0 0.0
        %2914 = vmatprep.subr.mxu0 0.0
        %2915 = vmatpush1.msra.mxu0 0.0
        %2916 = vmatprep.subr.mxu0 0.0
        %2917 = vmatpush1.msra.mxu0 0.0
        %2918 = vmatprep.subr.mxu0 0.0
        %2919 = vmatpush1.msra.mxu0 0.0
        %2920 = vmatprep.subr.mxu0 0.0
        %2921 = vmatpush1.msra.mxu0 0.0
        %2922 = vmatprep.subr.mxu0 0.0
        %2923 = vmatpush1.msra.mxu0 0.0
        %2924 = vmatprep.subr.mxu0 0.0
        %2925 = vmatpush1.msra.mxu0 0.0
        %2926 = vmatprep.subr.mxu0 0.0
        %2927 = vmatpush1.msra.mxu0 0.0
        %2928 = vmatprep.subr.mxu0 0.0
        %2929 = vmatpush1.msra.mxu0 0.0
        %2930 = vmatprep.subr.mxu0 0.0
        %2931 = vmatpush1.msra.mxu0 0.0
        %2932 = vmatprep.subr.mxu0 0.0
        %2933 = vmatpush1.msra.mxu0 0.0
        %2934 = vmatprep.subr.mxu0 0.0
        %2935 = vmatpush1.msra.mxu0 0.0
        %2936 = vmatprep.subr.mxu0 0.0
        %2937 = vmatpush1.msra.mxu0 0.0
        %2938 = vmatprep.subr.mxu0 0.0
        %2939 = vmatpush1.msra.mxu0 0.0
        %v2940 = vand.u32 %v2667, 4294901760
        %2941 = vmatprep.subr.mxu0 %v2940
        %v2942 = vand.u32 %v2666, 4294901760
        %2943 = vmatpush1.msra.mxu0 %v2942
        %2944 = vmatprep.subr.mxu0 0.0
        %2945 = vmatpush2.msra.mxu0 0.0
        %2946 = vmatprep.subr.mxu0 0.0
        %2947 = vmatpush2.msra.mxu0 0.0
        %2948 = vmatprep.subr.mxu0 0.0
        %2949 = vmatpush2.msra.mxu0 0.0
        %2950 = vmatprep.subr.mxu0 0.0
        %2951 = vmatpush2.msra.mxu0 0.0
        %2952 = vmatprep.subr.mxu0 0.0
        %2953 = vmatpush2.msra.mxu0 0.0
        %2954 = vmatprep.subr.mxu0 0.0
        %2955 = vmatpush2.msra.mxu0 0.0
        %2956 = vmatprep.subr.mxu0 0.0
        %2957 = vmatpush2.msra.mxu0 0.0
        %2958 = vmatprep.subr.mxu0 0.0
        %2959 = vmatpush2.msra.mxu0 0.0
        %2960 = vmatprep.subr.mxu0 0.0
        %2961 = vmatpush2.msra.mxu0 0.0
        %2962 = vmatprep.subr.mxu0 0.0
        %2963 = vmatpush2.msra.mxu0 0.0
        %2964 = vmatprep.subr.mxu0 0.0
        %2965 = vmatpush2.msra.mxu0 0.0
        %2966 = vmatprep.subr.mxu0 0.0
        %2967 = vmatpush2.msra.mxu0 0.0
        %2968 = vmatprep.subr.mxu0 0.0
        %2969 = vmatpush2.msra.mxu0 0.0
        %2970 = vmatprep.subr.mxu0 0.0
        %2971 = vmatpush2.msra.mxu0 0.0
        %2972 = vmatprep.subr.mxu0 0.0
        %2973 = vmatpush2.msra.mxu0 0.0
        %2974 = vmatprep.subr.mxu0 0.0
        %2975 = vmatpush2.msra.mxu0 0.0
        %2976 = vmatprep.mubr.f32.mxu0 0.0
        %v2977 = vand.u32 %v2671, 4294901760
        %v2978 = vsub.f32 %v2671, %v2977
        %v2979 = vand.u32 %v2978, 4294901760
        %2980 = vmatmul.mubr.f32.gmra.mxu0 %v2979
        %v2981 = vpop.f32.mrf.mxu0
        %v2982 = vadd.f32 %v2906, %v2981
        %v2983 = vpop.f32.mrf.mxu0
        %v2984 = vadd.f32 %v2908, %v2983
        %2985 = vdwg.mxu0
        %2986 = vmatprep.subr.mxu0 0.0
        %2987 = vmatpush1.msra.mxu0 0.0
        %2988 = vmatprep.subr.mxu0 0.0
        %2989 = vmatpush1.msra.mxu0 0.0
        %2990 = vmatprep.subr.mxu0 0.0
        %2991 = vmatpush1.msra.mxu0 0.0
        %2992 = vmatprep.subr.mxu0 0.0
        %2993 = vmatpush1.msra.mxu0 0.0
        %2994 = vmatprep.subr.mxu0 0.0
        %2995 = vmatpush1.msra.mxu0 0.0
        %2996 = vmatprep.subr.mxu0 0.0
        %2997 = vmatpush1.msra.mxu0 0.0
        %2998 = vmatprep.subr.mxu0 0.0
        %2999 = vmatpush1.msra.mxu0 0.0
        %3000 = vmatprep.subr.mxu0 0.0
        %3001 = vmatpush1.msra.mxu0 0.0
        %3002 = vmatprep.subr.mxu0 0.0
        %3003 = vmatpush1.msra.mxu0 0.0
        %3004 = vmatprep.subr.mxu0 0.0
        %3005 = vmatpush1.msra.mxu0 0.0
        %3006 = vmatprep.subr.mxu0 0.0
        %3007 = vmatpush1.msra.mxu0 0.0
        %3008 = vmatprep.subr.mxu0 0.0
        %3009 = vmatpush1.msra.mxu0 0.0
        %3010 = vmatprep.subr.mxu0 0.0
        %3011 = vmatpush1.msra.mxu0 0.0
        %3012 = vmatprep.subr.mxu0 0.0
        %3013 = vmatpush1.msra.mxu0 0.0
        %3014 = vmatprep.subr.mxu0 0.0
        %3015 = vmatpush1.msra.mxu0 0.0
        %v3016 = vand.u32 %v2667, 4294901760
        %v3017 = vsub.f32 %v2667, %v3016
        %v3018 = vand.u32 %v3017, 4294901760
        %3019 = vmatprep.subr.mxu0 %v3018
        %v3020 = vand.u32 %v2666, 4294901760
        %v3021 = vsub.f32 %v2666, %v3020
        %v3022 = vand.u32 %v3021, 4294901760
        %3023 = vmatpush1.msra.mxu0 %v3022
        %3024 = vmatprep.subr.mxu0 0.0
        %3025 = vmatpush2.msra.mxu0 0.0
        %3026 = vmatprep.subr.mxu0 0.0
        %3027 = vmatpush2.msra.mxu0 0.0
        %3028 = vmatprep.subr.mxu0 0.0
        %3029 = vmatpush2.msra.mxu0 0.0
        %3030 = vmatprep.subr.mxu0 0.0
        %3031 = vmatpush2.msra.mxu0 0.0
        %3032 = vmatprep.subr.mxu0 0.0
        %3033 = vmatpush2.msra.mxu0 0.0
        %3034 = vmatprep.subr.mxu0 0.0
        %3035 = vmatpush2.msra.mxu0 0.0
        %3036 = vmatprep.subr.mxu0 0.0
        %3037 = vmatpush2.msra.mxu0 0.0
        %3038 = vmatprep.subr.mxu0 0.0
        %3039 = vmatpush2.msra.mxu0 0.0
        %3040 = vmatprep.subr.mxu0 0.0
        %3041 = vmatpush2.msra.mxu0 0.0
        %3042 = vmatprep.subr.mxu0 0.0
        %3043 = vmatpush2.msra.mxu0 0.0
        %3044 = vmatprep.subr.mxu0 0.0
        %3045 = vmatpush2.msra.mxu0 0.0
        %3046 = vmatprep.subr.mxu0 0.0
        %3047 = vmatpush2.msra.mxu0 0.0
        %3048 = vmatprep.subr.mxu0 0.0
        %3049 = vmatpush2.msra.mxu0 0.0
        %3050 = vmatprep.subr.mxu0 0.0
        %3051 = vmatpush2.msra.mxu0 0.0
        %3052 = vmatprep.subr.mxu0 0.0
        %3053 = vmatpush2.msra.mxu0 0.0
        %3054 = vmatprep.subr.mxu0 0.0
        %3055 = vmatpush2.msra.mxu0 0.0
        %3056 = vmatprep.mubr.f32.mxu0 0.0
        %v3057 = vand.u32 %v2671, 4294901760
        %3058 = vmatmul.mubr.f32.gmra.mxu0 %v3057
        %v3059 = vpop.f32.mrf.mxu0
        %v3060 = vadd.f32 %v2982, %v3059
        %v3061 = vpop.f32.mrf.mxu0
        %v3062 = vadd.f32 %v2984, %v3061
        %3063 = vdwg.mxu0
        %3064 = vmatprep.subr.mxu0 0.0
        %3065 = vmatpush1.msra.mxu0 0.0
        %3066 = vmatprep.subr.mxu0 0.0
        %3067 = vmatpush1.msra.mxu0 0.0
        %3068 = vmatprep.subr.mxu0 0.0
        %3069 = vmatpush1.msra.mxu0 0.0
        %3070 = vmatprep.subr.mxu0 0.0
        %3071 = vmatpush1.msra.mxu0 0.0
        %3072 = vmatprep.subr.mxu0 0.0
        %3073 = vmatpush1.msra.mxu0 0.0
        %3074 = vmatprep.subr.mxu0 0.0
        %3075 = vmatpush1.msra.mxu0 0.0
        %3076 = vmatprep.subr.mxu0 0.0
        %3077 = vmatpush1.msra.mxu0 0.0
        %3078 = vmatprep.subr.mxu0 0.0
        %3079 = vmatpush1.msra.mxu0 0.0
        %3080 = vmatprep.subr.mxu0 0.0
        %3081 = vmatpush1.msra.mxu0 0.0
        %3082 = vmatprep.subr.mxu0 0.0
        %3083 = vmatpush1.msra.mxu0 0.0
        %3084 = vmatprep.subr.mxu0 0.0
        %3085 = vmatpush1.msra.mxu0 0.0
        %3086 = vmatprep.subr.mxu0 0.0
        %3087 = vmatpush1.msra.mxu0 0.0
        %3088 = vmatprep.subr.mxu0 0.0
        %3089 = vmatpush1.msra.mxu0 0.0
        %3090 = vmatprep.subr.mxu0 0.0
        %3091 = vmatpush1.msra.mxu0 0.0
        %3092 = vmatprep.subr.mxu0 0.0
        %3093 = vmatpush1.msra.mxu0 0.0
        %v3094 = vand.u32 %v2667, 4294901760
        %3095 = vmatprep.subr.mxu0 %v3094
        %v3096 = vand.u32 %v2666, 4294901760
        %3097 = vmatpush1.msra.mxu0 %v3096
        %3098 = vmatprep.subr.mxu0 0.0
        %3099 = vmatpush2.msra.mxu0 0.0
        %3100 = vmatprep.subr.mxu0 0.0
        %3101 = vmatpush2.msra.mxu0 0.0
        %3102 = vmatprep.subr.mxu0 0.0
        %3103 = vmatpush2.msra.mxu0 0.0
        %3104 = vmatprep.subr.mxu0 0.0
        %3105 = vmatpush2.msra.mxu0 0.0
        %3106 = vmatprep.subr.mxu0 0.0
        %3107 = vmatpush2.msra.mxu0 0.0
        %3108 = vmatprep.subr.mxu0 0.0
        %3109 = vmatpush2.msra.mxu0 0.0
        %3110 = vmatprep.subr.mxu0 0.0
        %3111 = vmatpush2.msra.mxu0 0.0
        %3112 = vmatprep.subr.mxu0 0.0
        %3113 = vmatpush2.msra.mxu0 0.0
        %3114 = vmatprep.subr.mxu0 0.0
        %3115 = vmatpush2.msra.mxu0 0.0
        %3116 = vmatprep.subr.mxu0 0.0
        %3117 = vmatpush2.msra.mxu0 0.0
        %3118 = vmatprep.subr.mxu0 0.0
        %3119 = vmatpush2.msra.mxu0 0.0
        %3120 = vmatprep.subr.mxu0 0.0
        %3121 = vmatpush2.msra.mxu0 0.0
        %3122 = vmatprep.subr.mxu0 0.0
        %3123 = vmatpush2.msra.mxu0 0.0
        %3124 = vmatprep.subr.mxu0 0.0
        %3125 = vmatpush2.msra.mxu0 0.0
        %3126 = vmatprep.subr.mxu0 0.0
        %3127 = vmatpush2.msra.mxu0 0.0
        %3128 = vmatprep.subr.mxu0 0.0
        %3129 = vmatpush2.msra.mxu0 0.0
        %3130 = vmatprep.mubr.f32.mxu0 0.0
        %v3131 = vand.u32 %v2671, 4294901760
        %3132 = vmatmul.mubr.f32.gmra.mxu0 %v3131
        %v3133 = vpop.f32.mrf.mxu0
        %v3134 = vadd.f32 %v3060, %v3133
        %v3135 = vpop.f32.mrf.mxu0
        %v3136 = vadd.f32 %v3062, %v3135
        %3137 = vdwg.mxu0
        %v3138 = vadd.f32 %v2655, %v3134
        %v3139 = vadd.f32 %v2656, %v3136
        %3140 = vset.pattern.permute.xlu0 3
        %3141 = vperm.xlu0 %3140, %v217
        %v3142 = vpop.permute.xlu0 %3141
        %v3144 = vadd.f32 %v3138, %v3142
        %v3145 = vadd.f32 %v3139, %v3142
        %v3147 = vcombine.high %v216, %v216
        %3149 = vst [vmem:[%s213] sm:$0xf] %v216
        %3150 = vst [vmem:[%s213 + $0x8] sm:$0xf] %v3147
        %v3153 = vrot.slane %v3144, 4
        %v3154 = vrot.slane %v3145, 4
        %3157 = vst [vmem:[%s213] sm:$0xf0] %v3153
        %3158 = vst [vmem:[%s213 + $0x8] sm:$0xf0] %v3154
        %s3159 = sand.u32 %s118, 1
        %s3160 = scalar_lea.sflag [#allocation4], %s3159
        %s3161 = sand.u32 %s118, 1
        %s3162 = smul.addr %s3161, 16
        %s3163 = scalar_lea.vmem [#allocation5], %s3162
        // Predicated region
        $region41: #{tpu_custom_call.1} parent=35 // pred_check
          %p3164 = pneg %p128
        $region42: #{tpu_custom_call.1} parent=35 // pred_check_branch
          %3166 = sbr.rel (%p3164) target = $region44
        $region43: #{tpu_custom_call.1} parent=35 // pred_region
          %s3167 = smul.u32 2, %s21
          %s3169 = ssub.s32 256, 256
          %3170 = vsyncadd %s3160, %s3169
          %s3171 = smul.addr %s3167, 128
          %s3172 = scalar_lea.hbm %s4, %s3171
          %s3174 = sshll.u32 %s3163, 4
          %s3175 = int_to_ptr.vmem [resolvable:$true] %s3174
          %3177 = dma.vmem_to_hbm [thread:$0]  %s3175, 256, %s3172, %s3160
        $region44: #{tpu_custom_call.1} parent=35 // pred_fallthru
          _
      $region36: #{tpu_custom_call.1} parent=5 // pred_fallthru
        _
      %p3178 = scmp.le.s32.totalorder 2, %s16
      // Predicated region
      $region45: #{tpu_custom_call.1} parent=5 // pred_check
        %p3179 = pneg %p3178
      $region46: #{tpu_custom_call.1} parent=5 // pred_check_branch
        %3181 = sbr.rel (%p3179) target = $region48
      $region47: #{tpu_custom_call.1} parent=5 // pred_region
        %s3182 = ssub.s32 %s16, 2
        // Predicated region
        $region49: #{tpu_custom_call.1} parent=47 // pred_check
          %p3183 = pneg %p134
        $region50: #{tpu_custom_call.1} parent=47 // pred_check_branch
          %3185 = sbr.rel (%p3183) target = $region52
        $region51: #{tpu_custom_call.1} parent=47 // pred_region
          %s3186 = sand.u32 %s119, 1
          %s3187 = scalar_lea.sflag [#allocation4], %s3186
          %s3188 = sand.u32 %s119, 1
          %s3189 = smul.addr %s3188, 16
          %s3190 = scalar_lea.vmem [#allocation5], %s3189
          %3191 = dma.done %s3187, 256
        $region52: #{tpu_custom_call.1} parent=47 // pred_fallthru
          _
      $region48: #{tpu_custom_call.1} parent=5 // pred_fallthru
        _
    $region6: #{tpu_custom_call.1} parent=1 // loop_footer
      %s20 = sadd.s32 1, %s16
    $region7: #{tpu_custom_call.1} parent=1 // loop_footer_branch
      %15 = sbr.rel target = $region3
    $region8: #{tpu_custom_call.1} parent=1 // loop_exit
      _
    %3192 = vsyncpa [#allocation3], 1
    %s3193 = scalar_lea.sflag [#allocation3], 1
    %3194 = vsyncpa %s3193, 1
    %3195 = vsyncpa [#allocation4], 1
    %s3196 = scalar_lea.sflag [#allocation4], 1
    %3197 = vsyncpa %s3196, 1

</llo_original>
